<compile_context>
chip_gen: v6e
topology: v6e:2x2x1
jax: 0.10.0
libtpu: 0.0.40
codegen_flags: <defaults>
</compile_context>

<pallas_src>
import jax
import jax.numpy as jnp
from jax.experimental import pallas as pl
from jax.experimental.pallas import tpu as pltpu


# ----------------------------- Pallas kernel ------------------------------- #

def _st_fused_kernel(adj_s_ref, adj_tT_ref, x_ref,
                     sw1_ref, sb1_ref, sw2_ref, sb2_ref,
                     tw1_ref, tb1_ref, tw2_ref, tb2_ref, o_ref):
    """Whole batch, both stages fused, single invocation (no grid).

    x_ref     : (B, T, N, C)  f32, native time-major layout
    adj_s_ref : (B, N, N)     spatial adjacency (per batch)
    adj_tT_ref: (B, P, T)     temporal adjacency, pre-transposed
    s*/t*     : GLU weights (C, C) and biases (1, C)
    o_ref     : (B*P*N, C)    lane-dense output slab
    """
    B, T, N, C = x_ref.shape
    P = adj_tT_ref.shape[1]
    bf = jnp.bfloat16

    a_s = adj_s_ref[...].astype(bf)       # (B, N, N)
    a_tT = adj_tT_ref[...].astype(bf)     # (B, P, T)

    # ---- spatial contraction: y[b,m,t,c] = sum_n A_s[b,m,n] * x[b,t,n,c]
    # Per-batch static loop (B=2); the (T,N)->(N,T) relayout of x happens
    # in-kernel (XLU) instead of as a separate XLA copy kernel.
    xn_rows, y_rows = [], []
    for b in range(B):
        xn_b = jnp.swapaxes(x_ref[b], 0, 1)                     # (N, T, C) f32
        xn_rows.append(xn_b.reshape(N * T, C))
        y_b = jnp.einsum('mn,ntc->mtc', a_s[b], xn_b.astype(bf),
                         preferred_element_type=jnp.float32)    # (N, T, C) f32
        y_rows.append(y_b.reshape(N * T, C))
    x_res = jnp.concatenate(xn_rows, axis=0)                    # (B*N*T, C) f32
    y2 = jnp.concatenate(y_rows, axis=0)                        # (B*N*T, C) f32

    # ---- spatial GLU (batch folded into the row dim) + residual, f32 gating
    y2b = y2.astype(bf)
    h1 = jnp.dot(y2b, sw1_ref[...].astype(bf),
                 preferred_element_type=jnp.float32) + sb1_ref[...]
    h2 = jnp.dot(y2b, sw2_ref[...].astype(bf),
                 preferred_element_type=jnp.float32) + sb2_ref[...]
    x1 = h1 * jax.nn.sigmoid(h2) + x_res                        # (B*N*T, C) f32
    x1b = x1.astype(bf).reshape(B, N, T, C)

    # ---- temporal contraction: z[b,p,n,c] = sum_t A_t[b,t,p] * x1[b,n,t,c]
    z_rows = [jnp.einsum('pt,ntc->pnc', a_tT[b], x1b[b],
                         preferred_element_type=jnp.float32).reshape(P * N, C)
              for b in range(B)]
    z2 = jnp.concatenate(z_rows, axis=0).astype(bf)             # (B*P*N, C)

    # ---- temporal GLU (batch folded), no residual
    g1 = jnp.dot(z2, tw1_ref[...].astype(bf),
                 preferred_element_type=jnp.float32) + tb1_ref[...]
    g2 = jnp.dot(z2, tw2_ref[...].astype(bf),
                 preferred_element_type=jnp.float32) + tb2_ref[...]
    o_ref[...] = (g1 * jax.nn.sigmoid(g2)).astype(o_ref.dtype)


def _fused_call(adj_s, adj_tT, x, params, out_dtype):
    """adj_s: (B, N, N), adj_tT: (B, P, T), x: (B, T, N, C) native layout."""
    B, T, N, C = x.shape
    P = adj_tT.shape[1]

    flops = (2 * B * T * N * N * C          # spatial contraction
             + 4 * B * T * N * C * C        # spatial GLU (two dots)
             + 2 * B * P * T * N * C        # temporal contraction
             + 4 * B * P * N * C * C)       # temporal GLU (two dots)
    transcendentals = B * T * N * C + B * P * N * C             # sigmoids
    bytes_accessed = 4 * (x.size + adj_s.size + adj_tT.size
                          + 4 * C * C + 4 * C + B * P * N * C)

    vmem = pl.BlockSpec(memory_space=pltpu.MemorySpace.VMEM)    # whole array in VMEM
    out = pl.pallas_call(
        _st_fused_kernel,
        out_shape=jax.ShapeDtypeStruct((B * P * N, C), out_dtype),
        in_specs=[vmem] * 11,
        out_specs=vmem,
        cost_estimate=pl.CostEstimate(flops=flops,
                                      transcendentals=transcendentals,
                                      bytes_accessed=bytes_accessed),
    )(adj_s, adj_tT, x,
      params['s_w1'], params['s_b1'], params['s_w2'], params['s_b2'],
      params['t_w1'], params['t_b1'], params['t_w2'], params['t_b2'])
    return out.reshape(B, P, N, C)                              # free reshape


# ------------------------------ Parameters --------------------------------- #

def init_params(key, d_model, input_length, output_length, num_of_latent,
                num_of_times, num_of_days, num_of_nodes):
    S = num_of_times + num_of_days + 1
    ks = jax.random.split(key, 12)
    scale = 0.1
    lat_t = 8  # hardcoded in dynamic_temporal_graph_neural_network.__init__
    p = {
        # matrix_decomposition factors
        's_m1': scale * jax.random.normal(ks[0], (S, num_of_nodes, num_of_latent), jnp.float32),
        's_m2': scale * jax.random.normal(ks[1], (S, num_of_latent, num_of_nodes), jnp.float32),
        't_m1': scale * jax.random.normal(ks[2], (S, input_length, lat_t), jnp.float32),
        't_m2': scale * jax.random.normal(ks[3], (S, lat_t, output_length), jnp.float32),
        # GLU (spatial)
        's_w1': scale * jax.random.normal(ks[4], (d_model, d_model), jnp.float32),
        's_b1': scale * jax.random.normal(ks[5], (1, d_model), jnp.float32),
        's_w2': scale * jax.random.normal(ks[6], (d_model, d_model), jnp.float32),
        's_b2': scale * jax.random.normal(ks[7], (1, d_model), jnp.float32),
        # GLU (temporal)
        't_w1': scale * jax.random.normal(ks[8], (d_model, d_model), jnp.float32),
        't_b1': scale * jax.random.normal(ks[9], (1, d_model), jnp.float32),
        't_w2': scale * jax.random.normal(ks[10], (d_model, d_model), jnp.float32),
        't_b2': scale * jax.random.normal(ks[11], (1, d_model), jnp.float32),
    }
    return p


# --------------------------- st_module forward ----------------------------- #

def st_module_forward(params, x, ti, di, ep, tdx, S2D, num_of_times):
    """x: (B, T, N, C).  ep/S2D are Python ints (static branch, as in PyTorch)."""
    del tdx  # unused in the reference forward
    B = x.shape[0]

    if ep < S2D:
        # warm branch: only the shared (last) adjacency slice is needed.
        a_s = jnp.matmul(params['s_m1'][-1], params['s_m2'][-1])   # (N, N)
        a_t = jnp.matmul(params['t_m1'][-1], params['t_m2'][-1])   # (T, P)
        adj_s = jnp.broadcast_to(a_s, (B,) + a_s.shape)            # (B, N, N)
        adj_tT = jnp.broadcast_to(a_t.T, (B, a_t.shape[1], a_t.shape[0]))  # (B, P, T)
    else:
        di2 = num_of_times + di
        def mix(m1, m2):
            a_ti = jnp.matmul(m1[ti], m2[ti])                      # (B, ., .)
            a_di = jnp.matmul(m1[di2], m2[di2])                    # (B, ., .)
            a_sh = jnp.matmul(m1[-1], m2[-1])                      # (., .)
            return (a_ti + a_di + a_sh[None]) / 3.0
        adj_s = mix(params['s_m1'], params['s_m2'])                # (B, N, N)
        adj_tT = jnp.swapaxes(mix(params['t_m1'], params['t_m2']), 1, 2)   # (B, P, T)

    return _fused_call(adj_s, adj_tT, x, params, x.dtype)


# --------------------------- pure-JAX reference ---------------------------- #

def _ref_forward(params, x, ti, di, ep, S2D, num_of_times):
    adjs_s = jnp.matmul(params['s_m1'], params['s_m2'])
    adjs_t = jnp.matmul(params['t_m1'], params['t_m2'])
    glu = lambda z, w1, b1, w2, b2: (z @ w1 + b1) * jax.nn.sigmoid(z @ w2 + b2)
    if ep < S2D:
        y = jnp.einsum('mn,btnc->btmc', adjs_s[-1], x)
    else:
        di2 = num_of_times + di
        a_s = (adjs_s[ti] + adjs_s[di2] + adjs_s[-1]) / 3.0
        y = jnp.einsum('bmn,btnc->btmc', a_s, x)
    x1 = glu(y, params['s_w1'], params['s_b1'][0], params['s_w2'], params['s_b2'][0]) + x
    if ep < S2D:
        z = jnp.einsum('tp,btnc->bpnc', adjs_t[-1], x1)
    else:
        a_t = (adjs_t[ti] + adjs_t[di2] + adjs_t[-1]) / 3.0
        z = jnp.einsum('btp,btnc->bpnc', a_t, x1)
    return glu(z, params['t_w1'], params['t_b1'][0], params['t_w2'], params['t_b2'][0])


# ---------------------------------- main ------------------------------------ #

if __name__ == "__main__":
    B, T, P, N, C = 2, 8, 8, 16, 32          # batch, in_len, out_len, nodes, d_model
    num_of_latent, num_of_times, num_of_days = 4, 12, 7

    key = jax.random.PRNGKey(0)
    kx, kp, kt, kd = jax.random.split(key, 4)
    params = init_params(kp, C, T, P, num_of_latent, num_of_times, num_of_days, N)
    x = jax.random.normal(kx, (B, T, N, C), jnp.float32)
    ti = jax.random.randint(kt, (B,), 0, num_of_times)
    di = jax.random.randint(kd, (B,), 0, num_of_days)

    fwd = jax.jit(st_module_forward, static_argnames=('ep', 'S2D', 'num_of_times'))

    # warm-up branch (ep < S2D): shared adjacency
    out_warm = fwd(params, x, ti, di, ep=0, tdx=None, S2D=5,
                   num_of_times=num_of_times)
    # dynamic branch (ep >= S2D): per-sample time/day adjacencies
    out_dyn = fwd(params, x, ti, di, ep=10, tdx=None, S2D=5,
                  num_of_times=num_of_times)
    jax.block_until_ready((out_warm, out_dyn))

    ref_warm = _ref_forward(params, x, ti, di, 0, 5, num_of_times)
    ref_dyn = _ref_forward(params, x, ti, di, 10, 5, num_of_times)
    assert out_warm.shape == (B, P, N, C)
    # tolerance relaxed vs f32 reference because MXU operands are bf16
    # (accumulation and gating remain f32).
    assert jnp.allclose(out_warm, ref_warm, rtol=2e-2, atol=1e-2), \
        float(jnp.max(jnp.abs(out_warm - ref_warm)))
    assert jnp.allclose(out_dyn, ref_dyn, rtol=2e-2, atol=1e-2), \
        float(jnp.max(jnp.abs(out_dyn - ref_dyn)))

    print("KERNEL_OK")
</pallas_src>

<mosaic_0001>
module attributes {stable_mosaic.version = 11 : i64} {
  func.func @_st_fused_kernel(%arg0: memref<2x16x16xf32, #tpu.memory_space<vmem>>, %arg1: memref<2x8x8xf32, #tpu.memory_space<vmem>>, %arg2: memref<2x8x16x32xf32, #tpu.memory_space<vmem>>, %arg3: memref<32x32xf32, #tpu.memory_space<vmem>>, %arg4: memref<1x32xf32, #tpu.memory_space<vmem>>, %arg5: memref<32x32xf32, #tpu.memory_space<vmem>>, %arg6: memref<1x32xf32, #tpu.memory_space<vmem>>, %arg7: memref<32x32xf32, #tpu.memory_space<vmem>>, %arg8: memref<1x32xf32, #tpu.memory_space<vmem>>, %arg9: memref<32x32xf32, #tpu.memory_space<vmem>>, %arg10: memref<1x32xf32, #tpu.memory_space<vmem>>, %arg11: memref<256x32xf32, #tpu.memory_space<vmem>>) attributes {dimension_semantics = [], scalar_prefetch = 0 : i64, scratch_operands = 0 : i64, tpu.core_type = #tpu.core_type<tc>} {
    %c0 = arith.constant 0 : index
    %c0_0 = arith.constant 0 : index
    %c0_1 = arith.constant 0 : index
    %0 = vector.load %arg0[%c0, %c0_0, %c0_1] : memref<2x16x16xf32, #tpu.memory_space<vmem>>, vector<2x16x16xf32>
    %1 = arith.truncf %0 : vector<2x16x16xf32> to vector<2x16x16xbf16>
    %c0_2 = arith.constant 0 : index
    %c0_3 = arith.constant 0 : index
    %c0_4 = arith.constant 0 : index
    %2 = vector.load %arg1[%c0_2, %c0_3, %c0_4] : memref<2x8x8xf32, #tpu.memory_space<vmem>>, vector<2x8x8xf32>
    %3 = arith.truncf %2 : vector<2x8x8xf32> to vector<2x8x8xbf16>
    %c0_5 = arith.constant 0 : index
    %c0_6 = arith.constant 0 : index
    %c0_7 = arith.constant 0 : index
    %c0_8 = arith.constant 0 : index
    %4 = vector.load %arg2[%c0_5, %c0_6, %c0_7, %c0_8] : memref<2x8x16x32xf32, #tpu.memory_space<vmem>>, vector<1x8x16x32xf32>
    %5 = vector.shape_cast %4 : vector<1x8x16x32xf32> to vector<8x16x32xf32>
    %6 = tpu.transpose %5, [1, 0, 2] : vector<8x16x32xf32> -> vector<16x8x32xf32>
    %7 = vector.shape_cast %6 : vector<16x8x32xf32> to vector<128x32xf32>
    %8 = vector.extract_strided_slice %1 {offsets = [0, 0, 0], sizes = [1, 16, 16], strides = [1, 1, 1]} : vector<2x16x16xbf16> to vector<1x16x16xbf16>
    %9 = vector.shape_cast %8 : vector<1x16x16xbf16> to vector<16x16xbf16>
    %10 = arith.truncf %6 : vector<16x8x32xf32> to vector<16x8x32xbf16>
    "tpu.trace_start"() <{level = 10 : i32, message = "mn,ntc->mtc"}> : () -> ()
    %cst = arith.constant dense<0.000000e+00> : vector<16x8x32xf32>
    %11 = tpu.matmul %9, %10, %cst {dimension_numbers = #tpu.dot_dimension_numbers<[1], [0], [0], [1, 2], [0, 0, 1, 1, 1, 2], [], []>} : vector<16x16xbf16>, vector<16x8x32xbf16>, vector<16x8x32xf32> -> vector<16x8x32xf32>
    "tpu.trace_stop"() : () -> ()
    %12 = vector.shape_cast %11 : vector<16x8x32xf32> to vector<128x32xf32>
    %c1 = arith.constant 1 : index
    %c0_9 = arith.constant 0 : index
    %c0_10 = arith.constant 0 : index
    %c0_11 = arith.constant 0 : index
    %13 = vector.load %arg2[%c1, %c0_9, %c0_10, %c0_11] : memref<2x8x16x32xf32, #tpu.memory_space<vmem>>, vector<1x8x16x32xf32>
    %14 = vector.shape_cast %13 : vector<1x8x16x32xf32> to vector<8x16x32xf32>
    %15 = tpu.transpose %14, [1, 0, 2] : vector<8x16x32xf32> -> vector<16x8x32xf32>
    %16 = vector.shape_cast %15 : vector<16x8x32xf32> to vector<128x32xf32>
    %17 = vector.extract_strided_slice %1 {offsets = [1, 0, 0], sizes = [1, 16, 16], strides = [1, 1, 1]} : vector<2x16x16xbf16> to vector<1x16x16xbf16>
    %18 = vector.shape_cast %17 : vector<1x16x16xbf16> to vector<16x16xbf16>
    %19 = arith.truncf %15 : vector<16x8x32xf32> to vector<16x8x32xbf16>
    "tpu.trace_start"() <{level = 10 : i32, message = "mn,ntc->mtc"}> : () -> ()
    %cst_12 = arith.constant dense<0.000000e+00> : vector<16x8x32xf32>
    %20 = tpu.matmul %18, %19, %cst_12 {dimension_numbers = #tpu.dot_dimension_numbers<[1], [0], [0], [1, 2], [0, 0, 1, 1, 1, 2], [], []>} : vector<16x16xbf16>, vector<16x8x32xbf16>, vector<16x8x32xf32> -> vector<16x8x32xf32>
    "tpu.trace_stop"() : () -> ()
    %21 = vector.shape_cast %20 : vector<16x8x32xf32> to vector<128x32xf32>
    %22 = tpu.concatenate %7, %16 in 0 : vector<128x32xf32>, vector<128x32xf32> -> vector<256x32xf32>
    %23 = tpu.concatenate %12, %21 in 0 : vector<128x32xf32>, vector<128x32xf32> -> vector<256x32xf32>
    %24 = arith.truncf %23 : vector<256x32xf32> to vector<256x32xbf16>
    %c0_13 = arith.constant 0 : index
    %c0_14 = arith.constant 0 : index
    %25 = vector.load %arg3[%c0_13, %c0_14] : memref<32x32xf32, #tpu.memory_space<vmem>>, vector<32x32xf32>
    %26 = arith.truncf %25 : vector<32x32xf32> to vector<32x32xbf16>
    %cst_15 = arith.constant dense<0.000000e+00> : vector<256x32xf32>
    %27 = tpu.matmul %24, %26, %cst_15 {dimension_numbers = #tpu.dot_dimension_numbers<[1], [0], [0], [1], [0, 0, 1, 1], [], []>} : vector<256x32xbf16>, vector<32x32xbf16>, vector<256x32xf32> -> vector<256x32xf32>
    %c0_16 = arith.constant 0 : index
    %c0_17 = arith.constant 0 : index
    %28 = vector.load %arg4[%c0_16, %c0_17] : memref<1x32xf32, #tpu.memory_space<vmem>>, vector<1x32xf32>
    %29 = vector.broadcast %28 : vector<1x32xf32> to vector<256x32xf32>
    %30 = arith.addf %27, %29 : vector<256x32xf32>
    %c0_18 = arith.constant 0 : index
    %c0_19 = arith.constant 0 : index
    %31 = vector.load %arg5[%c0_18, %c0_19] : memref<32x32xf32, #tpu.memory_space<vmem>>, vector<32x32xf32>
    %32 = arith.truncf %31 : vector<32x32xf32> to vector<32x32xbf16>
    %cst_20 = arith.constant dense<0.000000e+00> : vector<256x32xf32>
    %33 = tpu.matmul %24, %32, %cst_20 {dimension_numbers = #tpu.dot_dimension_numbers<[1], [0], [0], [1], [0, 0, 1, 1], [], []>} : vector<256x32xbf16>, vector<32x32xbf16>, vector<256x32xf32> -> vector<256x32xf32>
    %c0_21 = arith.constant 0 : index
    %c0_22 = arith.constant 0 : index
    %34 = vector.load %arg6[%c0_21, %c0_22] : memref<1x32xf32, #tpu.memory_space<vmem>>, vector<1x32xf32>
    %35 = vector.broadcast %34 : vector<1x32xf32> to vector<256x32xf32>
    %36 = arith.addf %33, %35 : vector<256x32xf32>
    %37 = arith.negf %36 : vector<256x32xf32>
    %38 = math.exp %37 : vector<256x32xf32>
    %cst_23 = arith.constant 1.000000e+00 : f32
    %39 = vector.broadcast %cst_23 : f32 to vector<256x32xf32>
    %40 = arith.addf %39, %38 : vector<256x32xf32>
    %41 = arith.divf %39, %40 : vector<256x32xf32>
    %42 = arith.mulf %30, %41 : vector<256x32xf32>
    %43 = arith.addf %42, %22 : vector<256x32xf32>
    %44 = arith.truncf %43 : vector<256x32xf32> to vector<256x32xbf16>
    %45 = vector.shape_cast %44 : vector<256x32xbf16> to vector<2x16x8x32xbf16>
    %46 = vector.extract_strided_slice %3 {offsets = [0, 0, 0], sizes = [1, 8, 8], strides = [1, 1, 1]} : vector<2x8x8xbf16> to vector<1x8x8xbf16>
    %47 = vector.shape_cast %46 : vector<1x8x8xbf16> to vector<8x8xbf16>
    %48 = vector.extract_strided_slice %45 {offsets = [0, 0, 0, 0], sizes = [1, 16, 8, 32], strides = [1, 1, 1, 1]} : vector<2x16x8x32xbf16> to vector<1x16x8x32xbf16>
    %49 = vector.shape_cast %48 : vector<1x16x8x32xbf16> to vector<16x8x32xbf16>
    "tpu.trace_start"() <{level = 10 : i32, message = "pt,ntc->pnc"}> : () -> ()
    %cst_24 = arith.constant dense<0.000000e+00> : vector<8x16x32xf32>
    %50 = tpu.matmul %47, %49, %cst_24 {dimension_numbers = #tpu.dot_dimension_numbers<[1], [1], [0], [0, 2], [0, 0, 1, 0, 1, 2], [], []>} : vector<8x8xbf16>, vector<16x8x32xbf16>, vector<8x16x32xf32> -> vector<8x16x32xf32>
    "tpu.trace_stop"() : () -> ()
    %51 = vector.shape_cast %50 : vector<8x16x32xf32> to vector<128x32xf32>
    %52 = vector.extract_strided_slice %3 {offsets = [1, 0, 0], sizes = [1, 8, 8], strides = [1, 1, 1]} : vector<2x8x8xbf16> to vector<1x8x8xbf16>
    %53 = vector.shape_cast %52 : vector<1x8x8xbf16> to vector<8x8xbf16>
    %54 = vector.extract_strided_slice %45 {offsets = [1, 0, 0, 0], sizes = [1, 16, 8, 32], strides = [1, 1, 1, 1]} : vector<2x16x8x32xbf16> to vector<1x16x8x32xbf16>
    %55 = vector.shape_cast %54 : vector<1x16x8x32xbf16> to vector<16x8x32xbf16>
    "tpu.trace_start"() <{level = 10 : i32, message = "pt,ntc->pnc"}> : () -> ()
    %cst_25 = arith.constant dense<0.000000e+00> : vector<8x16x32xf32>
    %56 = tpu.matmul %53, %55, %cst_25 {dimension_numbers = #tpu.dot_dimension_numbers<[1], [1], [0], [0, 2], [0, 0, 1, 0, 1, 2], [], []>} : vector<8x8xbf16>, vector<16x8x32xbf16>, vector<8x16x32xf32> -> vector<8x16x32xf32>
    "tpu.trace_stop"() : () -> ()
    %57 = vector.shape_cast %56 : vector<8x16x32xf32> to vector<128x32xf32>
    %58 = tpu.concatenate %51, %57 in 0 : vector<128x32xf32>, vector<128x32xf32> -> vector<256x32xf32>
    %59 = arith.truncf %58 : vector<256x32xf32> to vector<256x32xbf16>
    %c0_26 = arith.constant 0 : index
    %c0_27 = arith.constant 0 : index
    %60 = vector.load %arg7[%c0_26, %c0_27] : memref<32x32xf32, #tpu.memory_space<vmem>>, vector<32x32xf32>
    %61 = arith.truncf %60 : vector<32x32xf32> to vector<32x32xbf16>
    %cst_28 = arith.constant dense<0.000000e+00> : vector<256x32xf32>
    %62 = tpu.matmul %59, %61, %cst_28 {dimension_numbers = #tpu.dot_dimension_numbers<[1], [0], [0], [1], [0, 0, 1, 1], [], []>} : vector<256x32xbf16>, vector<32x32xbf16>, vector<256x32xf32> -> vector<256x32xf32>
    %c0_29 = arith.constant 0 : index
    %c0_30 = arith.constant 0 : index
    %63 = vector.load %arg8[%c0_29, %c0_30] : memref<1x32xf32, #tpu.memory_space<vmem>>, vector<1x32xf32>
    %64 = vector.broadcast %63 : vector<1x32xf32> to vector<256x32xf32>
    %65 = arith.addf %62, %64 : vector<256x32xf32>
    %c0_31 = arith.constant 0 : index
    %c0_32 = arith.constant 0 : index
    %66 = vector.load %arg9[%c0_31, %c0_32] : memref<32x32xf32, #tpu.memory_space<vmem>>, vector<32x32xf32>
    %67 = arith.truncf %66 : vector<32x32xf32> to vector<32x32xbf16>
    %cst_33 = arith.constant dense<0.000000e+00> : vector<256x32xf32>
    %68 = tpu.matmul %59, %67, %cst_33 {dimension_numbers = #tpu.dot_dimension_numbers<[1], [0], [0], [1], [0, 0, 1, 1], [], []>} : vector<256x32xbf16>, vector<32x32xbf16>, vector<256x32xf32> -> vector<256x32xf32>
    %c0_34 = arith.constant 0 : index
    %c0_35 = arith.constant 0 : index
    %69 = vector.load %arg10[%c0_34, %c0_35] : memref<1x32xf32, #tpu.memory_space<vmem>>, vector<1x32xf32>
    %70 = vector.broadcast %69 : vector<1x32xf32> to vector<256x32xf32>
    %71 = arith.addf %68, %70 : vector<256x32xf32>
    %72 = arith.negf %71 : vector<256x32xf32>
    %73 = math.exp %72 : vector<256x32xf32>
    %cst_36 = arith.constant 1.000000e+00 : f32
    %74 = vector.broadcast %cst_36 : f32 to vector<256x32xf32>
    %75 = arith.addf %74, %73 : vector<256x32xf32>
    %76 = arith.divf %74, %75 : vector<256x32xf32>
    %77 = arith.mulf %65, %76 : vector<256x32xf32>
    %c0_37 = arith.constant 0 : index
    %c0_38 = arith.constant 0 : index
    %78 = vector.load %arg11[%c0_37, %c0_38] : memref<256x32xf32, #tpu.memory_space<vmem>>, vector<256x32xf32>
    tpu.vector_store %arg11[%c0_37, %c0_38], %77 {strides = array<i32>} : memref<256x32xf32, #tpu.memory_space<vmem>>, vector<256x32xf32>,
    return
  }
}

</mosaic_0001>

<llo_original>
// kernel: st_module_forward.1
$region0: #{st_module_forward.1}
  #allocation0 [shape = 'u32[]', space=smem, size = 0x4, offset = 0x4, fixed_abs, tag = 'smem constant byte address 0x4 - core index']
  #allocation1 [shape = 'u32[144,128]{1,0:T(1,128)}', space=vmem, size = 0x12000, scoped, tag = 'internal scratch']
  %s0 = inlined_call_operand.vmem [shape: f32[2,16,16], index: 0, kind: input, shape index: {}]
  %s1 = inlined_call_operand.vmem [shape: f32[2,8,8], index: 1, kind: input, shape index: {}]
  %s2 = inlined_call_operand.vmem [shape: f32[2,8,16,32], index: 2, kind: input, shape index: {}]
  %s3 = inlined_call_operand.vmem [shape: f32[32,32], index: 3, kind: input, shape index: {}]
  %s4 = inlined_call_operand.vmem [shape: f32[1,32], index: 4, kind: input, shape index: {}]
  %s5 = inlined_call_operand.vmem [shape: f32[32,32], index: 5, kind: input, shape index: {}]
  %s6 = inlined_call_operand.vmem [shape: f32[1,32], index: 6, kind: input, shape index: {}]
  %s7 = inlined_call_operand.vmem [shape: f32[32,32], index: 7, kind: input, shape index: {}]
  %s8 = inlined_call_operand.vmem [shape: f32[1,32], index: 8, kind: input, shape index: {}]
  %s9 = inlined_call_operand.vmem [shape: f32[32,32], index: 9, kind: input, shape index: {}]
  %s10 = inlined_call_operand.vmem [shape: f32[1,32], index: 10, kind: input, shape index: {}]
  %s11 = inlined_call_operand.hbm [shape: f32[256,32], index: 11, kind: output, shape index: {}]
  %s12 = sld [smem:[#allocation0]]
  $region54: #{st_module_forward.1} parent=0
    _
  %s14 = ssub.s32 1, %s12
  %s15 = scalar_select 0, %s14, %s12
  $region1: #{st_module_forward.1} parent=0
    #allocation2 [shape = 'u8[131072]{0}', space=vmem, size = 0x20000, scoped, tag = 'output window, operand 0, single buffered']
    #allocation3 [shape = 's32[1]{0}', space=sflag, size = 0x4, scoped, tag = 'scoped memory for st_module_forward.1']
    %16 = vsyncpa [#allocation3], 0
    // Predicated region
    $region2: #{st_module_forward.1} parent=1 // pred_check
      _
    $region3: #{st_module_forward.1} parent=1 // pred_check_branch
      %18 = sbr.rel (0) target = $region5
    $region4: #{st_module_forward.1} parent=1 // pred_region
      _
    $region5: #{st_module_forward.1} parent=1 // pred_fallthru
      _
    // Predicated region
    $region6: #{st_module_forward.1} parent=1 // pred_check
      _
    $region7: #{st_module_forward.1} parent=1 // pred_check_branch
      %20 = sbr.rel (0) target = $region9
    $region8: #{st_module_forward.1} parent=1 // pred_region
      _
    $region9: #{st_module_forward.1} parent=1 // pred_fallthru
      _
    // Predicated region
    $region10: #{st_module_forward.1} parent=1 // pred_check
      _
    $region11: #{st_module_forward.1} parent=1 // pred_check_branch
      %22 = sbr.rel (0) target = $region13
    $region12: #{st_module_forward.1} parent=1 // pred_region
      _
    $region13: #{st_module_forward.1} parent=1 // pred_fallthru
      _
    // Predicated region
    $region14: #{st_module_forward.1} parent=1 // pred_check
      _
    $region15: #{st_module_forward.1} parent=1 // pred_check_branch
      %24 = sbr.rel (0) target = $region17
    $region16: #{st_module_forward.1} parent=1 // pred_region
      _
    $region17: #{st_module_forward.1} parent=1 // pred_fallthru
      _
    // Predicated region
    $region18: #{st_module_forward.1} parent=1 // pred_check
      _
    $region19: #{st_module_forward.1} parent=1 // pred_check_branch
      %26 = sbr.rel (0) target = $region21
    $region20: #{st_module_forward.1} parent=1 // pred_region
      _
    $region21: #{st_module_forward.1} parent=1 // pred_fallthru
      _
    // Predicated region
    $region22: #{st_module_forward.1} parent=1 // pred_check
      _
    $region23: #{st_module_forward.1} parent=1 // pred_check_branch
      %28 = sbr.rel (0) target = $region25
    $region24: #{st_module_forward.1} parent=1 // pred_region
      _
    $region25: #{st_module_forward.1} parent=1 // pred_fallthru
      _
    // Predicated region
    $region26: #{st_module_forward.1} parent=1 // pred_check
      _
    $region27: #{st_module_forward.1} parent=1 // pred_check_branch
      %30 = sbr.rel (0) target = $region29
    $region28: #{st_module_forward.1} parent=1 // pred_region
      _
    $region29: #{st_module_forward.1} parent=1 // pred_fallthru
      _
    // Predicated region
    $region30: #{st_module_forward.1} parent=1 // pred_check
      _
    $region31: #{st_module_forward.1} parent=1 // pred_check_branch
      %32 = sbr.rel (0) target = $region33
    $region32: #{st_module_forward.1} parent=1 // pred_region
      _
    $region33: #{st_module_forward.1} parent=1 // pred_fallthru
      _
    // Predicated region
    $region34: #{st_module_forward.1} parent=1 // pred_check
      _
    $region35: #{st_module_forward.1} parent=1 // pred_check_branch
      %34 = sbr.rel (0) target = $region37
    $region36: #{st_module_forward.1} parent=1 // pred_region
      _
    $region37: #{st_module_forward.1} parent=1 // pred_fallthru
      _
    // Predicated region
    $region38: #{st_module_forward.1} parent=1 // pred_check
      _
    $region39: #{st_module_forward.1} parent=1 // pred_check_branch
      %36 = sbr.rel (0) target = $region41
    $region40: #{st_module_forward.1} parent=1 // pred_region
      _
    $region41: #{st_module_forward.1} parent=1 // pred_fallthru
      _
    // Predicated region
    $region42: #{st_module_forward.1} parent=1 // pred_check
      _
    $region43: #{st_module_forward.1} parent=1 // pred_check_branch
      %38 = sbr.rel (0) target = $region45
    $region44: #{st_module_forward.1} parent=1 // pred_region
      _
    $region45: #{st_module_forward.1} parent=1 // pred_fallthru
      _
    %v40 = vld [vmem:[%s0] sm:$0xff]
    %v41 = vld [vmem:[%s0 + $0x8] sm:$0xff]
    %v42 = vld [vmem:[%s0 + $0x10] sm:$0xff]
    %v43 = vld [vmem:[%s0 + $0x18] sm:$0xff]
    %v44 = vpack.c.bf16 %v41, %v40
    %v45 = vpack.c.bf16 %v43, %v42
    %v46 = vld [vmem:[%s1] sm:$0xff]
    %v47 = vld [vmem:[%s1 + $0x8] sm:$0xff]
    %v48 = vpack.c.bf16 %v46, %v46
    %v49 = vpack.c.bf16 %v47, %v47
    %v50 = vld [vmem:[%s2] sm:$0xff]
    %v51 = vld [vmem:[%s2 + $0x8] sm:$0xff]
    %v52 = vld [vmem:[%s2 + $0x10] sm:$0xff]
    %v53 = vld [vmem:[%s2 + $0x18] sm:$0xff]
    %v54 = vld [vmem:[%s2 + $0x20] sm:$0xff]
    %v55 = vld [vmem:[%s2 + $0x28] sm:$0xff]
    %v56 = vld [vmem:[%s2 + $0x30] sm:$0xff]
    %v57 = vld [vmem:[%s2 + $0x38] sm:$0xff]
    %v58 = vld [vmem:[%s2 + $0x40] sm:$0xff]
    %v59 = vld [vmem:[%s2 + $0x48] sm:$0xff]
    %v60 = vld [vmem:[%s2 + $0x50] sm:$0xff]
    %v61 = vld [vmem:[%s2 + $0x58] sm:$0xff]
    %v62 = vld [vmem:[%s2 + $0x60] sm:$0xff]
    %v63 = vld [vmem:[%s2 + $0x68] sm:$0xff]
    %v64 = vld [vmem:[%s2 + $0x70] sm:$0xff]
    %v65 = vld [vmem:[%s2 + $0x78] sm:$0xff]
    %v66 = vcombine.low %v50, %v54
    %v67 = vcombine.high %v50, %v54
    %v69 = vunpack.c.l.s4 1983009808
    %v70 = vunpack.c.0.s8 %v69
    %v71 = vlaneseq
    %v72 = vshrl.u32 %v71, 7
    %v73 = vsub.s32 %v70, %v72
    %v74 = vrot.slane %v66, %v73
    %v76 = vunpack.c.l.s4 1983009808
    %v77 = vunpack.c.0.s8 %v76
    %v78 = vlaneseq
    %v79 = vshrl.u32 %v78, 7
    %v80 = vsub.s32 %v77, %v79
    %v81 = vrot.slane %v67, %v80
    %v82 = vcombine.low %v52, %v56
    %v83 = vcombine.high %v52, %v56
    %v85 = vunpack.c.l.s4 1983009808
    %v86 = vunpack.c.0.s8 %v85
    %v87 = vlaneseq
    %v88 = vshrl.u32 %v87, 7
    %v89 = vsub.s32 %v86, %v88
    %v90 = vrot.slane %v82, %v89
    %v92 = vunpack.c.l.s4 1983009808
    %v93 = vunpack.c.0.s8 %v92
    %v94 = vlaneseq
    %v95 = vshrl.u32 %v94, 7
    %v96 = vsub.s32 %v93, %v95
    %v97 = vrot.slane %v83, %v96
    %v98 = vcombine.low %v58, %v62
    %v99 = vcombine.high %v58, %v62
    %v101 = vunpack.c.l.s4 1983009808
    %v102 = vunpack.c.0.s8 %v101
    %v103 = vlaneseq
    %v104 = vshrl.u32 %v103, 7
    %v105 = vsub.s32 %v102, %v104
    %v106 = vrot.slane %v98, %v105
    %v108 = vunpack.c.l.s4 1983009808
    %v109 = vunpack.c.0.s8 %v108
    %v110 = vlaneseq
    %v111 = vshrl.u32 %v110, 7
    %v112 = vsub.s32 %v109, %v111
    %v113 = vrot.slane %v99, %v112
    %v114 = vcombine.low %v60, %v64
    %v115 = vcombine.high %v60, %v64
    %v117 = vunpack.c.l.s4 1983009808
    %v118 = vunpack.c.0.s8 %v117
    %v119 = vlaneseq
    %v120 = vshrl.u32 %v119, 7
    %v121 = vsub.s32 %v118, %v120
    %v122 = vrot.slane %v114, %v121
    %v124 = vunpack.c.l.s4 1983009808
    %v125 = vunpack.c.0.s8 %v124
    %v126 = vlaneseq
    %v127 = vshrl.u32 %v126, 7
    %v128 = vsub.s32 %v125, %v127
    %v129 = vrot.slane %v115, %v128
    %v130 = vcombine.low %v74, %v90
    %v131 = vcombine.high %v74, %v90
    %v133 = vunpack.c.l.s4 1934713408
    %v134 = vunpack.c.0.s8 %v133
    %v135 = vlaneseq
    %v136 = vshrl.u32 %v135, 7
    %v137 = vsub.s32 %v134, %v136
    %v138 = vrot.slane %v130, %v137
    %v140 = vunpack.c.l.s4 1934713408
    %v141 = vunpack.c.0.s8 %v140
    %v142 = vlaneseq
    %v143 = vshrl.u32 %v142, 7
    %v144 = vsub.s32 %v141, %v143
    %v145 = vrot.slane %v131, %v144
    %v146 = vcombine.low %v81, %v97
    %v147 = vcombine.high %v81, %v97
    %v149 = vunpack.c.l.s4 1934713408
    %v150 = vunpack.c.0.s8 %v149
    %v151 = vlaneseq
    %v152 = vshrl.u32 %v151, 7
    %v153 = vsub.s32 %v150, %v152
    %v154 = vrot.slane %v146, %v153
    %v156 = vunpack.c.l.s4 1934713408
    %v157 = vunpack.c.0.s8 %v156
    %v158 = vlaneseq
    %v159 = vshrl.u32 %v158, 7
    %v160 = vsub.s32 %v157, %v159
    %v161 = vrot.slane %v147, %v160
    %v162 = vcombine.low %v106, %v122
    %v163 = vcombine.high %v106, %v122
    %v165 = vunpack.c.l.s4 1934713408
    %v166 = vunpack.c.0.s8 %v165
    %v167 = vlaneseq
    %v168 = vshrl.u32 %v167, 7
    %v169 = vsub.s32 %v166, %v168
    %v170 = vrot.slane %v162, %v169
    %v172 = vunpack.c.l.s4 1934713408
    %v173 = vunpack.c.0.s8 %v172
    %v174 = vlaneseq
    %v175 = vshrl.u32 %v174, 7
    %v176 = vsub.s32 %v173, %v175
    %v177 = vrot.slane %v163, %v176
    %v178 = vcombine.low %v113, %v129
    %v179 = vcombine.high %v113, %v129
    %v181 = vunpack.c.l.s4 1934713408
    %v182 = vunpack.c.0.s8 %v181
    %v183 = vlaneseq
    %v184 = vshrl.u32 %v183, 7
    %v185 = vsub.s32 %v182, %v184
    %v186 = vrot.slane %v178, %v185
    %v188 = vunpack.c.l.s4 1934713408
    %v189 = vunpack.c.0.s8 %v188
    %v190 = vlaneseq
    %v191 = vshrl.u32 %v190, 7
    %v192 = vsub.s32 %v189, %v191
    %v193 = vrot.slane %v179, %v192
    %v194 = vcombine.low %v138, %v170
    %v195 = vcombine.high %v138, %v170
    %v196 = vcombine.low %v145, %v177
    %v197 = vcombine.high %v145, %v177
    %v198 = vcombine.low %v154, %v186
    %v199 = vcombine.high %v154, %v186
    %v200 = vcombine.low %v161, %v193
    %v201 = vcombine.high %v161, %v193
    %v202 = vcombine.low %v51, %v55
    %v203 = vcombine.high %v51, %v55
    %v205 = vunpack.c.l.s4 1983009808
    %v206 = vunpack.c.0.s8 %v205
    %v207 = vlaneseq
    %v208 = vshrl.u32 %v207, 7
    %v209 = vsub.s32 %v206, %v208
    %v210 = vrot.slane %v202, %v209
    %v212 = vunpack.c.l.s4 1983009808
    %v213 = vunpack.c.0.s8 %v212
    %v214 = vlaneseq
    %v215 = vshrl.u32 %v214, 7
    %v216 = vsub.s32 %v213, %v215
    %v217 = vrot.slane %v203, %v216
    %v218 = vcombine.low %v53, %v57
    %v219 = vcombine.high %v53, %v57
    %v221 = vunpack.c.l.s4 1983009808
    %v222 = vunpack.c.0.s8 %v221
    %v223 = vlaneseq
    %v224 = vshrl.u32 %v223, 7
    %v225 = vsub.s32 %v222, %v224
    %v226 = vrot.slane %v218, %v225
    %v228 = vunpack.c.l.s4 1983009808
    %v229 = vunpack.c.0.s8 %v228
    %v230 = vlaneseq
    %v231 = vshrl.u32 %v230, 7
    %v232 = vsub.s32 %v229, %v231
    %v233 = vrot.slane %v219, %v232
    %v234 = vcombine.low %v59, %v63
    %v235 = vcombine.high %v59, %v63
    %v237 = vunpack.c.l.s4 1983009808
    %v238 = vunpack.c.0.s8 %v237
    %v239 = vlaneseq
    %v240 = vshrl.u32 %v239, 7
    %v241 = vsub.s32 %v238, %v240
    %v242 = vrot.slane %v234, %v241
    %v244 = vunpack.c.l.s4 1983009808
    %v245 = vunpack.c.0.s8 %v244
    %v246 = vlaneseq
    %v247 = vshrl.u32 %v246, 7
    %v248 = vsub.s32 %v245, %v247
    %v249 = vrot.slane %v235, %v248
    %v250 = vcombine.low %v61, %v65
    %v251 = vcombine.high %v61, %v65
    %v253 = vunpack.c.l.s4 1983009808
    %v254 = vunpack.c.0.s8 %v253
    %v255 = vlaneseq
    %v256 = vshrl.u32 %v255, 7
    %v257 = vsub.s32 %v254, %v256
    %v258 = vrot.slane %v250, %v257
    %v260 = vunpack.c.l.s4 1983009808
    %v261 = vunpack.c.0.s8 %v260
    %v262 = vlaneseq
    %v263 = vshrl.u32 %v262, 7
    %v264 = vsub.s32 %v261, %v263
    %v265 = vrot.slane %v251, %v264
    %v266 = vcombine.low %v210, %v226
    %v267 = vcombine.high %v210, %v226
    %v269 = vunpack.c.l.s4 1934713408
    %v270 = vunpack.c.0.s8 %v269
    %v271 = vlaneseq
    %v272 = vshrl.u32 %v271, 7
    %v273 = vsub.s32 %v270, %v272
    %v274 = vrot.slane %v266, %v273
    %v276 = vunpack.c.l.s4 1934713408
    %v277 = vunpack.c.0.s8 %v276
    %v278 = vlaneseq
    %v279 = vshrl.u32 %v278, 7
    %v280 = vsub.s32 %v277, %v279
    %v281 = vrot.slane %v267, %v280
    %v282 = vcombine.low %v217, %v233
    %v283 = vcombine.high %v217, %v233
    %v285 = vunpack.c.l.s4 1934713408
    %v286 = vunpack.c.0.s8 %v285
    %v287 = vlaneseq
    %v288 = vshrl.u32 %v287, 7
    %v289 = vsub.s32 %v286, %v288
    %v290 = vrot.slane %v282, %v289
    %v292 = vunpack.c.l.s4 1934713408
    %v293 = vunpack.c.0.s8 %v292
    %v294 = vlaneseq
    %v295 = vshrl.u32 %v294, 7
    %v296 = vsub.s32 %v293, %v295
    %v297 = vrot.slane %v283, %v296
    %v298 = vcombine.low %v242, %v258
    %v299 = vcombine.high %v242, %v258
    %v301 = vunpack.c.l.s4 1934713408
    %v302 = vunpack.c.0.s8 %v301
    %v303 = vlaneseq
    %v304 = vshrl.u32 %v303, 7
    %v305 = vsub.s32 %v302, %v304
    %v306 = vrot.slane %v298, %v305
    %v308 = vunpack.c.l.s4 1934713408
    %v309 = vunpack.c.0.s8 %v308
    %v310 = vlaneseq
    %v311 = vshrl.u32 %v310, 7
    %v312 = vsub.s32 %v309, %v311
    %v313 = vrot.slane %v299, %v312
    %v314 = vcombine.low %v249, %v265
    %v315 = vcombine.high %v249, %v265
    %v317 = vunpack.c.l.s4 1934713408
    %v318 = vunpack.c.0.s8 %v317
    %v319 = vlaneseq
    %v320 = vshrl.u32 %v319, 7
    %v321 = vsub.s32 %v318, %v320
    %v322 = vrot.slane %v314, %v321
    %v324 = vunpack.c.l.s4 1934713408
    %v325 = vunpack.c.0.s8 %v324
    %v326 = vlaneseq
    %v327 = vshrl.u32 %v326, 7
    %v328 = vsub.s32 %v325, %v327
    %v329 = vrot.slane %v315, %v328
    %v330 = vcombine.low %v274, %v306
    %v331 = vcombine.high %v274, %v306
    %v332 = vcombine.low %v281, %v313
    %v333 = vcombine.high %v281, %v313
    %v334 = vcombine.low %v290, %v322
    %v335 = vcombine.high %v290, %v322
    %v336 = vcombine.low %v297, %v329
    %v337 = vcombine.high %v297, %v329
    %v338 = vpack.c.bf16 %v194, %v194
    %v339 = vpack.c.bf16 %v195, %v195
    %v340 = vpack.c.bf16 %v196, %v196
    %v341 = vpack.c.bf16 %v197, %v197
    %v342 = vpack.c.bf16 %v198, %v198
    %v343 = vpack.c.bf16 %v199, %v199
    %v344 = vpack.c.bf16 %v200, %v200
    %v345 = vpack.c.bf16 %v201, %v201
    %v346 = vpack.c.bf16 %v330, %v330
    %v347 = vpack.c.bf16 %v331, %v331
    %v348 = vpack.c.bf16 %v332, %v332
    %v349 = vpack.c.bf16 %v333, %v333
    %v350 = vpack.c.bf16 %v334, %v334
    %v351 = vpack.c.bf16 %v335, %v335
    %v352 = vpack.c.bf16 %v336, %v336
    %v353 = vpack.c.bf16 %v337, %v337
    %v354 = vcombine.low %v338, %v342
    %v356 = vunpack.c.l.s4 1983009808
    %v357 = vunpack.c.0.s8 %v356
    %v358 = vlaneseq
    %v359 = vshrl.u32 %v358, 7
    %v360 = vsub.s32 %v357, %v359
    %v361 = vrot.slane %v354, %v360
    %v362 = vcombine.low %v340, %v344
    %v364 = vunpack.c.l.s4 1983009808
    %v365 = vunpack.c.0.s8 %v364
    %v366 = vlaneseq
    %v367 = vshrl.u32 %v366, 7
    %v368 = vsub.s32 %v365, %v367
    %v369 = vrot.slane %v362, %v368
    %v370 = vcombine.low %v346, %v350
    %v372 = vunpack.c.l.s4 1983009808
    %v373 = vunpack.c.0.s8 %v372
    %v374 = vlaneseq
    %v375 = vshrl.u32 %v374, 7
    %v376 = vsub.s32 %v373, %v375
    %v377 = vrot.slane %v370, %v376
    %v378 = vcombine.low %v348, %v352
    %v380 = vunpack.c.l.s4 1983009808
    %v381 = vunpack.c.0.s8 %v380
    %v382 = vlaneseq
    %v383 = vshrl.u32 %v382, 7
    %v384 = vsub.s32 %v381, %v383
    %v385 = vrot.slane %v378, %v384
    %v386 = vcombine.low %v361, %v369
    %v387 = vcombine.high %v361, %v369
    %v389 = vunpack.c.l.s4 1934713408
    %v390 = vunpack.c.0.s8 %v389
    %v391 = vlaneseq
    %v392 = vshrl.u32 %v391, 7
    %v393 = vsub.s32 %v390, %v392
    %v394 = vrot.slane %v386, %v393
    %v396 = vunpack.c.l.s4 1934713408
    %v397 = vunpack.c.0.s8 %v396
    %v398 = vlaneseq
    %v399 = vshrl.u32 %v398, 7
    %v400 = vsub.s32 %v397, %v399
    %v401 = vrot.slane %v387, %v400
    %v402 = vcombine.low %v377, %v385
    %v403 = vcombine.high %v377, %v385
    %v405 = vunpack.c.l.s4 1934713408
    %v406 = vunpack.c.0.s8 %v405
    %v407 = vlaneseq
    %v408 = vshrl.u32 %v407, 7
    %v409 = vsub.s32 %v406, %v408
    %v410 = vrot.slane %v402, %v409
    %v412 = vunpack.c.l.s4 1934713408
    %v413 = vunpack.c.0.s8 %v412
    %v414 = vlaneseq
    %v415 = vshrl.u32 %v414, 7
    %v416 = vsub.s32 %v413, %v415
    %v417 = vrot.slane %v403, %v416
    %v418 = vcombine.low %v394, %v410
    %v419 = vcombine.high %v394, %v410
    %v420 = vcombine.low %v401, %v417
    %v421 = vcombine.high %v401, %v417
    %v422 = vcombine.low %v339, %v343
    %v424 = vunpack.c.l.s4 1983009808
    %v425 = vunpack.c.0.s8 %v424
    %v426 = vlaneseq
    %v427 = vshrl.u32 %v426, 7
    %v428 = vsub.s32 %v425, %v427
    %v429 = vrot.slane %v422, %v428
    %v430 = vcombine.low %v341, %v345
    %v432 = vunpack.c.l.s4 1983009808
    %v433 = vunpack.c.0.s8 %v432
    %v434 = vlaneseq
    %v435 = vshrl.u32 %v434, 7
    %v436 = vsub.s32 %v433, %v435
    %v437 = vrot.slane %v430, %v436
    %v438 = vcombine.low %v347, %v351
    %v440 = vunpack.c.l.s4 1983009808
    %v441 = vunpack.c.0.s8 %v440
    %v442 = vlaneseq
    %v443 = vshrl.u32 %v442, 7
    %v444 = vsub.s32 %v441, %v443
    %v445 = vrot.slane %v438, %v444
    %v446 = vcombine.low %v349, %v353
    %v448 = vunpack.c.l.s4 1983009808
    %v449 = vunpack.c.0.s8 %v448
    %v450 = vlaneseq
    %v451 = vshrl.u32 %v450, 7
    %v452 = vsub.s32 %v449, %v451
    %v453 = vrot.slane %v446, %v452
    %v454 = vcombine.low %v429, %v437
    %v455 = vcombine.high %v429, %v437
    %v457 = vunpack.c.l.s4 1934713408
    %v458 = vunpack.c.0.s8 %v457
    %v459 = vlaneseq
    %v460 = vshrl.u32 %v459, 7
    %v461 = vsub.s32 %v458, %v460
    %v462 = vrot.slane %v454, %v461
    %v464 = vunpack.c.l.s4 1934713408
    %v465 = vunpack.c.0.s8 %v464
    %v466 = vlaneseq
    %v467 = vshrl.u32 %v466, 7
    %v468 = vsub.s32 %v465, %v467
    %v469 = vrot.slane %v455, %v468
    %v470 = vcombine.low %v445, %v453
    %v471 = vcombine.high %v445, %v453
    %v473 = vunpack.c.l.s4 1934713408
    %v474 = vunpack.c.0.s8 %v473
    %v475 = vlaneseq
    %v476 = vshrl.u32 %v475, 7
    %v477 = vsub.s32 %v474, %v476
    %v478 = vrot.slane %v470, %v477
    %v480 = vunpack.c.l.s4 1934713408
    %v481 = vunpack.c.0.s8 %v480
    %v482 = vlaneseq
    %v483 = vshrl.u32 %v482, 7
    %v484 = vsub.s32 %v481, %v483
    %v485 = vrot.slane %v471, %v484
    %v486 = vcombine.low %v462, %v478
    %v487 = vcombine.high %v462, %v478
    %v488 = vcombine.low %v469, %v485
    %v489 = vcombine.high %v469, %v485
    %v492 = vpack.i.b16 %v486, %v418
    %v493 = vshrl.u32 %v418, 16
    %v494 = vshrl.u32 %v486, 16
    %v495 = vpack.i.b16 %v494, %v493
    %v498 = vpack.i.b16 %v487, %v419
    %v499 = vshrl.u32 %v419, 16
    %v500 = vshrl.u32 %v487, 16
    %v501 = vpack.i.b16 %v500, %v499
    %v504 = vpack.i.b16 %v488, %v420
    %v505 = vshrl.u32 %v420, 16
    %v506 = vshrl.u32 %v488, 16
    %v507 = vpack.i.b16 %v506, %v505
    %v510 = vpack.i.b16 %v489, %v421
    %v511 = vshrl.u32 %v421, 16
    %v512 = vshrl.u32 %v489, 16
    %v513 = vpack.i.b16 %v512, %v511
    %514 = vrot.lane.b32.xlu0 %v495, 32
    %v515 = vpop.permute.xlu0 %514
    %516 = vrot.lane.b32.xlu0 %v498, 64
    %v517 = vpop.permute.xlu0 %516
    %518 = vrot.lane.b32.xlu0 %v501, 96
    %v519 = vpop.permute.xlu0 %518
    %520 = vrot.lane.b32.xlu0 %v507, 32
    %v521 = vpop.permute.xlu0 %520
    %522 = vrot.lane.b32.xlu0 %v510, 64
    %v523 = vpop.permute.xlu0 %522
    %524 = vrot.lane.b32.xlu0 %v513, 96
    %v525 = vpop.permute.xlu0 %524
    %vm526 = vcmask 261120
    %v529 = vsel %vm526, %v492, %v515
    %vm530 = vcmask 523264
    %v532 = vsel %vm530, %v529, %v517
    %vm533 = vcmask 785408
    %v535 = vsel %vm533, %v532, %v519
    %v539 = vsel %vm526, %v504, %v521
    %v541 = vsel %vm530, %v539, %v523
    %v543 = vsel %vm533, %v541, %v525
    %v545 = vcombine.low 0.0, 0.0
    %v546 = vcombine.high 0.0, 0.0
    %v548 = vunpack.c.l.s4 1983009808
    %v549 = vunpack.c.0.s8 %v548
    %v550 = vlaneseq
    %v551 = vshrl.u32 %v550, 7
    %v552 = vsub.s32 %v549, %v551
    %v553 = vrot.slane %v545, %v552
    %v555 = vunpack.c.l.s4 1983009808
    %v556 = vunpack.c.0.s8 %v555
    %v557 = vlaneseq
    %v558 = vshrl.u32 %v557, 7
    %v559 = vsub.s32 %v556, %v558
    %v560 = vrot.slane %v546, %v559
    %v561 = vcombine.low %v553, %v553
    %v562 = vcombine.high %v553, %v553
    %v564 = vunpack.c.l.s4 1934713408
    %v565 = vunpack.c.0.s8 %v564
    %v566 = vlaneseq
    %v567 = vshrl.u32 %v566, 7
    %v568 = vsub.s32 %v565, %v567
    %v569 = vrot.slane %v561, %v568
    %v571 = vunpack.c.l.s4 1934713408
    %v572 = vunpack.c.0.s8 %v571
    %v573 = vlaneseq
    %v574 = vshrl.u32 %v573, 7
    %v575 = vsub.s32 %v572, %v574
    %v576 = vrot.slane %v562, %v575
    %v577 = vcombine.low %v560, %v560
    %v578 = vcombine.high %v560, %v560
    %v580 = vunpack.c.l.s4 1934713408
    %v581 = vunpack.c.0.s8 %v580
    %v582 = vlaneseq
    %v583 = vshrl.u32 %v582, 7
    %v584 = vsub.s32 %v581, %v583
    %v585 = vrot.slane %v577, %v584
    %v587 = vunpack.c.l.s4 1934713408
    %v588 = vunpack.c.0.s8 %v587
    %v589 = vlaneseq
    %v590 = vshrl.u32 %v589, 7
    %v591 = vsub.s32 %v588, %v590
    %v592 = vrot.slane %v578, %v591
    %v593 = vcombine.low %v569, %v569
    %v594 = vcombine.high %v569, %v569
    %v595 = vcombine.low %v576, %v576
    %v596 = vcombine.high %v576, %v576
    %v597 = vcombine.low %v585, %v585
    %v598 = vcombine.high %v585, %v585
    %v599 = vcombine.low %v592, %v592
    %v600 = vcombine.high %v592, %v592
    %602 = vrot.lane.b32.xlu0 %v594, 32
    %v603 = vpop.permute.xlu0 %602
    %606 = vrot.lane.b32.xlu0 %v595, 64
    %v607 = vpop.permute.xlu0 %606
    %610 = vrot.lane.b32.xlu0 %v596, 96
    %v611 = vpop.permute.xlu0 %610
    %614 = vrot.lane.b32.xlu0 %v598, 32
    %v615 = vpop.permute.xlu0 %614
    %618 = vrot.lane.b32.xlu0 %v599, 64
    %v619 = vpop.permute.xlu0 %618
    %622 = vrot.lane.b32.xlu0 %v600, 96
    %v623 = vpop.permute.xlu0 %622
    %v625 = vsel %vm526, %v593, %v603
    %v626 = vsel %vm530, %v625, %v607
    %v627 = vsel %vm533, %v626, %v611
    %v628 = vsel %vm526, %v597, %v615
    %v629 = vsel %vm530, %v628, %v619
    %v630 = vsel %vm533, %v629, %v623
    %vm631 = vcmask 130048
    %v633 = vsel %vm631, %v44, 0
    %635 = vmatprep.subr.bf16.mxu0 0
    %636 = vmatpush1.bf16.msra.mxu0 0
    %637 = vmatprep.subr.bf16.mxu0 0
    %638 = vmatpush1.bf16.msra.mxu0 0
    %639 = vmatprep.subr.bf16.mxu0 0
    %640 = vmatpush1.bf16.msra.mxu0 0
    %641 = vmatprep.subr.bf16.mxu0 0
    %642 = vmatpush1.bf16.msra.mxu0 0
    %643 = vmatprep.subr.bf16.mxu0 0
    %644 = vmatpush1.bf16.msra.mxu0 0
    %645 = vmatprep.subr.bf16.mxu0 0
    %646 = vmatpush1.bf16.msra.mxu0 0
    %647 = vmatprep.subr.bf16.mxu0 0
    %648 = vmatpush1.bf16.msra.mxu0 0
    %649 = vmatprep.subr.bf16.mxu0 %v543
    %650 = vmatpush1.bf16.msra.mxu0 %v535
    %651 = vmatprep.subr.bf16.mxu0 0
    %652 = vmatpush2.bf16.msra.mxu0 0
    %653 = vmatprep.subr.bf16.mxu0 0
    %654 = vmatpush2.bf16.msra.mxu0 0
    %655 = vmatprep.subr.bf16.mxu0 0
    %656 = vmatpush2.bf16.msra.mxu0 0
    %657 = vmatprep.subr.bf16.mxu0 0
    %658 = vmatpush2.bf16.msra.mxu0 0
    %659 = vmatprep.subr.bf16.mxu0 0
    %660 = vmatpush2.bf16.msra.mxu0 0
    %661 = vmatprep.subr.bf16.mxu0 0
    %662 = vmatpush2.bf16.msra.mxu0 0
    %663 = vmatprep.subr.bf16.mxu0 0
    %664 = vmatpush2.bf16.msra.mxu0 0
    %665 = vmatprep.subr.bf16.mxu0 0
    %666 = vmatpush2.bf16.msra.mxu0 0
    %667 = vmatprep.mubr.bf16.mxu0 0
    %668 = vmatmul.mubr.bf16.gmra.mxu0 %v633
    %v669 = vpop.f32.mrf.mxu0
    %v670 = vadd.f32 %v627, %v669
    %v671 = vpop.f32.mrf.mxu0
    %v672 = vadd.f32 %v630, %v671
    %v673 = vpop.f32.mrf.mxu0
    %v674 = vadd.f32 %v627, %v673
    %v675 = vpop.f32.mrf.mxu0
    %v676 = vadd.f32 %v630, %v675
    %677 = vdwg.mxu0
    %680 = vrot.lane.b32.xlu0 %v670, 96
    %v681 = vpop.permute.xlu0 %680
    %682 = vrot.lane.b32.xlu0 %v674, 96
    %v683 = vpop.permute.xlu0 %682
    %686 = vrot.lane.b32.xlu0 %v670, 64
    %v687 = vpop.permute.xlu0 %686
    %688 = vrot.lane.b32.xlu0 %v674, 64
    %v689 = vpop.permute.xlu0 %688
    %692 = vrot.lane.b32.xlu0 %v670, 32
    %v693 = vpop.permute.xlu0 %692
    %694 = vrot.lane.b32.xlu0 %v674, 32
    %v695 = vpop.permute.xlu0 %694
    %700 = vrot.lane.b32.xlu0 %v672, 96
    %v701 = vpop.permute.xlu0 %700
    %702 = vrot.lane.b32.xlu0 %v676, 96
    %v703 = vpop.permute.xlu0 %702
    %706 = vrot.lane.b32.xlu0 %v672, 64
    %v707 = vpop.permute.xlu0 %706
    %708 = vrot.lane.b32.xlu0 %v676, 64
    %v709 = vpop.permute.xlu0 %708
    %712 = vrot.lane.b32.xlu0 %v672, 32
    %v713 = vpop.permute.xlu0 %712
    %714 = vrot.lane.b32.xlu0 %v676, 32
    %v715 = vpop.permute.xlu0 %714
    %v718 = vcombine.low %v670, %v687
    %v719 = vcombine.high %v670, %v687
    %v721 = vunpack.c.l.s4 1983009808
    %v722 = vunpack.c.0.s8 %v721
    %v723 = vlaneseq
    %v724 = vshrl.u32 %v723, 7
    %v725 = vsub.s32 %v722, %v724
    %v726 = vrot.slane %v718, %v725
    %v728 = vunpack.c.l.s4 1983009808
    %v729 = vunpack.c.0.s8 %v728
    %v730 = vlaneseq
    %v731 = vshrl.u32 %v730, 7
    %v732 = vsub.s32 %v729, %v731
    %v733 = vrot.slane %v719, %v732
    %v734 = vcombine.low %v681, %v693
    %v735 = vcombine.high %v681, %v693
    %v737 = vunpack.c.l.s4 1983009808
    %v738 = vunpack.c.0.s8 %v737
    %v739 = vlaneseq
    %v740 = vshrl.u32 %v739, 7
    %v741 = vsub.s32 %v738, %v740
    %v742 = vrot.slane %v734, %v741
    %v744 = vunpack.c.l.s4 1983009808
    %v745 = vunpack.c.0.s8 %v744
    %v746 = vlaneseq
    %v747 = vshrl.u32 %v746, 7
    %v748 = vsub.s32 %v745, %v747
    %v749 = vrot.slane %v735, %v748
    %v750 = vcombine.low %v672, %v707
    %v751 = vcombine.high %v672, %v707
    %v753 = vunpack.c.l.s4 1983009808
    %v754 = vunpack.c.0.s8 %v753
    %v755 = vlaneseq
    %v756 = vshrl.u32 %v755, 7
    %v757 = vsub.s32 %v754, %v756
    %v758 = vrot.slane %v750, %v757
    %v760 = vunpack.c.l.s4 1983009808
    %v761 = vunpack.c.0.s8 %v760
    %v762 = vlaneseq
    %v763 = vshrl.u32 %v762, 7
    %v764 = vsub.s32 %v761, %v763
    %v765 = vrot.slane %v751, %v764
    %v766 = vcombine.low %v701, %v713
    %v767 = vcombine.high %v701, %v713
    %v769 = vunpack.c.l.s4 1983009808
    %v770 = vunpack.c.0.s8 %v769
    %v771 = vlaneseq
    %v772 = vshrl.u32 %v771, 7
    %v773 = vsub.s32 %v770, %v772
    %v774 = vrot.slane %v766, %v773
    %v776 = vunpack.c.l.s4 1983009808
    %v777 = vunpack.c.0.s8 %v776
    %v778 = vlaneseq
    %v779 = vshrl.u32 %v778, 7
    %v780 = vsub.s32 %v777, %v779
    %v781 = vrot.slane %v767, %v780
    %v782 = vcombine.low %v726, %v742
    %v783 = vcombine.high %v726, %v742
    %v785 = vunpack.c.l.s4 1934713408
    %v786 = vunpack.c.0.s8 %v785
    %v787 = vlaneseq
    %v788 = vshrl.u32 %v787, 7
    %v789 = vsub.s32 %v786, %v788
    %v790 = vrot.slane %v782, %v789
    %v792 = vunpack.c.l.s4 1934713408
    %v793 = vunpack.c.0.s8 %v792
    %v794 = vlaneseq
    %v795 = vshrl.u32 %v794, 7
    %v796 = vsub.s32 %v793, %v795
    %v797 = vrot.slane %v783, %v796
    %v798 = vcombine.low %v733, %v749
    %v799 = vcombine.high %v733, %v749
    %v801 = vunpack.c.l.s4 1934713408
    %v802 = vunpack.c.0.s8 %v801
    %v803 = vlaneseq
    %v804 = vshrl.u32 %v803, 7
    %v805 = vsub.s32 %v802, %v804
    %v806 = vrot.slane %v798, %v805
    %v808 = vunpack.c.l.s4 1934713408
    %v809 = vunpack.c.0.s8 %v808
    %v810 = vlaneseq
    %v811 = vshrl.u32 %v810, 7
    %v812 = vsub.s32 %v809, %v811
    %v813 = vrot.slane %v799, %v812
    %v814 = vcombine.low %v758, %v774
    %v815 = vcombine.high %v758, %v774
    %v817 = vunpack.c.l.s4 1934713408
    %v818 = vunpack.c.0.s8 %v817
    %v819 = vlaneseq
    %v820 = vshrl.u32 %v819, 7
    %v821 = vsub.s32 %v818, %v820
    %v822 = vrot.slane %v814, %v821
    %v824 = vunpack.c.l.s4 1934713408
    %v825 = vunpack.c.0.s8 %v824
    %v826 = vlaneseq
    %v827 = vshrl.u32 %v826, 7
    %v828 = vsub.s32 %v825, %v827
    %v829 = vrot.slane %v815, %v828
    %v830 = vcombine.low %v765, %v781
    %v831 = vcombine.high %v765, %v781
    %v833 = vunpack.c.l.s4 1934713408
    %v834 = vunpack.c.0.s8 %v833
    %v835 = vlaneseq
    %v836 = vshrl.u32 %v835, 7
    %v837 = vsub.s32 %v834, %v836
    %v838 = vrot.slane %v830, %v837
    %v840 = vunpack.c.l.s4 1934713408
    %v841 = vunpack.c.0.s8 %v840
    %v842 = vlaneseq
    %v843 = vshrl.u32 %v842, 7
    %v844 = vsub.s32 %v841, %v843
    %v845 = vrot.slane %v831, %v844
    %v846 = vcombine.low %v790, %v822
    %v847 = vcombine.high %v790, %v822
    %v848 = vcombine.low %v797, %v829
    %v849 = vcombine.high %v797, %v829
    %v850 = vcombine.low %v806, %v838
    %v851 = vcombine.high %v806, %v838
    %v852 = vcombine.low %v813, %v845
    %v853 = vcombine.high %v813, %v845
    %v854 = vcombine.low %v674, %v689
    %v855 = vcombine.high %v674, %v689
    %v857 = vunpack.c.l.s4 1983009808
    %v858 = vunpack.c.0.s8 %v857
    %v859 = vlaneseq
    %v860 = vshrl.u32 %v859, 7
    %v861 = vsub.s32 %v858, %v860
    %v862 = vrot.slane %v854, %v861
    %v864 = vunpack.c.l.s4 1983009808
    %v865 = vunpack.c.0.s8 %v864
    %v866 = vlaneseq
    %v867 = vshrl.u32 %v866, 7
    %v868 = vsub.s32 %v865, %v867
    %v869 = vrot.slane %v855, %v868
    %v870 = vcombine.low %v683, %v695
    %v871 = vcombine.high %v683, %v695
    %v873 = vunpack.c.l.s4 1983009808
    %v874 = vunpack.c.0.s8 %v873
    %v875 = vlaneseq
    %v876 = vshrl.u32 %v875, 7
    %v877 = vsub.s32 %v874, %v876
    %v878 = vrot.slane %v870, %v877
    %v880 = vunpack.c.l.s4 1983009808
    %v881 = vunpack.c.0.s8 %v880
    %v882 = vlaneseq
    %v883 = vshrl.u32 %v882, 7
    %v884 = vsub.s32 %v881, %v883
    %v885 = vrot.slane %v871, %v884
    %v886 = vcombine.low %v676, %v709
    %v887 = vcombine.high %v676, %v709
    %v889 = vunpack.c.l.s4 1983009808
    %v890 = vunpack.c.0.s8 %v889
    %v891 = vlaneseq
    %v892 = vshrl.u32 %v891, 7
    %v893 = vsub.s32 %v890, %v892
    %v894 = vrot.slane %v886, %v893
    %v896 = vunpack.c.l.s4 1983009808
    %v897 = vunpack.c.0.s8 %v896
    %v898 = vlaneseq
    %v899 = vshrl.u32 %v898, 7
    %v900 = vsub.s32 %v897, %v899
    %v901 = vrot.slane %v887, %v900
    %v902 = vcombine.low %v703, %v715
    %v903 = vcombine.high %v703, %v715
    %v905 = vunpack.c.l.s4 1983009808
    %v906 = vunpack.c.0.s8 %v905
    %v907 = vlaneseq
    %v908 = vshrl.u32 %v907, 7
    %v909 = vsub.s32 %v906, %v908
    %v910 = vrot.slane %v902, %v909
    %v912 = vunpack.c.l.s4 1983009808
    %v913 = vunpack.c.0.s8 %v912
    %v914 = vlaneseq
    %v915 = vshrl.u32 %v914, 7
    %v916 = vsub.s32 %v913, %v915
    %v917 = vrot.slane %v903, %v916
    %v918 = vcombine.low %v862, %v878
    %v919 = vcombine.high %v862, %v878
    %v921 = vunpack.c.l.s4 1934713408
    %v922 = vunpack.c.0.s8 %v921
    %v923 = vlaneseq
    %v924 = vshrl.u32 %v923, 7
    %v925 = vsub.s32 %v922, %v924
    %v926 = vrot.slane %v918, %v925
    %v928 = vunpack.c.l.s4 1934713408
    %v929 = vunpack.c.0.s8 %v928
    %v930 = vlaneseq
    %v931 = vshrl.u32 %v930, 7
    %v932 = vsub.s32 %v929, %v931
    %v933 = vrot.slane %v919, %v932
    %v934 = vcombine.low %v869, %v885
    %v935 = vcombine.high %v869, %v885
    %v937 = vunpack.c.l.s4 1934713408
    %v938 = vunpack.c.0.s8 %v937
    %v939 = vlaneseq
    %v940 = vshrl.u32 %v939, 7
    %v941 = vsub.s32 %v938, %v940
    %v942 = vrot.slane %v934, %v941
    %v944 = vunpack.c.l.s4 1934713408
    %v945 = vunpack.c.0.s8 %v944
    %v946 = vlaneseq
    %v947 = vshrl.u32 %v946, 7
    %v948 = vsub.s32 %v945, %v947
    %v949 = vrot.slane %v935, %v948
    %v950 = vcombine.low %v894, %v910
    %v951 = vcombine.high %v894, %v910
    %v953 = vunpack.c.l.s4 1934713408
    %v954 = vunpack.c.0.s8 %v953
    %v955 = vlaneseq
    %v956 = vshrl.u32 %v955, 7
    %v957 = vsub.s32 %v954, %v956
    %v958 = vrot.slane %v950, %v957
    %v960 = vunpack.c.l.s4 1934713408
    %v961 = vunpack.c.0.s8 %v960
    %v962 = vlaneseq
    %v963 = vshrl.u32 %v962, 7
    %v964 = vsub.s32 %v961, %v963
    %v965 = vrot.slane %v951, %v964
    %v966 = vcombine.low %v901, %v917
    %v967 = vcombine.high %v901, %v917
    %v969 = vunpack.c.l.s4 1934713408
    %v970 = vunpack.c.0.s8 %v969
    %v971 = vlaneseq
    %v972 = vshrl.u32 %v971, 7
    %v973 = vsub.s32 %v970, %v972
    %v974 = vrot.slane %v966, %v973
    %v976 = vunpack.c.l.s4 1934713408
    %v977 = vunpack.c.0.s8 %v976
    %v978 = vlaneseq
    %v979 = vshrl.u32 %v978, 7
    %v980 = vsub.s32 %v977, %v979
    %v981 = vrot.slane %v967, %v980
    %v982 = vcombine.low %v926, %v958
    %v983 = vcombine.high %v926, %v958
    %v984 = vcombine.low %v933, %v965
    %v985 = vcombine.high %v933, %v965
    %v986 = vcombine.low %v942, %v974
    %v987 = vcombine.high %v942, %v974
    %v988 = vcombine.low %v949, %v981
    %v989 = vcombine.high %v949, %v981
    %s990 = scalar_lea.vmem %s2, 128
    %v991 = vld [vmem:[%s990] sm:$0xff]
    %v992 = vld [vmem:[%s990 + $0x8] sm:$0xff]
    %v993 = vld [vmem:[%s990 + $0x10] sm:$0xff]
    %v994 = vld [vmem:[%s990 + $0x18] sm:$0xff]
    %v995 = vld [vmem:[%s990 + $0x20] sm:$0xff]
    %v996 = vld [vmem:[%s990 + $0x28] sm:$0xff]
    %v997 = vld [vmem:[%s990 + $0x30] sm:$0xff]
    %v998 = vld [vmem:[%s990 + $0x38] sm:$0xff]
    %v999 = vld [vmem:[%s990 + $0x40] sm:$0xff]
    %v1000 = vld [vmem:[%s990 + $0x48] sm:$0xff]
    %v1001 = vld [vmem:[%s990 + $0x50] sm:$0xff]
    %v1002 = vld [vmem:[%s990 + $0x58] sm:$0xff]
    %v1003 = vld [vmem:[%s990 + $0x60] sm:$0xff]
    %v1004 = vld [vmem:[%s990 + $0x68] sm:$0xff]
    %v1005 = vld [vmem:[%s990 + $0x70] sm:$0xff]
    %v1006 = vld [vmem:[%s990 + $0x78] sm:$0xff]
    %v1007 = vcombine.low %v991, %v995
    %v1008 = vcombine.high %v991, %v995
    %v1010 = vunpack.c.l.s4 1983009808
    %v1011 = vunpack.c.0.s8 %v1010
    %v1012 = vlaneseq
    %v1013 = vshrl.u32 %v1012, 7
    %v1014 = vsub.s32 %v1011, %v1013
    %v1015 = vrot.slane %v1007, %v1014
    %v1017 = vunpack.c.l.s4 1983009808
    %v1018 = vunpack.c.0.s8 %v1017
    %v1019 = vlaneseq
    %v1020 = vshrl.u32 %v1019, 7
    %v1021 = vsub.s32 %v1018, %v1020
    %v1022 = vrot.slane %v1008, %v1021
    %v1023 = vcombine.low %v993, %v997
    %v1024 = vcombine.high %v993, %v997
    %v1026 = vunpack.c.l.s4 1983009808
    %v1027 = vunpack.c.0.s8 %v1026
    %v1028 = vlaneseq
    %v1029 = vshrl.u32 %v1028, 7
    %v1030 = vsub.s32 %v1027, %v1029
    %v1031 = vrot.slane %v1023, %v1030
    %v1033 = vunpack.c.l.s4 1983009808
    %v1034 = vunpack.c.0.s8 %v1033
    %v1035 = vlaneseq
    %v1036 = vshrl.u32 %v1035, 7
    %v1037 = vsub.s32 %v1034, %v1036
    %v1038 = vrot.slane %v1024, %v1037
    %v1039 = vcombine.low %v999, %v1003
    %v1040 = vcombine.high %v999, %v1003
    %v1042 = vunpack.c.l.s4 1983009808
    %v1043 = vunpack.c.0.s8 %v1042
    %v1044 = vlaneseq
    %v1045 = vshrl.u32 %v1044, 7
    %v1046 = vsub.s32 %v1043, %v1045
    %v1047 = vrot.slane %v1039, %v1046
    %v1049 = vunpack.c.l.s4 1983009808
    %v1050 = vunpack.c.0.s8 %v1049
    %v1051 = vlaneseq
    %v1052 = vshrl.u32 %v1051, 7
    %v1053 = vsub.s32 %v1050, %v1052
    %v1054 = vrot.slane %v1040, %v1053
    %v1055 = vcombine.low %v1001, %v1005
    %v1056 = vcombine.high %v1001, %v1005
    %v1058 = vunpack.c.l.s4 1983009808
    %v1059 = vunpack.c.0.s8 %v1058
    %v1060 = vlaneseq
    %v1061 = vshrl.u32 %v1060, 7
    %v1062 = vsub.s32 %v1059, %v1061
    %v1063 = vrot.slane %v1055, %v1062
    %v1065 = vunpack.c.l.s4 1983009808
    %v1066 = vunpack.c.0.s8 %v1065
    %v1067 = vlaneseq
    %v1068 = vshrl.u32 %v1067, 7
    %v1069 = vsub.s32 %v1066, %v1068
    %v1070 = vrot.slane %v1056, %v1069
    %v1071 = vcombine.low %v1015, %v1031
    %v1072 = vcombine.high %v1015, %v1031
    %v1074 = vunpack.c.l.s4 1934713408
    %v1075 = vunpack.c.0.s8 %v1074
    %v1076 = vlaneseq
    %v1077 = vshrl.u32 %v1076, 7
    %v1078 = vsub.s32 %v1075, %v1077
    %v1079 = vrot.slane %v1071, %v1078
    %v1081 = vunpack.c.l.s4 1934713408
    %v1082 = vunpack.c.0.s8 %v1081
    %v1083 = vlaneseq
    %v1084 = vshrl.u32 %v1083, 7
    %v1085 = vsub.s32 %v1082, %v1084
    %v1086 = vrot.slane %v1072, %v1085
    %v1087 = vcombine.low %v1022, %v1038
    %v1088 = vcombine.high %v1022, %v1038
    %v1090 = vunpack.c.l.s4 1934713408
    %v1091 = vunpack.c.0.s8 %v1090
    %v1092 = vlaneseq
    %v1093 = vshrl.u32 %v1092, 7
    %v1094 = vsub.s32 %v1091, %v1093
    %v1095 = vrot.slane %v1087, %v1094
    %v1097 = vunpack.c.l.s4 1934713408
    %v1098 = vunpack.c.0.s8 %v1097
    %v1099 = vlaneseq
    %v1100 = vshrl.u32 %v1099, 7
    %v1101 = vsub.s32 %v1098, %v1100
    %v1102 = vrot.slane %v1088, %v1101
    %v1103 = vcombine.low %v1047, %v1063
    %v1104 = vcombine.high %v1047, %v1063
    %v1106 = vunpack.c.l.s4 1934713408
    %v1107 = vunpack.c.0.s8 %v1106
    %v1108 = vlaneseq
    %v1109 = vshrl.u32 %v1108, 7
    %v1110 = vsub.s32 %v1107, %v1109
    %v1111 = vrot.slane %v1103, %v1110
    %v1113 = vunpack.c.l.s4 1934713408
    %v1114 = vunpack.c.0.s8 %v1113
    %v1115 = vlaneseq
    %v1116 = vshrl.u32 %v1115, 7
    %v1117 = vsub.s32 %v1114, %v1116
    %v1118 = vrot.slane %v1104, %v1117
    %v1119 = vcombine.low %v1054, %v1070
    %v1120 = vcombine.high %v1054, %v1070
    %v1122 = vunpack.c.l.s4 1934713408
    %v1123 = vunpack.c.0.s8 %v1122
    %v1124 = vlaneseq
    %v1125 = vshrl.u32 %v1124, 7
    %v1126 = vsub.s32 %v1123, %v1125
    %v1127 = vrot.slane %v1119, %v1126
    %v1129 = vunpack.c.l.s4 1934713408
    %v1130 = vunpack.c.0.s8 %v1129
    %v1131 = vlaneseq
    %v1132 = vshrl.u32 %v1131, 7
    %v1133 = vsub.s32 %v1130, %v1132
    %v1134 = vrot.slane %v1120, %v1133
    %v1135 = vcombine.low %v1079, %v1111
    %v1136 = vcombine.high %v1079, %v1111
    %v1137 = vcombine.low %v1086, %v1118
    %v1138 = vcombine.high %v1086, %v1118
    %v1139 = vcombine.low %v1095, %v1127
    %v1140 = vcombine.high %v1095, %v1127
    %v1141 = vcombine.low %v1102, %v1134
    %v1142 = vcombine.high %v1102, %v1134
    %v1143 = vcombine.low %v992, %v996
    %v1144 = vcombine.high %v992, %v996
    %v1146 = vunpack.c.l.s4 1983009808
    %v1147 = vunpack.c.0.s8 %v1146
    %v1148 = vlaneseq
    %v1149 = vshrl.u32 %v1148, 7
    %v1150 = vsub.s32 %v1147, %v1149
    %v1151 = vrot.slane %v1143, %v1150
    %v1153 = vunpack.c.l.s4 1983009808
    %v1154 = vunpack.c.0.s8 %v1153
    %v1155 = vlaneseq
    %v1156 = vshrl.u32 %v1155, 7
    %v1157 = vsub.s32 %v1154, %v1156
    %v1158 = vrot.slane %v1144, %v1157
    %v1159 = vcombine.low %v994, %v998
    %v1160 = vcombine.high %v994, %v998
    %v1162 = vunpack.c.l.s4 1983009808
    %v1163 = vunpack.c.0.s8 %v1162
    %v1164 = vlaneseq
    %v1165 = vshrl.u32 %v1164, 7
    %v1166 = vsub.s32 %v1163, %v1165
    %v1167 = vrot.slane %v1159, %v1166
    %v1169 = vunpack.c.l.s4 1983009808
    %v1170 = vunpack.c.0.s8 %v1169
    %v1171 = vlaneseq
    %v1172 = vshrl.u32 %v1171, 7
    %v1173 = vsub.s32 %v1170, %v1172
    %v1174 = vrot.slane %v1160, %v1173
    %v1175 = vcombine.low %v1000, %v1004
    %v1176 = vcombine.high %v1000, %v1004
    %v1178 = vunpack.c.l.s4 1983009808
    %v1179 = vunpack.c.0.s8 %v1178
    %v1180 = vlaneseq
    %v1181 = vshrl.u32 %v1180, 7
    %v1182 = vsub.s32 %v1179, %v1181
    %v1183 = vrot.slane %v1175, %v1182
    %v1185 = vunpack.c.l.s4 1983009808
    %v1186 = vunpack.c.0.s8 %v1185
    %v1187 = vlaneseq
    %v1188 = vshrl.u32 %v1187, 7
    %v1189 = vsub.s32 %v1186, %v1188
    %v1190 = vrot.slane %v1176, %v1189
    %v1191 = vcombine.low %v1002, %v1006
    %v1192 = vcombine.high %v1002, %v1006
    %v1194 = vunpack.c.l.s4 1983009808
    %v1195 = vunpack.c.0.s8 %v1194
    %v1196 = vlaneseq
    %v1197 = vshrl.u32 %v1196, 7
    %v1198 = vsub.s32 %v1195, %v1197
    %v1199 = vrot.slane %v1191, %v1198
    %v1201 = vunpack.c.l.s4 1983009808
    %v1202 = vunpack.c.0.s8 %v1201
    %v1203 = vlaneseq
    %v1204 = vshrl.u32 %v1203, 7
    %v1205 = vsub.s32 %v1202, %v1204
    %v1206 = vrot.slane %v1192, %v1205
    %v1207 = vcombine.low %v1151, %v1167
    %v1208 = vcombine.high %v1151, %v1167
    %v1210 = vunpack.c.l.s4 1934713408
    %v1211 = vunpack.c.0.s8 %v1210
    %v1212 = vlaneseq
    %v1213 = vshrl.u32 %v1212, 7
    %v1214 = vsub.s32 %v1211, %v1213
    %v1215 = vrot.slane %v1207, %v1214
    %v1217 = vunpack.c.l.s4 1934713408
    %v1218 = vunpack.c.0.s8 %v1217
    %v1219 = vlaneseq
    %v1220 = vshrl.u32 %v1219, 7
    %v1221 = vsub.s32 %v1218, %v1220
    %v1222 = vrot.slane %v1208, %v1221
    %v1223 = vcombine.low %v1158, %v1174
    %v1224 = vcombine.high %v1158, %v1174
    %v1226 = vunpack.c.l.s4 1934713408
    %v1227 = vunpack.c.0.s8 %v1226
    %v1228 = vlaneseq
    %v1229 = vshrl.u32 %v1228, 7
    %v1230 = vsub.s32 %v1227, %v1229
    %v1231 = vrot.slane %v1223, %v1230
    %v1233 = vunpack.c.l.s4 1934713408
    %v1234 = vunpack.c.0.s8 %v1233
    %v1235 = vlaneseq
    %v1236 = vshrl.u32 %v1235, 7
    %v1237 = vsub.s32 %v1234, %v1236
    %v1238 = vrot.slane %v1224, %v1237
    %v1239 = vcombine.low %v1183, %v1199
    %v1240 = vcombine.high %v1183, %v1199
    %v1242 = vunpack.c.l.s4 1934713408
    %v1243 = vunpack.c.0.s8 %v1242
    %v1244 = vlaneseq
    %v1245 = vshrl.u32 %v1244, 7
    %v1246 = vsub.s32 %v1243, %v1245
    %v1247 = vrot.slane %v1239, %v1246
    %v1249 = vunpack.c.l.s4 1934713408
    %v1250 = vunpack.c.0.s8 %v1249
    %v1251 = vlaneseq
    %v1252 = vshrl.u32 %v1251, 7
    %v1253 = vsub.s32 %v1250, %v1252
    %v1254 = vrot.slane %v1240, %v1253
    %v1255 = vcombine.low %v1190, %v1206
    %v1256 = vcombine.high %v1190, %v1206
    %v1258 = vunpack.c.l.s4 1934713408
    %v1259 = vunpack.c.0.s8 %v1258
    %v1260 = vlaneseq
    %v1261 = vshrl.u32 %v1260, 7
    %v1262 = vsub.s32 %v1259, %v1261
    %v1263 = vrot.slane %v1255, %v1262
    %v1265 = vunpack.c.l.s4 1934713408
    %v1266 = vunpack.c.0.s8 %v1265
    %v1267 = vlaneseq
    %v1268 = vshrl.u32 %v1267, 7
    %v1269 = vsub.s32 %v1266, %v1268
    %v1270 = vrot.slane %v1256, %v1269
    %v1271 = vcombine.low %v1215, %v1247
    %v1272 = vcombine.high %v1215, %v1247
    %v1273 = vcombine.low %v1222, %v1254
    %v1274 = vcombine.high %v1222, %v1254
    %v1275 = vcombine.low %v1231, %v1263
    %v1276 = vcombine.high %v1231, %v1263
    %v1277 = vcombine.low %v1238, %v1270
    %v1278 = vcombine.high %v1238, %v1270
    %v1279 = vpack.c.bf16 %v1135, %v1135
    %v1280 = vpack.c.bf16 %v1136, %v1136
    %v1281 = vpack.c.bf16 %v1137, %v1137
    %v1282 = vpack.c.bf16 %v1138, %v1138
    %v1283 = vpack.c.bf16 %v1139, %v1139
    %v1284 = vpack.c.bf16 %v1140, %v1140
    %v1285 = vpack.c.bf16 %v1141, %v1141
    %v1286 = vpack.c.bf16 %v1142, %v1142
    %v1287 = vpack.c.bf16 %v1271, %v1271
    %v1288 = vpack.c.bf16 %v1272, %v1272
    %v1289 = vpack.c.bf16 %v1273, %v1273
    %v1290 = vpack.c.bf16 %v1274, %v1274
    %v1291 = vpack.c.bf16 %v1275, %v1275
    %v1292 = vpack.c.bf16 %v1276, %v1276
    %v1293 = vpack.c.bf16 %v1277, %v1277
    %v1294 = vpack.c.bf16 %v1278, %v1278
    %v1295 = vcombine.low %v1279, %v1283
    %v1297 = vunpack.c.l.s4 1983009808
    %v1298 = vunpack.c.0.s8 %v1297
    %v1299 = vlaneseq
    %v1300 = vshrl.u32 %v1299, 7
    %v1301 = vsub.s32 %v1298, %v1300
    %v1302 = vrot.slane %v1295, %v1301
    %v1303 = vcombine.low %v1281, %v1285
    %v1305 = vunpack.c.l.s4 1983009808
    %v1306 = vunpack.c.0.s8 %v1305
    %v1307 = vlaneseq
    %v1308 = vshrl.u32 %v1307, 7
    %v1309 = vsub.s32 %v1306, %v1308
    %v1310 = vrot.slane %v1303, %v1309
    %v1311 = vcombine.low %v1287, %v1291
    %v1313 = vunpack.c.l.s4 1983009808
    %v1314 = vunpack.c.0.s8 %v1313
    %v1315 = vlaneseq
    %v1316 = vshrl.u32 %v1315, 7
    %v1317 = vsub.s32 %v1314, %v1316
    %v1318 = vrot.slane %v1311, %v1317
    %v1319 = vcombine.low %v1289, %v1293
    %v1321 = vunpack.c.l.s4 1983009808
    %v1322 = vunpack.c.0.s8 %v1321
    %v1323 = vlaneseq
    %v1324 = vshrl.u32 %v1323, 7
    %v1325 = vsub.s32 %v1322, %v1324
    %v1326 = vrot.slane %v1319, %v1325
    %v1327 = vcombine.low %v1302, %v1310
    %v1328 = vcombine.high %v1302, %v1310
    %v1330 = vunpack.c.l.s4 1934713408
    %v1331 = vunpack.c.0.s8 %v1330
    %v1332 = vlaneseq
    %v1333 = vshrl.u32 %v1332, 7
    %v1334 = vsub.s32 %v1331, %v1333
    %v1335 = vrot.slane %v1327, %v1334
    %v1337 = vunpack.c.l.s4 1934713408
    %v1338 = vunpack.c.0.s8 %v1337
    %v1339 = vlaneseq
    %v1340 = vshrl.u32 %v1339, 7
    %v1341 = vsub.s32 %v1338, %v1340
    %v1342 = vrot.slane %v1328, %v1341
    %v1343 = vcombine.low %v1318, %v1326
    %v1344 = vcombine.high %v1318, %v1326
    %v1346 = vunpack.c.l.s4 1934713408
    %v1347 = vunpack.c.0.s8 %v1346
    %v1348 = vlaneseq
    %v1349 = vshrl.u32 %v1348, 7
    %v1350 = vsub.s32 %v1347, %v1349
    %v1351 = vrot.slane %v1343, %v1350
    %v1353 = vunpack.c.l.s4 1934713408
    %v1354 = vunpack.c.0.s8 %v1353
    %v1355 = vlaneseq
    %v1356 = vshrl.u32 %v1355, 7
    %v1357 = vsub.s32 %v1354, %v1356
    %v1358 = vrot.slane %v1344, %v1357
    %v1359 = vcombine.low %v1335, %v1351
    %v1360 = vcombine.high %v1335, %v1351
    %v1361 = vcombine.low %v1342, %v1358
    %v1362 = vcombine.high %v1342, %v1358
    %v1363 = vcombine.low %v1280, %v1284
    %v1365 = vunpack.c.l.s4 1983009808
    %v1366 = vunpack.c.0.s8 %v1365
    %v1367 = vlaneseq
    %v1368 = vshrl.u32 %v1367, 7
    %v1369 = vsub.s32 %v1366, %v1368
    %v1370 = vrot.slane %v1363, %v1369
    %v1371 = vcombine.low %v1282, %v1286
    %v1373 = vunpack.c.l.s4 1983009808
    %v1374 = vunpack.c.0.s8 %v1373
    %v1375 = vlaneseq
    %v1376 = vshrl.u32 %v1375, 7
    %v1377 = vsub.s32 %v1374, %v1376
    %v1378 = vrot.slane %v1371, %v1377
    %v1379 = vcombine.low %v1288, %v1292
    %v1381 = vunpack.c.l.s4 1983009808
    %v1382 = vunpack.c.0.s8 %v1381
    %v1383 = vlaneseq
    %v1384 = vshrl.u32 %v1383, 7
    %v1385 = vsub.s32 %v1382, %v1384
    %v1386 = vrot.slane %v1379, %v1385
    %v1387 = vcombine.low %v1290, %v1294
    %v1389 = vunpack.c.l.s4 1983009808
    %v1390 = vunpack.c.0.s8 %v1389
    %v1391 = vlaneseq
    %v1392 = vshrl.u32 %v1391, 7
    %v1393 = vsub.s32 %v1390, %v1392
    %v1394 = vrot.slane %v1387, %v1393
    %v1395 = vcombine.low %v1370, %v1378
    %v1396 = vcombine.high %v1370, %v1378
    %v1398 = vunpack.c.l.s4 1934713408
    %v1399 = vunpack.c.0.s8 %v1398
    %v1400 = vlaneseq
    %v1401 = vshrl.u32 %v1400, 7
    %v1402 = vsub.s32 %v1399, %v1401
    %v1403 = vrot.slane %v1395, %v1402
    %v1405 = vunpack.c.l.s4 1934713408
    %v1406 = vunpack.c.0.s8 %v1405
    %v1407 = vlaneseq
    %v1408 = vshrl.u32 %v1407, 7
    %v1409 = vsub.s32 %v1406, %v1408
    %v1410 = vrot.slane %v1396, %v1409
    %v1411 = vcombine.low %v1386, %v1394
    %v1412 = vcombine.high %v1386, %v1394
    %v1414 = vunpack.c.l.s4 1934713408
    %v1415 = vunpack.c.0.s8 %v1414
    %v1416 = vlaneseq
    %v1417 = vshrl.u32 %v1416, 7
    %v1418 = vsub.s32 %v1415, %v1417
    %v1419 = vrot.slane %v1411, %v1418
    %v1421 = vunpack.c.l.s4 1934713408
    %v1422 = vunpack.c.0.s8 %v1421
    %v1423 = vlaneseq
    %v1424 = vshrl.u32 %v1423, 7
    %v1425 = vsub.s32 %v1422, %v1424
    %v1426 = vrot.slane %v1412, %v1425
    %v1427 = vcombine.low %v1403, %v1419
    %v1428 = vcombine.high %v1403, %v1419
    %v1429 = vcombine.low %v1410, %v1426
    %v1430 = vcombine.high %v1410, %v1426
    %v1433 = vpack.i.b16 %v1427, %v1359
    %v1434 = vshrl.u32 %v1359, 16
    %v1435 = vshrl.u32 %v1427, 16
    %v1436 = vpack.i.b16 %v1435, %v1434
    %v1439 = vpack.i.b16 %v1428, %v1360
    %v1440 = vshrl.u32 %v1360, 16
    %v1441 = vshrl.u32 %v1428, 16
    %v1442 = vpack.i.b16 %v1441, %v1440
    %v1445 = vpack.i.b16 %v1429, %v1361
    %v1446 = vshrl.u32 %v1361, 16
    %v1447 = vshrl.u32 %v1429, 16
    %v1448 = vpack.i.b16 %v1447, %v1446
    %v1451 = vpack.i.b16 %v1430, %v1362
    %v1452 = vshrl.u32 %v1362, 16
    %v1453 = vshrl.u32 %v1430, 16
    %v1454 = vpack.i.b16 %v1453, %v1452
    %1455 = vrot.lane.b32.xlu0 %v1436, 32
    %v1456 = vpop.permute.xlu0 %1455
    %1457 = vrot.lane.b32.xlu0 %v1439, 64
    %v1458 = vpop.permute.xlu0 %1457
    %1459 = vrot.lane.b32.xlu0 %v1442, 96
    %v1460 = vpop.permute.xlu0 %1459
    %1461 = vrot.lane.b32.xlu0 %v1448, 32
    %v1462 = vpop.permute.xlu0 %1461
    %1463 = vrot.lane.b32.xlu0 %v1451, 64
    %v1464 = vpop.permute.xlu0 %1463
    %1465 = vrot.lane.b32.xlu0 %v1454, 96
    %v1466 = vpop.permute.xlu0 %1465
    %v1469 = vsel %vm526, %v1433, %v1456
    %v1471 = vsel %vm530, %v1469, %v1458
    %v1473 = vsel %vm533, %v1471, %v1460
    %v1477 = vsel %vm526, %v1445, %v1462
    %v1479 = vsel %vm530, %v1477, %v1464
    %v1481 = vsel %vm533, %v1479, %v1466
    %v1484 = vsel %vm631, %v45, 0
    %1486 = vmatprep.subr.bf16.mxu0 0
    %1487 = vmatpush1.bf16.msra.mxu0 0
    %1488 = vmatprep.subr.bf16.mxu0 0
    %1489 = vmatpush1.bf16.msra.mxu0 0
    %1490 = vmatprep.subr.bf16.mxu0 0
    %1491 = vmatpush1.bf16.msra.mxu0 0
    %1492 = vmatprep.subr.bf16.mxu0 0
    %1493 = vmatpush1.bf16.msra.mxu0 0
    %1494 = vmatprep.subr.bf16.mxu0 0
    %1495 = vmatpush1.bf16.msra.mxu0 0
    %1496 = vmatprep.subr.bf16.mxu0 0
    %1497 = vmatpush1.bf16.msra.mxu0 0
    %1498 = vmatprep.subr.bf16.mxu0 0
    %1499 = vmatpush1.bf16.msra.mxu0 0
    %1500 = vmatprep.subr.bf16.mxu0 %v1481
    %1501 = vmatpush1.bf16.msra.mxu0 %v1473
    %1502 = vmatprep.subr.bf16.mxu0 0
    %1503 = vmatpush2.bf16.msra.mxu0 0
    %1504 = vmatprep.subr.bf16.mxu0 0
    %1505 = vmatpush2.bf16.msra.mxu0 0
    %1506 = vmatprep.subr.bf16.mxu0 0
    %1507 = vmatpush2.bf16.msra.mxu0 0
    %1508 = vmatprep.subr.bf16.mxu0 0
    %1509 = vmatpush2.bf16.msra.mxu0 0
    %1510 = vmatprep.subr.bf16.mxu0 0
    %1511 = vmatpush2.bf16.msra.mxu0 0
    %1512 = vmatprep.subr.bf16.mxu0 0
    %1513 = vmatpush2.bf16.msra.mxu0 0
    %1514 = vmatprep.subr.bf16.mxu0 0
    %1515 = vmatpush2.bf16.msra.mxu0 0
    %1516 = vmatprep.subr.bf16.mxu0 0
    %1517 = vmatpush2.bf16.msra.mxu0 0
    %1518 = vmatprep.mubr.bf16.mxu0 0
    %1519 = vmatmul.mubr.bf16.gmra.mxu0 %v1484
    %v1520 = vpop.f32.mrf.mxu0
    %v1521 = vadd.f32 %v627, %v1520
    %v1522 = vpop.f32.mrf.mxu0
    %v1523 = vadd.f32 %v630, %v1522
    %v1524 = vpop.f32.mrf.mxu0
    %v1525 = vadd.f32 %v627, %v1524
    %v1526 = vpop.f32.mrf.mxu0
    %v1527 = vadd.f32 %v630, %v1526
    %1528 = vdwg.mxu0
    %1531 = vrot.lane.b32.xlu0 %v1521, 96
    %v1532 = vpop.permute.xlu0 %1531
    %1533 = vrot.lane.b32.xlu0 %v1525, 96
    %v1534 = vpop.permute.xlu0 %1533
    %1537 = vrot.lane.b32.xlu0 %v1521, 64
    %v1538 = vpop.permute.xlu0 %1537
    %1539 = vrot.lane.b32.xlu0 %v1525, 64
    %v1540 = vpop.permute.xlu0 %1539
    %1543 = vrot.lane.b32.xlu0 %v1521, 32
    %v1544 = vpop.permute.xlu0 %1543
    %1545 = vrot.lane.b32.xlu0 %v1525, 32
    %v1546 = vpop.permute.xlu0 %1545
    %1551 = vrot.lane.b32.xlu0 %v1523, 96
    %v1552 = vpop.permute.xlu0 %1551
    %1553 = vrot.lane.b32.xlu0 %v1527, 96
    %v1554 = vpop.permute.xlu0 %1553
    %1557 = vrot.lane.b32.xlu0 %v1523, 64
    %v1558 = vpop.permute.xlu0 %1557
    %1559 = vrot.lane.b32.xlu0 %v1527, 64
    %v1560 = vpop.permute.xlu0 %1559
    %1563 = vrot.lane.b32.xlu0 %v1523, 32
    %v1564 = vpop.permute.xlu0 %1563
    %1565 = vrot.lane.b32.xlu0 %v1527, 32
    %v1566 = vpop.permute.xlu0 %1565
    %v1569 = vcombine.low %v1521, %v1538
    %v1570 = vcombine.high %v1521, %v1538
    %v1572 = vunpack.c.l.s4 1983009808
    %v1573 = vunpack.c.0.s8 %v1572
    %v1574 = vlaneseq
    %v1575 = vshrl.u32 %v1574, 7
    %v1576 = vsub.s32 %v1573, %v1575
    %v1577 = vrot.slane %v1569, %v1576
    %v1579 = vunpack.c.l.s4 1983009808
    %v1580 = vunpack.c.0.s8 %v1579
    %v1581 = vlaneseq
    %v1582 = vshrl.u32 %v1581, 7
    %v1583 = vsub.s32 %v1580, %v1582
    %v1584 = vrot.slane %v1570, %v1583
    %v1585 = vcombine.low %v1532, %v1544
    %v1586 = vcombine.high %v1532, %v1544
    %v1588 = vunpack.c.l.s4 1983009808
    %v1589 = vunpack.c.0.s8 %v1588
    %v1590 = vlaneseq
    %v1591 = vshrl.u32 %v1590, 7
    %v1592 = vsub.s32 %v1589, %v1591
    %v1593 = vrot.slane %v1585, %v1592
    %v1595 = vunpack.c.l.s4 1983009808
    %v1596 = vunpack.c.0.s8 %v1595
    %v1597 = vlaneseq
    %v1598 = vshrl.u32 %v1597, 7
    %v1599 = vsub.s32 %v1596, %v1598
    %v1600 = vrot.slane %v1586, %v1599
    %v1601 = vcombine.low %v1523, %v1558
    %v1602 = vcombine.high %v1523, %v1558
    %v1604 = vunpack.c.l.s4 1983009808
    %v1605 = vunpack.c.0.s8 %v1604
    %v1606 = vlaneseq
    %v1607 = vshrl.u32 %v1606, 7
    %v1608 = vsub.s32 %v1605, %v1607
    %v1609 = vrot.slane %v1601, %v1608
    %v1611 = vunpack.c.l.s4 1983009808
    %v1612 = vunpack.c.0.s8 %v1611
    %v1613 = vlaneseq
    %v1614 = vshrl.u32 %v1613, 7
    %v1615 = vsub.s32 %v1612, %v1614
    %v1616 = vrot.slane %v1602, %v1615
    %v1617 = vcombine.low %v1552, %v1564
    %v1618 = vcombine.high %v1552, %v1564
    %v1620 = vunpack.c.l.s4 1983009808
    %v1621 = vunpack.c.0.s8 %v1620
    %v1622 = vlaneseq
    %v1623 = vshrl.u32 %v1622, 7
    %v1624 = vsub.s32 %v1621, %v1623
    %v1625 = vrot.slane %v1617, %v1624
    %v1627 = vunpack.c.l.s4 1983009808
    %v1628 = vunpack.c.0.s8 %v1627
    %v1629 = vlaneseq
    %v1630 = vshrl.u32 %v1629, 7
    %v1631 = vsub.s32 %v1628, %v1630
    %v1632 = vrot.slane %v1618, %v1631
    %v1633 = vcombine.low %v1577, %v1593
    %v1634 = vcombine.high %v1577, %v1593
    %v1636 = vunpack.c.l.s4 1934713408
    %v1637 = vunpack.c.0.s8 %v1636
    %v1638 = vlaneseq
    %v1639 = vshrl.u32 %v1638, 7
    %v1640 = vsub.s32 %v1637, %v1639
    %v1641 = vrot.slane %v1633, %v1640
    %v1643 = vunpack.c.l.s4 1934713408
    %v1644 = vunpack.c.0.s8 %v1643
    %v1645 = vlaneseq
    %v1646 = vshrl.u32 %v1645, 7
    %v1647 = vsub.s32 %v1644, %v1646
    %v1648 = vrot.slane %v1634, %v1647
    %v1649 = vcombine.low %v1584, %v1600
    %v1650 = vcombine.high %v1584, %v1600
    %v1652 = vunpack.c.l.s4 1934713408
    %v1653 = vunpack.c.0.s8 %v1652
    %v1654 = vlaneseq
    %v1655 = vshrl.u32 %v1654, 7
    %v1656 = vsub.s32 %v1653, %v1655
    %v1657 = vrot.slane %v1649, %v1656
    %v1659 = vunpack.c.l.s4 1934713408
    %v1660 = vunpack.c.0.s8 %v1659
    %v1661 = vlaneseq
    %v1662 = vshrl.u32 %v1661, 7
    %v1663 = vsub.s32 %v1660, %v1662
    %v1664 = vrot.slane %v1650, %v1663
    %v1665 = vcombine.low %v1609, %v1625
    %v1666 = vcombine.high %v1609, %v1625
    %v1668 = vunpack.c.l.s4 1934713408
    %v1669 = vunpack.c.0.s8 %v1668
    %v1670 = vlaneseq
    %v1671 = vshrl.u32 %v1670, 7
    %v1672 = vsub.s32 %v1669, %v1671
    %v1673 = vrot.slane %v1665, %v1672
    %v1675 = vunpack.c.l.s4 1934713408
    %v1676 = vunpack.c.0.s8 %v1675
    %v1677 = vlaneseq
    %v1678 = vshrl.u32 %v1677, 7
    %v1679 = vsub.s32 %v1676, %v1678
    %v1680 = vrot.slane %v1666, %v1679
    %v1681 = vcombine.low %v1616, %v1632
    %v1682 = vcombine.high %v1616, %v1632
    %v1684 = vunpack.c.l.s4 1934713408
    %v1685 = vunpack.c.0.s8 %v1684
    %v1686 = vlaneseq
    %v1687 = vshrl.u32 %v1686, 7
    %v1688 = vsub.s32 %v1685, %v1687
    %v1689 = vrot.slane %v1681, %v1688
    %v1691 = vunpack.c.l.s4 1934713408
    %v1692 = vunpack.c.0.s8 %v1691
    %v1693 = vlaneseq
    %v1694 = vshrl.u32 %v1693, 7
    %v1695 = vsub.s32 %v1692, %v1694
    %v1696 = vrot.slane %v1682, %v1695
    %v1697 = vcombine.low %v1641, %v1673
    %v1698 = vcombine.high %v1641, %v1673
    %v1699 = vcombine.low %v1648, %v1680
    %v1700 = vcombine.high %v1648, %v1680
    %v1701 = vcombine.low %v1657, %v1689
    %v1702 = vcombine.high %v1657, %v1689
    %v1703 = vcombine.low %v1664, %v1696
    %v1704 = vcombine.high %v1664, %v1696
    %v1705 = vcombine.low %v1525, %v1540
    %v1706 = vcombine.high %v1525, %v1540
    %v1708 = vunpack.c.l.s4 1983009808
    %v1709 = vunpack.c.0.s8 %v1708
    %v1710 = vlaneseq
    %v1711 = vshrl.u32 %v1710, 7
    %v1712 = vsub.s32 %v1709, %v1711
    %v1713 = vrot.slane %v1705, %v1712
    %v1715 = vunpack.c.l.s4 1983009808
    %v1716 = vunpack.c.0.s8 %v1715
    %v1717 = vlaneseq
    %v1718 = vshrl.u32 %v1717, 7
    %v1719 = vsub.s32 %v1716, %v1718
    %v1720 = vrot.slane %v1706, %v1719
    %v1721 = vcombine.low %v1534, %v1546
    %v1722 = vcombine.high %v1534, %v1546
    %v1724 = vunpack.c.l.s4 1983009808
    %v1725 = vunpack.c.0.s8 %v1724
    %v1726 = vlaneseq
    %v1727 = vshrl.u32 %v1726, 7
    %v1728 = vsub.s32 %v1725, %v1727
    %v1729 = vrot.slane %v1721, %v1728
    %v1731 = vunpack.c.l.s4 1983009808
    %v1732 = vunpack.c.0.s8 %v1731
    %v1733 = vlaneseq
    %v1734 = vshrl.u32 %v1733, 7
    %v1735 = vsub.s32 %v1732, %v1734
    %v1736 = vrot.slane %v1722, %v1735
    %v1737 = vcombine.low %v1527, %v1560
    %v1738 = vcombine.high %v1527, %v1560
    %v1740 = vunpack.c.l.s4 1983009808
    %v1741 = vunpack.c.0.s8 %v1740
    %v1742 = vlaneseq
    %v1743 = vshrl.u32 %v1742, 7
    %v1744 = vsub.s32 %v1741, %v1743
    %v1745 = vrot.slane %v1737, %v1744
    %v1747 = vunpack.c.l.s4 1983009808
    %v1748 = vunpack.c.0.s8 %v1747
    %v1749 = vlaneseq
    %v1750 = vshrl.u32 %v1749, 7
    %v1751 = vsub.s32 %v1748, %v1750
    %v1752 = vrot.slane %v1738, %v1751
    %v1753 = vcombine.low %v1554, %v1566
    %v1754 = vcombine.high %v1554, %v1566
    %v1756 = vunpack.c.l.s4 1983009808
    %v1757 = vunpack.c.0.s8 %v1756
    %v1758 = vlaneseq
    %v1759 = vshrl.u32 %v1758, 7
    %v1760 = vsub.s32 %v1757, %v1759
    %v1761 = vrot.slane %v1753, %v1760
    %v1763 = vunpack.c.l.s4 1983009808
    %v1764 = vunpack.c.0.s8 %v1763
    %v1765 = vlaneseq
    %v1766 = vshrl.u32 %v1765, 7
    %v1767 = vsub.s32 %v1764, %v1766
    %v1768 = vrot.slane %v1754, %v1767
    %v1769 = vcombine.low %v1713, %v1729
    %v1770 = vcombine.high %v1713, %v1729
    %v1772 = vunpack.c.l.s4 1934713408
    %v1773 = vunpack.c.0.s8 %v1772
    %v1774 = vlaneseq
    %v1775 = vshrl.u32 %v1774, 7
    %v1776 = vsub.s32 %v1773, %v1775
    %v1777 = vrot.slane %v1769, %v1776
    %v1779 = vunpack.c.l.s4 1934713408
    %v1780 = vunpack.c.0.s8 %v1779
    %v1781 = vlaneseq
    %v1782 = vshrl.u32 %v1781, 7
    %v1783 = vsub.s32 %v1780, %v1782
    %v1784 = vrot.slane %v1770, %v1783
    %v1785 = vcombine.low %v1720, %v1736
    %v1786 = vcombine.high %v1720, %v1736
    %v1788 = vunpack.c.l.s4 1934713408
    %v1789 = vunpack.c.0.s8 %v1788
    %v1790 = vlaneseq
    %v1791 = vshrl.u32 %v1790, 7
    %v1792 = vsub.s32 %v1789, %v1791
    %v1793 = vrot.slane %v1785, %v1792
    %v1795 = vunpack.c.l.s4 1934713408
    %v1796 = vunpack.c.0.s8 %v1795
    %v1797 = vlaneseq
    %v1798 = vshrl.u32 %v1797, 7
    %v1799 = vsub.s32 %v1796, %v1798
    %v1800 = vrot.slane %v1786, %v1799
    %v1801 = vcombine.low %v1745, %v1761
    %v1802 = vcombine.high %v1745, %v1761
    %v1804 = vunpack.c.l.s4 1934713408
    %v1805 = vunpack.c.0.s8 %v1804
    %v1806 = vlaneseq
    %v1807 = vshrl.u32 %v1806, 7
    %v1808 = vsub.s32 %v1805, %v1807
    %v1809 = vrot.slane %v1801, %v1808
    %v1811 = vunpack.c.l.s4 1934713408
    %v1812 = vunpack.c.0.s8 %v1811
    %v1813 = vlaneseq
    %v1814 = vshrl.u32 %v1813, 7
    %v1815 = vsub.s32 %v1812, %v1814
    %v1816 = vrot.slane %v1802, %v1815
    %v1817 = vcombine.low %v1752, %v1768
    %v1818 = vcombine.high %v1752, %v1768
    %v1820 = vunpack.c.l.s4 1934713408
    %v1821 = vunpack.c.0.s8 %v1820
    %v1822 = vlaneseq
    %v1823 = vshrl.u32 %v1822, 7
    %v1824 = vsub.s32 %v1821, %v1823
    %v1825 = vrot.slane %v1817, %v1824
    %v1827 = vunpack.c.l.s4 1934713408
    %v1828 = vunpack.c.0.s8 %v1827
    %v1829 = vlaneseq
    %v1830 = vshrl.u32 %v1829, 7
    %v1831 = vsub.s32 %v1828, %v1830
    %v1832 = vrot.slane %v1818, %v1831
    %v1833 = vcombine.low %v1777, %v1809
    %v1834 = vcombine.high %v1777, %v1809
    %v1835 = vcombine.low %v1784, %v1816
    %v1836 = vcombine.high %v1784, %v1816
    %v1837 = vcombine.low %v1793, %v1825
    %v1838 = vcombine.high %v1793, %v1825
    %v1839 = vcombine.low %v1800, %v1832
    %v1840 = vcombine.high %v1800, %v1832
    %v1841 = vpack.c.bf16 %v847, %v846
    %v1842 = vpack.c.bf16 %v849, %v848
    %v1843 = vpack.c.bf16 %v851, %v850
    %v1844 = vpack.c.bf16 %v853, %v852
    %v1845 = vpack.c.bf16 %v983, %v982
    %v1846 = vpack.c.bf16 %v985, %v984
    %v1847 = vpack.c.bf16 %v987, %v986
    %v1848 = vpack.c.bf16 %v989, %v988
    %v1849 = vpack.c.bf16 %v1698, %v1697
    %v1850 = vpack.c.bf16 %v1700, %v1699
    %v1851 = vpack.c.bf16 %v1702, %v1701
    %v1852 = vpack.c.bf16 %v1704, %v1703
    %v1853 = vpack.c.bf16 %v1834, %v1833
    %v1854 = vpack.c.bf16 %v1836, %v1835
    %v1855 = vpack.c.bf16 %v1838, %v1837
    %v1856 = vpack.c.bf16 %v1840, %v1839
    %v1857 = vld [vmem:[%s3] sm:$0xff]
    %v1858 = vld [vmem:[%s3 + $0x8] sm:$0xff]
    %v1859 = vld [vmem:[%s3 + $0x10] sm:$0xff]
    %v1860 = vld [vmem:[%s3 + $0x18] sm:$0xff]
    %v1861 = vpack.c.bf16 %v1858, %v1857
    %v1862 = vpack.c.bf16 %v1860, %v1859
    %v1863 = vld [vmem:[%s4] sm:$0x1]
    %v1865 = vlaneseq
    %v1866 = vshrl.u32 %v1865, 7
    %v1867 = vsub.s32 0, %v1866
    %v1868 = vrot.slane %v1863, %v1867
    %v1871 = vsel %vm526, %v1841, 0
    %v1874 = vsel %vm526, %v1842, 0
    %v1877 = vsel %vm526, %v1843, 0
    %v1880 = vsel %vm526, %v1844, 0
    %v1883 = vsel %vm526, %v1845, 0
    %v1886 = vsel %vm526, %v1846, 0
    %v1889 = vsel %vm526, %v1847, 0
    %v1892 = vsel %vm526, %v1848, 0
    %v1895 = vsel %vm526, %v1849, 0
    %v1898 = vsel %vm526, %v1850, 0
    %v1901 = vsel %vm526, %v1851, 0
    %v1904 = vsel %vm526, %v1852, 0
    %v1907 = vsel %vm526, %v1853, 0
    %v1910 = vsel %vm526, %v1854, 0
    %v1913 = vsel %vm526, %v1855, 0
    %v1916 = vsel %vm526, %v1856, 0
    %1918 = vmatprep.subr.bf16.mxu0 0
    %1919 = vmatpush1.bf16.msra.mxu0 0
    %1920 = vmatprep.subr.bf16.mxu0 0
    %1921 = vmatpush1.bf16.msra.mxu0 0
    %1922 = vmatprep.subr.bf16.mxu0 0
    %1923 = vmatpush1.bf16.msra.mxu0 0
    %1924 = vmatprep.subr.bf16.mxu0 0
    %1925 = vmatpush1.bf16.msra.mxu0 0
    %1926 = vmatprep.subr.bf16.mxu0 0
    %1927 = vmatpush1.bf16.msra.mxu0 0
    %1928 = vmatprep.subr.bf16.mxu0 0
    %1929 = vmatpush1.bf16.msra.mxu0 0
    %1930 = vmatprep.subr.bf16.mxu0 0
    %1931 = vmatpush1.bf16.msra.mxu0 %v1862
    %1932 = vmatprep.subr.bf16.mxu0 0
    %1933 = vmatpush1.bf16.msra.mxu0 %v1861
    %1934 = vmatprep.subr.bf16.mxu0 0
    %1935 = vmatpush2.bf16.msra.mxu0 0
    %1936 = vmatprep.subr.bf16.mxu0 0
    %1937 = vmatpush2.bf16.msra.mxu0 0
    %1938 = vmatprep.subr.bf16.mxu0 0
    %1939 = vmatpush2.bf16.msra.mxu0 0
    %1940 = vmatprep.subr.bf16.mxu0 0
    %1941 = vmatpush2.bf16.msra.mxu0 0
    %1942 = vmatprep.subr.bf16.mxu0 0
    %1943 = vmatpush2.bf16.msra.mxu0 0
    %1944 = vmatprep.subr.bf16.mxu0 0
    %1945 = vmatpush2.bf16.msra.mxu0 0
    %1946 = vmatprep.subr.bf16.mxu0 0
    %1947 = vmatpush2.bf16.msra.mxu0 0
    %1948 = vmatprep.subr.bf16.mxu0 0
    %1949 = vmatpush2.bf16.msra.mxu0 0
    %1950 = vmatprep.mubr.bf16.mxu0 0
    %1951 = vmatmul.mubr.bf16.gmra.mxu0 %v1871
    %v1952 = vpop.f32.mrf.mxu0
    %v1953 = vadd.f32 %v1868, %v1952
    %v1954 = vpop.f32.mrf.mxu0
    %v1955 = vpop.f32.mrf.mxu0
    %v1956 = vadd.f32 %v1868, %v1955
    %v1957 = vpop.f32.mrf.mxu0
    %1958 = vmatprep.mubr.bf16.mxu0 0
    %1959 = vmatmul.mubr.bf16.gmra.mxu0 %v1874
    %v1960 = vpop.f32.mrf.mxu0
    %v1961 = vadd.f32 %v1868, %v1960
    %v1962 = vpop.f32.mrf.mxu0
    %v1963 = vpop.f32.mrf.mxu0
    %v1964 = vadd.f32 %v1868, %v1963
    %v1965 = vpop.f32.mrf.mxu0
    %1966 = vmatprep.mubr.bf16.mxu0 0
    %1967 = vmatmul.mubr.bf16.gmra.mxu0 %v1877
    %v1968 = vpop.f32.mrf.mxu0
    %v1969 = vadd.f32 %v1868, %v1968
    %v1970 = vpop.f32.mrf.mxu0
    %v1971 = vpop.f32.mrf.mxu0
    %v1972 = vadd.f32 %v1868, %v1971
    %v1973 = vpop.f32.mrf.mxu0
    %1974 = vmatprep.mubr.bf16.mxu0 0
    %1975 = vmatmul.mubr.bf16.gmra.mxu0 %v1880
    %v1976 = vpop.f32.mrf.mxu0
    %v1977 = vadd.f32 %v1868, %v1976
    %v1978 = vpop.f32.mrf.mxu0
    %v1979 = vpop.f32.mrf.mxu0
    %v1980 = vadd.f32 %v1868, %v1979
    %v1981 = vpop.f32.mrf.mxu0
    %1982 = vmatprep.mubr.bf16.mxu0 0
    %1983 = vmatmul.mubr.bf16.gmra.mxu0 %v1883
    %v1984 = vpop.f32.mrf.mxu0
    %v1985 = vadd.f32 %v1868, %v1984
    %v1986 = vpop.f32.mrf.mxu0
    %v1987 = vpop.f32.mrf.mxu0
    %v1988 = vadd.f32 %v1868, %v1987
    %v1989 = vpop.f32.mrf.mxu0
    %1990 = vmatprep.mubr.bf16.mxu0 0
    %1991 = vmatmul.mubr.bf16.gmra.mxu0 %v1886
    %v1992 = vpop.f32.mrf.mxu0
    %v1993 = vadd.f32 %v1868, %v1992
    %v1994 = vpop.f32.mrf.mxu0
    %v1995 = vpop.f32.mrf.mxu0
    %v1996 = vadd.f32 %v1868, %v1995
    %v1997 = vpop.f32.mrf.mxu0
    %1998 = vmatprep.mubr.bf16.mxu0 0
    %1999 = vmatmul.mubr.bf16.gmra.mxu0 %v1889
    %v2000 = vpop.f32.mrf.mxu0
    %v2001 = vadd.f32 %v1868, %v2000
    %v2002 = vpop.f32.mrf.mxu0
    %v2003 = vpop.f32.mrf.mxu0
    %v2004 = vadd.f32 %v1868, %v2003
    %v2005 = vpop.f32.mrf.mxu0
    %2006 = vmatprep.mubr.bf16.mxu0 0
    %2007 = vmatmul.mubr.bf16.gmra.mxu0 %v1892
    %v2008 = vpop.f32.mrf.mxu0
    %v2009 = vadd.f32 %v1868, %v2008
    %v2010 = vpop.f32.mrf.mxu0
    %v2011 = vpop.f32.mrf.mxu0
    %v2012 = vadd.f32 %v1868, %v2011
    %v2013 = vpop.f32.mrf.mxu0
    %2014 = vmatprep.mubr.bf16.mxu0 0
    %2015 = vmatmul.mubr.bf16.gmra.mxu0 %v1895
    %v2016 = vpop.f32.mrf.mxu0
    %v2017 = vadd.f32 %v1868, %v2016
    %v2018 = vpop.f32.mrf.mxu0
    %v2019 = vpop.f32.mrf.mxu0
    %v2020 = vadd.f32 %v1868, %v2019
    %v2021 = vpop.f32.mrf.mxu0
    %2022 = vmatprep.mubr.bf16.mxu0 0
    %2023 = vmatmul.mubr.bf16.gmra.mxu0 %v1898
    %v2024 = vpop.f32.mrf.mxu0
    %v2025 = vadd.f32 %v1868, %v2024
    %v2026 = vpop.f32.mrf.mxu0
    %v2027 = vpop.f32.mrf.mxu0
    %v2028 = vadd.f32 %v1868, %v2027
    %v2029 = vpop.f32.mrf.mxu0
    %2030 = vmatprep.mubr.bf16.mxu0 0
    %2031 = vmatmul.mubr.bf16.gmra.mxu0 %v1901
    %v2032 = vpop.f32.mrf.mxu0
    %v2033 = vadd.f32 %v1868, %v2032
    %v2034 = vpop.f32.mrf.mxu0
    %v2035 = vpop.f32.mrf.mxu0
    %v2036 = vadd.f32 %v1868, %v2035
    %v2037 = vpop.f32.mrf.mxu0
    %2038 = vmatprep.mubr.bf16.mxu0 0
    %2039 = vmatmul.mubr.bf16.gmra.mxu0 %v1904
    %v2040 = vpop.f32.mrf.mxu0
    %v2041 = vadd.f32 %v1868, %v2040
    %v2042 = vpop.f32.mrf.mxu0
    %v2043 = vpop.f32.mrf.mxu0
    %v2044 = vadd.f32 %v1868, %v2043
    %v2045 = vpop.f32.mrf.mxu0
    %2046 = vmatprep.mubr.bf16.mxu0 0
    %2047 = vmatmul.mubr.bf16.gmra.mxu0 %v1907
    %v2048 = vpop.f32.mrf.mxu0
    %v2049 = vadd.f32 %v1868, %v2048
    %v2050 = vpop.f32.mrf.mxu0
    %v2051 = vpop.f32.mrf.mxu0
    %v2052 = vadd.f32 %v1868, %v2051
    %v2053 = vpop.f32.mrf.mxu0
    %2054 = vmatprep.mubr.bf16.mxu0 0
    %2055 = vmatmul.mubr.bf16.gmra.mxu0 %v1910
    %v2056 = vpop.f32.mrf.mxu0
    %v2057 = vadd.f32 %v1868, %v2056
    %v2058 = vpop.f32.mrf.mxu0
    %v2059 = vpop.f32.mrf.mxu0
    %v2060 = vadd.f32 %v1868, %v2059
    %v2061 = vpop.f32.mrf.mxu0
    %2062 = vmatprep.mubr.bf16.mxu0 0
    %2063 = vmatmul.mubr.bf16.gmra.mxu0 %v1913
    %v2064 = vpop.f32.mrf.mxu0
    %v2065 = vadd.f32 %v1868, %v2064
    %v2066 = vpop.f32.mrf.mxu0
    %v2067 = vpop.f32.mrf.mxu0
    %v2068 = vadd.f32 %v1868, %v2067
    %v2069 = vpop.f32.mrf.mxu0
    %2070 = vmatprep.mubr.bf16.mxu0 0
    %2071 = vmatmul.mubr.bf16.gmra.mxu0 %v1916
    %v2072 = vpop.f32.mrf.mxu0
    %v2073 = vadd.f32 %v1868, %v2072
    %v2074 = vpop.f32.mrf.mxu0
    %v2075 = vpop.f32.mrf.mxu0
    %v2076 = vadd.f32 %v1868, %v2075
    %v2077 = vpop.f32.mrf.mxu0
    %2078 = vdwg.mxu0
    %v2079 = vld [vmem:[%s5] sm:$0xff]
    %v2080 = vld [vmem:[%s5 + $0x8] sm:$0xff]
    %v2081 = vld [vmem:[%s5 + $0x10] sm:$0xff]
    %v2082 = vld [vmem:[%s5 + $0x18] sm:$0xff]
    %v2083 = vpack.c.bf16 %v2080, %v2079
    %v2084 = vpack.c.bf16 %v2082, %v2081
    %v2085 = vld [vmem:[%s6] sm:$0x1]
    %v2087 = vlaneseq
    %v2088 = vshrl.u32 %v2087, 7
    %v2089 = vsub.s32 0, %v2088
    %v2090 = vrot.slane %v2085, %v2089
    %2092 = vmatprep.subr.bf16.mxu0 0
    %2093 = vmatpush1.bf16.msra.mxu0 0
    %2094 = vmatprep.subr.bf16.mxu0 0
    %2095 = vmatpush1.bf16.msra.mxu0 0
    %2096 = vmatprep.subr.bf16.mxu0 0
    %2097 = vmatpush1.bf16.msra.mxu0 0
    %2098 = vmatprep.subr.bf16.mxu0 0
    %2099 = vmatpush1.bf16.msra.mxu0 0
    %2100 = vmatprep.subr.bf16.mxu0 0
    %2101 = vmatpush1.bf16.msra.mxu0 0
    %2102 = vmatprep.subr.bf16.mxu0 0
    %2103 = vmatpush1.bf16.msra.mxu0 0
    %2104 = vmatprep.subr.bf16.mxu0 0
    %2105 = vmatpush1.bf16.msra.mxu0 %v2084
    %2106 = vmatprep.subr.bf16.mxu0 0
    %2107 = vmatpush1.bf16.msra.mxu0 %v2083
    %2108 = vmatprep.subr.bf16.mxu0 0
    %2109 = vmatpush2.bf16.msra.mxu0 0
    %2110 = vmatprep.subr.bf16.mxu0 0
    %2111 = vmatpush2.bf16.msra.mxu0 0
    %2112 = vmatprep.subr.bf16.mxu0 0
    %2113 = vmatpush2.bf16.msra.mxu0 0
    %2114 = vmatprep.subr.bf16.mxu0 0
    %2115 = vmatpush2.bf16.msra.mxu0 0
    %2116 = vmatprep.subr.bf16.mxu0 0
    %2117 = vmatpush2.bf16.msra.mxu0 0
    %2118 = vmatprep.subr.bf16.mxu0 0
    %2119 = vmatpush2.bf16.msra.mxu0 0
    %2120 = vmatprep.subr.bf16.mxu0 0
    %2121 = vmatpush2.bf16.msra.mxu0 0
    %2122 = vmatprep.subr.bf16.mxu0 0
    %2123 = vmatpush2.bf16.msra.mxu0 0
    %2124 = vmatprep.mubr.bf16.mxu0 0
    %2125 = vmatmul.mubr.bf16.gmra.mxu0 %v1871
    %v2126 = vpop.f32.mrf.mxu0
    %v2127 = vadd.f32 %v2090, %v2126
    %v2128 = vpop.f32.mrf.mxu0
    %v2129 = vpop.f32.mrf.mxu0
    %v2130 = vadd.f32 %v2090, %v2129
    %v2131 = vpop.f32.mrf.mxu0
    %2132 = vmatprep.mubr.bf16.mxu0 0
    %2133 = vmatmul.mubr.bf16.gmra.mxu0 %v1874
    %v2134 = vpop.f32.mrf.mxu0
    %v2135 = vadd.f32 %v2090, %v2134
    %v2136 = vpop.f32.mrf.mxu0
    %v2137 = vpop.f32.mrf.mxu0
    %v2138 = vadd.f32 %v2090, %v2137
    %v2139 = vpop.f32.mrf.mxu0
    %2140 = vmatprep.mubr.bf16.mxu0 0
    %2141 = vmatmul.mubr.bf16.gmra.mxu0 %v1877
    %v2142 = vpop.f32.mrf.mxu0
    %v2143 = vadd.f32 %v2090, %v2142
    %v2144 = vpop.f32.mrf.mxu0
    %v2145 = vpop.f32.mrf.mxu0
    %v2146 = vadd.f32 %v2090, %v2145
    %v2147 = vpop.f32.mrf.mxu0
    %2148 = vmatprep.mubr.bf16.mxu0 0
    %2149 = vmatmul.mubr.bf16.gmra.mxu0 %v1880
    %v2150 = vpop.f32.mrf.mxu0
    %v2151 = vadd.f32 %v2090, %v2150
    %v2152 = vpop.f32.mrf.mxu0
    %v2153 = vpop.f32.mrf.mxu0
    %v2154 = vadd.f32 %v2090, %v2153
    %v2155 = vpop.f32.mrf.mxu0
    %2156 = vmatprep.mubr.bf16.mxu0 0
    %2157 = vmatmul.mubr.bf16.gmra.mxu0 %v1883
    %v2158 = vpop.f32.mrf.mxu0
    %v2159 = vadd.f32 %v2090, %v2158
    %v2160 = vpop.f32.mrf.mxu0
    %v2161 = vpop.f32.mrf.mxu0
    %v2162 = vadd.f32 %v2090, %v2161
    %v2163 = vpop.f32.mrf.mxu0
    %2164 = vmatprep.mubr.bf16.mxu0 0
    %2165 = vmatmul.mubr.bf16.gmra.mxu0 %v1886
    %v2166 = vpop.f32.mrf.mxu0
    %v2167 = vadd.f32 %v2090, %v2166
    %v2168 = vpop.f32.mrf.mxu0
    %v2169 = vpop.f32.mrf.mxu0
    %v2170 = vadd.f32 %v2090, %v2169
    %v2171 = vpop.f32.mrf.mxu0
    %2172 = vmatprep.mubr.bf16.mxu0 0
    %2173 = vmatmul.mubr.bf16.gmra.mxu0 %v1889
    %v2174 = vpop.f32.mrf.mxu0
    %v2175 = vadd.f32 %v2090, %v2174
    %v2176 = vpop.f32.mrf.mxu0
    %v2177 = vpop.f32.mrf.mxu0
    %v2178 = vadd.f32 %v2090, %v2177
    %v2179 = vpop.f32.mrf.mxu0
    %2180 = vmatprep.mubr.bf16.mxu0 0
    %2181 = vmatmul.mubr.bf16.gmra.mxu0 %v1892
    %v2182 = vpop.f32.mrf.mxu0
    %v2183 = vadd.f32 %v2090, %v2182
    %v2184 = vpop.f32.mrf.mxu0
    %v2185 = vpop.f32.mrf.mxu0
    %v2186 = vadd.f32 %v2090, %v2185
    %v2187 = vpop.f32.mrf.mxu0
    %2188 = vmatprep.mubr.bf16.mxu0 0
    %2189 = vmatmul.mubr.bf16.gmra.mxu0 %v1895
    %v2190 = vpop.f32.mrf.mxu0
    %v2191 = vadd.f32 %v2090, %v2190
    %v2192 = vpop.f32.mrf.mxu0
    %v2193 = vpop.f32.mrf.mxu0
    %v2194 = vadd.f32 %v2090, %v2193
    %v2195 = vpop.f32.mrf.mxu0
    %2196 = vmatprep.mubr.bf16.mxu0 0
    %2197 = vmatmul.mubr.bf16.gmra.mxu0 %v1898
    %v2198 = vpop.f32.mrf.mxu0
    %v2199 = vadd.f32 %v2090, %v2198
    %v2200 = vpop.f32.mrf.mxu0
    %v2201 = vpop.f32.mrf.mxu0
    %v2202 = vadd.f32 %v2090, %v2201
    %v2203 = vpop.f32.mrf.mxu0
    %2204 = vmatprep.mubr.bf16.mxu0 0
    %2205 = vmatmul.mubr.bf16.gmra.mxu0 %v1901
    %v2206 = vpop.f32.mrf.mxu0
    %v2207 = vadd.f32 %v2090, %v2206
    %v2208 = vpop.f32.mrf.mxu0
    %v2209 = vpop.f32.mrf.mxu0
    %v2210 = vadd.f32 %v2090, %v2209
    %v2211 = vpop.f32.mrf.mxu0
    %2212 = vmatprep.mubr.bf16.mxu0 0
    %2213 = vmatmul.mubr.bf16.gmra.mxu0 %v1904
    %v2214 = vpop.f32.mrf.mxu0
    %v2215 = vadd.f32 %v2090, %v2214
    %v2216 = vpop.f32.mrf.mxu0
    %v2217 = vpop.f32.mrf.mxu0
    %v2218 = vadd.f32 %v2090, %v2217
    %v2219 = vpop.f32.mrf.mxu0
    %2220 = vmatprep.mubr.bf16.mxu0 0
    %2221 = vmatmul.mubr.bf16.gmra.mxu0 %v1907
    %v2222 = vpop.f32.mrf.mxu0
    %v2223 = vadd.f32 %v2090, %v2222
    %v2224 = vpop.f32.mrf.mxu0
    %v2225 = vpop.f32.mrf.mxu0
    %v2226 = vadd.f32 %v2090, %v2225
    %v2227 = vpop.f32.mrf.mxu0
    %2228 = vmatprep.mubr.bf16.mxu0 0
    %2229 = vmatmul.mubr.bf16.gmra.mxu0 %v1910
    %v2230 = vpop.f32.mrf.mxu0
    %v2231 = vadd.f32 %v2090, %v2230
    %v2232 = vpop.f32.mrf.mxu0
    %v2233 = vpop.f32.mrf.mxu0
    %v2234 = vadd.f32 %v2090, %v2233
    %v2235 = vpop.f32.mrf.mxu0
    %2236 = vmatprep.mubr.bf16.mxu0 0
    %2237 = vmatmul.mubr.bf16.gmra.mxu0 %v1913
    %v2238 = vpop.f32.mrf.mxu0
    %v2239 = vadd.f32 %v2090, %v2238
    %v2240 = vpop.f32.mrf.mxu0
    %v2241 = vpop.f32.mrf.mxu0
    %v2242 = vadd.f32 %v2090, %v2241
    %v2243 = vpop.f32.mrf.mxu0
    %2244 = vmatprep.mubr.bf16.mxu0 0
    %2245 = vmatmul.mubr.bf16.gmra.mxu0 %v1916
    %v2246 = vpop.f32.mrf.mxu0
    %v2247 = vadd.f32 %v2090, %v2246
    %v2248 = vpop.f32.mrf.mxu0
    %v2249 = vpop.f32.mrf.mxu0
    %v2250 = vadd.f32 %v2090, %v2249
    %v2251 = vpop.f32.mrf.mxu0
    %2252 = vdwg.mxu0
    %v2253 = vxor.u32 %v2127, 2147483648
    %v2254 = vxor.u32 %v2130, 2147483648
    %v2255 = vxor.u32 %v2135, 2147483648
    %v2256 = vxor.u32 %v2138, 2147483648
    %v2257 = vxor.u32 %v2143, 2147483648
    %v2258 = vxor.u32 %v2146, 2147483648
    %v2259 = vxor.u32 %v2151, 2147483648
    %v2260 = vxor.u32 %v2154, 2147483648
    %v2261 = vxor.u32 %v2159, 2147483648
    %v2262 = vxor.u32 %v2162, 2147483648
    %v2263 = vxor.u32 %v2167, 2147483648
    %v2264 = vxor.u32 %v2170, 2147483648
    %v2265 = vxor.u32 %v2175, 2147483648
    %v2266 = vxor.u32 %v2178, 2147483648
    %v2267 = vxor.u32 %v2183, 2147483648
    %v2268 = vxor.u32 %v2186, 2147483648
    %v2269 = vxor.u32 %v2191, 2147483648
    %v2270 = vxor.u32 %v2194, 2147483648
    %v2271 = vxor.u32 %v2199, 2147483648
    %v2272 = vxor.u32 %v2202, 2147483648
    %v2273 = vxor.u32 %v2207, 2147483648
    %v2274 = vxor.u32 %v2210, 2147483648
    %v2275 = vxor.u32 %v2215, 2147483648
    %v2276 = vxor.u32 %v2218, 2147483648
    %v2277 = vxor.u32 %v2223, 2147483648
    %v2278 = vxor.u32 %v2226, 2147483648
    %v2279 = vxor.u32 %v2231, 2147483648
    %v2280 = vxor.u32 %v2234, 2147483648
    %v2281 = vxor.u32 %v2239, 2147483648
    %v2282 = vxor.u32 %v2242, 2147483648
    %v2283 = vxor.u32 %v2247, 2147483648
    %v2284 = vxor.u32 %v2250, 2147483648
    %v2285 = vmul.f32 %v2253, 1.442695
    %v2286 = vpow.pop %v2285
    %v2287 = vmul.f32 %v2254, 1.442695
    %v2288 = vpow.pop %v2287
    %v2289 = vmul.f32 %v2255, 1.442695
    %v2290 = vpow.pop %v2289
    %v2291 = vmul.f32 %v2256, 1.442695
    %v2292 = vpow.pop %v2291
    %v2293 = vmul.f32 %v2257, 1.442695
    %v2294 = vpow.pop %v2293
    %v2295 = vmul.f32 %v2258, 1.442695
    %v2296 = vpow.pop %v2295
    %v2297 = vmul.f32 %v2259, 1.442695
    %v2298 = vpow.pop %v2297
    %v2299 = vmul.f32 %v2260, 1.442695
    %v2300 = vpow.pop %v2299
    %v2301 = vmul.f32 %v2261, 1.442695
    %v2302 = vpow.pop %v2301
    %v2303 = vmul.f32 %v2262, 1.442695
    %v2304 = vpow.pop %v2303
    %v2305 = vmul.f32 %v2263, 1.442695
    %v2306 = vpow.pop %v2305
    %v2307 = vmul.f32 %v2264, 1.442695
    %v2308 = vpow.pop %v2307
    %v2309 = vmul.f32 %v2265, 1.442695
    %v2310 = vpow.pop %v2309
    %v2311 = vmul.f32 %v2266, 1.442695
    %v2312 = vpow.pop %v2311
    %v2313 = vmul.f32 %v2267, 1.442695
    %v2314 = vpow.pop %v2313
    %v2315 = vmul.f32 %v2268, 1.442695
    %v2316 = vpow.pop %v2315
    %v2317 = vmul.f32 %v2269, 1.442695
    %v2318 = vpow.pop %v2317
    %v2319 = vmul.f32 %v2270, 1.442695
    %v2320 = vpow.pop %v2319
    %v2321 = vmul.f32 %v2271, 1.442695
    %v2322 = vpow.pop %v2321
    %v2323 = vmul.f32 %v2272, 1.442695
    %v2324 = vpow.pop %v2323
    %v2325 = vmul.f32 %v2273, 1.442695
    %v2326 = vpow.pop %v2325
    %v2327 = vmul.f32 %v2274, 1.442695
    %v2328 = vpow.pop %v2327
    %v2329 = vmul.f32 %v2275, 1.442695
    %v2330 = vpow.pop %v2329
    %v2331 = vmul.f32 %v2276, 1.442695
    %v2332 = vpow.pop %v2331
    %v2333 = vmul.f32 %v2277, 1.442695
    %v2334 = vpow.pop %v2333
    %v2335 = vmul.f32 %v2278, 1.442695
    %v2336 = vpow.pop %v2335
    %v2337 = vmul.f32 %v2279, 1.442695
    %v2338 = vpow.pop %v2337
    %v2339 = vmul.f32 %v2280, 1.442695
    %v2340 = vpow.pop %v2339
    %v2341 = vmul.f32 %v2281, 1.442695
    %v2342 = vpow.pop %v2341
    %v2343 = vmul.f32 %v2282, 1.442695
    %v2344 = vpow.pop %v2343
    %v2345 = vmul.f32 %v2283, 1.442695
    %v2346 = vpow.pop %v2345
    %v2347 = vmul.f32 %v2284, 1.442695
    %v2348 = vpow.pop %v2347
    %v2349 = vadd.f32 %v2286, 1.0
    %v2350 = vadd.f32 %v2288, 1.0
    %v2351 = vadd.f32 %v2290, 1.0
    %v2352 = vadd.f32 %v2292, 1.0
    %v2353 = vadd.f32 %v2294, 1.0
    %v2354 = vadd.f32 %v2296, 1.0
    %v2355 = vadd.f32 %v2298, 1.0
    %v2356 = vadd.f32 %v2300, 1.0
    %v2357 = vadd.f32 %v2302, 1.0
    %v2358 = vadd.f32 %v2304, 1.0
    %v2359 = vadd.f32 %v2306, 1.0
    %v2360 = vadd.f32 %v2308, 1.0
    %v2361 = vadd.f32 %v2310, 1.0
    %v2362 = vadd.f32 %v2312, 1.0
    %v2363 = vadd.f32 %v2314, 1.0
    %v2364 = vadd.f32 %v2316, 1.0
    %v2365 = vadd.f32 %v2318, 1.0
    %v2366 = vadd.f32 %v2320, 1.0
    %v2367 = vadd.f32 %v2322, 1.0
    %v2368 = vadd.f32 %v2324, 1.0
    %v2369 = vadd.f32 %v2326, 1.0
    %v2370 = vadd.f32 %v2328, 1.0
    %v2371 = vadd.f32 %v2330, 1.0
    %v2372 = vadd.f32 %v2332, 1.0
    %v2373 = vadd.f32 %v2334, 1.0
    %v2374 = vadd.f32 %v2336, 1.0
    %v2375 = vadd.f32 %v2338, 1.0
    %v2376 = vadd.f32 %v2340, 1.0
    %v2377 = vadd.f32 %v2342, 1.0
    %v2378 = vadd.f32 %v2344, 1.0
    %v2379 = vadd.f32 %v2346, 1.0
    %v2380 = vadd.f32 %v2348, 1.0
    %v2381 = vrcp.pop %v2349
    %v2382 = vmul.f32 1.0, %v2381
    %v2383 = vrcp.pop %v2350
    %v2384 = vmul.f32 1.0, %v2383
    %v2385 = vrcp.pop %v2351
    %v2386 = vmul.f32 1.0, %v2385
    %v2387 = vrcp.pop %v2352
    %v2388 = vmul.f32 1.0, %v2387
    %v2389 = vrcp.pop %v2353
    %v2390 = vmul.f32 1.0, %v2389
    %v2391 = vrcp.pop %v2354
    %v2392 = vmul.f32 1.0, %v2391
    %v2393 = vrcp.pop %v2355
    %v2394 = vmul.f32 1.0, %v2393
    %v2395 = vrcp.pop %v2356
    %v2396 = vmul.f32 1.0, %v2395
    %v2397 = vrcp.pop %v2357
    %v2398 = vmul.f32 1.0, %v2397
    %v2399 = vrcp.pop %v2358
    %v2400 = vmul.f32 1.0, %v2399
    %v2401 = vrcp.pop %v2359
    %v2402 = vmul.f32 1.0, %v2401
    %v2403 = vrcp.pop %v2360
    %v2404 = vmul.f32 1.0, %v2403
    %v2405 = vrcp.pop %v2361
    %v2406 = vmul.f32 1.0, %v2405
    %v2407 = vrcp.pop %v2362
    %v2408 = vmul.f32 1.0, %v2407
    %v2409 = vrcp.pop %v2363
    %v2410 = vmul.f32 1.0, %v2409
    %v2411 = vrcp.pop %v2364
    %v2412 = vmul.f32 1.0, %v2411
    %v2413 = vrcp.pop %v2365
    %v2414 = vmul.f32 1.0, %v2413
    %v2415 = vrcp.pop %v2366
    %v2416 = vmul.f32 1.0, %v2415
    %v2417 = vrcp.pop %v2367
    %v2418 = vmul.f32 1.0, %v2417
    %v2419 = vrcp.pop %v2368
    %v2420 = vmul.f32 1.0, %v2419
    %v2421 = vrcp.pop %v2369
    %v2422 = vmul.f32 1.0, %v2421
    %v2423 = vrcp.pop %v2370
    %v2424 = vmul.f32 1.0, %v2423
    %v2425 = vrcp.pop %v2371
    %v2426 = vmul.f32 1.0, %v2425
    %v2427 = vrcp.pop %v2372
    %v2428 = vmul.f32 1.0, %v2427
    %v2429 = vrcp.pop %v2373
    %v2430 = vmul.f32 1.0, %v2429
    %v2431 = vrcp.pop %v2374
    %v2432 = vmul.f32 1.0, %v2431
    %v2433 = vrcp.pop %v2375
    %v2434 = vmul.f32 1.0, %v2433
    %v2435 = vrcp.pop %v2376
    %v2436 = vmul.f32 1.0, %v2435
    %v2437 = vrcp.pop %v2377
    %v2438 = vmul.f32 1.0, %v2437
    %v2439 = vrcp.pop %v2378
    %v2440 = vmul.f32 1.0, %v2439
    %v2441 = vrcp.pop %v2379
    %v2442 = vmul.f32 1.0, %v2441
    %v2443 = vrcp.pop %v2380
    %v2444 = vmul.f32 1.0, %v2443
    %v2445 = vmul.f32 %v1953, %v2382
    %v2446 = vmul.f32 %v1956, %v2384
    %v2447 = vmul.f32 %v1961, %v2386
    %v2448 = vmul.f32 %v1964, %v2388
    %v2449 = vmul.f32 %v1969, %v2390
    %v2450 = vmul.f32 %v1972, %v2392
    %v2451 = vmul.f32 %v1977, %v2394
    %v2452 = vmul.f32 %v1980, %v2396
    %v2453 = vmul.f32 %v1985, %v2398
    %v2454 = vmul.f32 %v1988, %v2400
    %v2455 = vmul.f32 %v1993, %v2402
    %v2456 = vmul.f32 %v1996, %v2404
    %v2457 = vmul.f32 %v2001, %v2406
    %v2458 = vmul.f32 %v2004, %v2408
    %v2459 = vmul.f32 %v2009, %v2410
    %v2460 = vmul.f32 %v2012, %v2412
    %v2461 = vmul.f32 %v2017, %v2414
    %v2462 = vmul.f32 %v2020, %v2416
    %v2463 = vmul.f32 %v2025, %v2418
    %v2464 = vmul.f32 %v2028, %v2420
    %v2465 = vmul.f32 %v2033, %v2422
    %v2466 = vmul.f32 %v2036, %v2424
    %v2467 = vmul.f32 %v2041, %v2426
    %v2468 = vmul.f32 %v2044, %v2428
    %v2469 = vmul.f32 %v2049, %v2430
    %v2470 = vmul.f32 %v2052, %v2432
    %v2471 = vmul.f32 %v2057, %v2434
    %v2472 = vmul.f32 %v2060, %v2436
    %v2473 = vmul.f32 %v2065, %v2438
    %v2474 = vmul.f32 %v2068, %v2440
    %v2475 = vmul.f32 %v2073, %v2442
    %v2476 = vmul.f32 %v2076, %v2444
    %v2477 = vadd.f32 %v2445, %v194
    %v2478 = vadd.f32 %v2446, %v195
    %v2479 = vadd.f32 %v2447, %v196
    %v2480 = vadd.f32 %v2448, %v197
    %v2481 = vadd.f32 %v2449, %v198
    %v2482 = vadd.f32 %v2450, %v199
    %v2483 = vadd.f32 %v2451, %v200
    %v2484 = vadd.f32 %v2452, %v201
    %v2485 = vadd.f32 %v2453, %v330
    %v2486 = vadd.f32 %v2454, %v331
    %v2487 = vadd.f32 %v2455, %v332
    %v2488 = vadd.f32 %v2456, %v333
    %v2489 = vadd.f32 %v2457, %v334
    %v2490 = vadd.f32 %v2458, %v335
    %v2491 = vadd.f32 %v2459, %v336
    %v2492 = vadd.f32 %v2460, %v337
    %v2493 = vadd.f32 %v2461, %v1135
    %v2494 = vadd.f32 %v2462, %v1136
    %v2495 = vadd.f32 %v2463, %v1137
    %v2496 = vadd.f32 %v2464, %v1138
    %v2497 = vadd.f32 %v2465, %v1139
    %v2498 = vadd.f32 %v2466, %v1140
    %v2499 = vadd.f32 %v2467, %v1141
    %v2500 = vadd.f32 %v2468, %v1142
    %v2501 = vadd.f32 %v2469, %v1271
    %v2502 = vadd.f32 %v2470, %v1272
    %v2503 = vadd.f32 %v2471, %v1273
    %v2504 = vadd.f32 %v2472, %v1274
    %v2505 = vadd.f32 %v2473, %v1275
    %v2506 = vadd.f32 %v2474, %v1276
    %v2507 = vadd.f32 %v2475, %v1277
    %v2508 = vadd.f32 %v2476, %v1278
    %v2509 = vpack.c.bf16 %v2478, %v2477
    %v2510 = vpack.c.bf16 %v2480, %v2479
    %v2511 = vpack.c.bf16 %v2482, %v2481
    %v2512 = vpack.c.bf16 %v2484, %v2483
    %v2513 = vpack.c.bf16 %v2486, %v2485
    %v2514 = vpack.c.bf16 %v2488, %v2487
    %v2515 = vpack.c.bf16 %v2490, %v2489
    %v2516 = vpack.c.bf16 %v2492, %v2491
    %v2517 = vpack.c.bf16 %v2494, %v2493
    %v2518 = vpack.c.bf16 %v2496, %v2495
    %v2519 = vpack.c.bf16 %v2498, %v2497
    %v2520 = vpack.c.bf16 %v2500, %v2499
    %v2521 = vpack.c.bf16 %v2502, %v2501
    %v2522 = vpack.c.bf16 %v2504, %v2503
    %v2523 = vpack.c.bf16 %v2506, %v2505
    %v2524 = vpack.c.bf16 %v2508, %v2507
    %v2541 = vunpack.c.l.b16 %v2509
    %v2542 = vunpack.c.h.b16 %v2509
    %v2543 = vunpack.c.l.b16 %v2510
    %v2544 = vunpack.c.h.b16 %v2510
    %v2545 = vunpack.c.l.b16 %v2511
    %v2546 = vunpack.c.h.b16 %v2511
    %v2547 = vunpack.c.l.b16 %v2512
    %v2548 = vunpack.c.h.b16 %v2512
    %v2549 = vunpack.c.l.b16 %v2513
    %v2550 = vunpack.c.h.b16 %v2513
    %v2551 = vunpack.c.l.b16 %v2514
    %v2552 = vunpack.c.h.b16 %v2514
    %v2553 = vunpack.c.l.b16 %v2515
    %v2554 = vunpack.c.h.b16 %v2515
    %v2555 = vunpack.c.l.b16 %v2516
    %v2556 = vunpack.c.h.b16 %v2516
    %v2557 = vunpack.c.l.b16 %v2517
    %v2558 = vunpack.c.h.b16 %v2517
    %v2559 = vunpack.c.l.b16 %v2518
    %v2560 = vunpack.c.h.b16 %v2518
    %v2561 = vunpack.c.l.b16 %v2519
    %v2562 = vunpack.c.h.b16 %v2519
    %v2563 = vunpack.c.l.b16 %v2520
    %v2564 = vunpack.c.h.b16 %v2520
    %v2565 = vunpack.c.l.b16 %v2521
    %v2566 = vunpack.c.h.b16 %v2521
    %v2567 = vunpack.c.l.b16 %v2522
    %v2568 = vunpack.c.h.b16 %v2522
    %v2569 = vunpack.c.l.b16 %v2523
    %v2570 = vunpack.c.h.b16 %v2523
    %v2571 = vunpack.c.l.b16 %v2524
    %v2572 = vunpack.c.h.b16 %v2524
    %v2573 = vpack.c.b16 %v2541, %v2541
    %v2574 = vpack.c.b16 %v2542, %v2542
    %v2575 = vpack.c.b16 %v2543, %v2543
    %v2576 = vpack.c.b16 %v2544, %v2544
    %v2577 = vpack.c.b16 %v2545, %v2545
    %v2578 = vpack.c.b16 %v2546, %v2546
    %v2579 = vpack.c.b16 %v2547, %v2547
    %v2580 = vpack.c.b16 %v2548, %v2548
    %v2581 = vpack.c.b16 %v2549, %v2549
    %v2582 = vpack.c.b16 %v2550, %v2550
    %v2583 = vpack.c.b16 %v2551, %v2551
    %v2584 = vpack.c.b16 %v2552, %v2552
    %v2585 = vpack.c.b16 %v2553, %v2553
    %v2586 = vpack.c.b16 %v2554, %v2554
    %v2587 = vpack.c.b16 %v2555, %v2555
    %v2588 = vpack.c.b16 %v2556, %v2556
    %v2589 = vpack.c.b16 %v2557, %v2557
    %v2590 = vpack.c.b16 %v2558, %v2558
    %v2591 = vpack.c.b16 %v2559, %v2559
    %v2592 = vpack.c.b16 %v2560, %v2560
    %v2593 = vpack.c.b16 %v2561, %v2561
    %v2594 = vpack.c.b16 %v2562, %v2562
    %v2595 = vpack.c.b16 %v2563, %v2563
    %v2596 = vpack.c.b16 %v2564, %v2564
    %v2597 = vpack.c.b16 %v2565, %v2565
    %v2598 = vpack.c.b16 %v2566, %v2566
    %v2599 = vpack.c.b16 %v2567, %v2567
    %v2600 = vpack.c.b16 %v2568, %v2568
    %v2601 = vpack.c.b16 %v2569, %v2569
    %v2602 = vpack.c.b16 %v2570, %v2570
    %v2603 = vpack.c.b16 %v2571, %v2571
    %v2604 = vpack.c.b16 %v2572, %v2572
    %v2637 = vcombine.low %v2573, %v2577
    %v2639 = vunpack.c.l.s4 1983009808
    %v2640 = vunpack.c.0.s8 %v2639
    %v2641 = vlaneseq
    %v2642 = vshrl.u32 %v2641, 7
    %v2643 = vsub.s32 %v2640, %v2642
    %v2644 = vrot.slane %v2637, %v2643
    %v2645 = vcombine.low %v2575, %v2579
    %v2647 = vunpack.c.l.s4 1983009808
    %v2648 = vunpack.c.0.s8 %v2647
    %v2649 = vlaneseq
    %v2650 = vshrl.u32 %v2649, 7
    %v2651 = vsub.s32 %v2648, %v2650
    %v2652 = vrot.slane %v2645, %v2651
    %v2653 = vcombine.low %v2644, %v2652
    %v2654 = vcombine.high %v2644, %v2652
    %v2656 = vunpack.c.l.s4 1934713408
    %v2657 = vunpack.c.0.s8 %v2656
    %v2658 = vlaneseq
    %v2659 = vshrl.u32 %v2658, 7
    %v2660 = vsub.s32 %v2657, %v2659
    %v2661 = vrot.slane %v2653, %v2660
    %v2663 = vunpack.c.l.s4 1934713408
    %v2664 = vunpack.c.0.s8 %v2663
    %v2665 = vlaneseq
    %v2666 = vshrl.u32 %v2665, 7
    %v2667 = vsub.s32 %v2664, %v2666
    %v2668 = vrot.slane %v2654, %v2667
    %v2669 = vcombine.high %v2661, 0
    %v2670 = vcombine.high %v2668, 0
    %v2671 = vcombine.low %v2574, %v2578
    %v2673 = vunpack.c.l.s4 1983009808
    %v2674 = vunpack.c.0.s8 %v2673
    %v2675 = vlaneseq
    %v2676 = vshrl.u32 %v2675, 7
    %v2677 = vsub.s32 %v2674, %v2676
    %v2678 = vrot.slane %v2671, %v2677
    %v2679 = vcombine.low %v2576, %v2580
    %v2681 = vunpack.c.l.s4 1983009808
    %v2682 = vunpack.c.0.s8 %v2681
    %v2683 = vlaneseq
    %v2684 = vshrl.u32 %v2683, 7
    %v2685 = vsub.s32 %v2682, %v2684
    %v2686 = vrot.slane %v2679, %v2685
    %v2687 = vcombine.low %v2678, %v2686
    %v2688 = vcombine.high %v2678, %v2686
    %v2690 = vunpack.c.l.s4 1934713408
    %v2691 = vunpack.c.0.s8 %v2690
    %v2692 = vlaneseq
    %v2693 = vshrl.u32 %v2692, 7
    %v2694 = vsub.s32 %v2691, %v2693
    %v2695 = vrot.slane %v2687, %v2694
    %v2697 = vunpack.c.l.s4 1934713408
    %v2698 = vunpack.c.0.s8 %v2697
    %v2699 = vlaneseq
    %v2700 = vshrl.u32 %v2699, 7
    %v2701 = vsub.s32 %v2698, %v2700
    %v2702 = vrot.slane %v2688, %v2701
    %v2703 = vcombine.high %v2695, 0
    %v2704 = vcombine.high %v2702, 0
    %v2705 = vcombine.low %v2581, %v2585
    %v2707 = vunpack.c.l.s4 1983009808
    %v2708 = vunpack.c.0.s8 %v2707
    %v2709 = vlaneseq
    %v2710 = vshrl.u32 %v2709, 7
    %v2711 = vsub.s32 %v2708, %v2710
    %v2712 = vrot.slane %v2705, %v2711
    %v2713 = vcombine.low %v2583, %v2587
    %v2715 = vunpack.c.l.s4 1983009808
    %v2716 = vunpack.c.0.s8 %v2715
    %v2717 = vlaneseq
    %v2718 = vshrl.u32 %v2717, 7
    %v2719 = vsub.s32 %v2716, %v2718
    %v2720 = vrot.slane %v2713, %v2719
    %v2721 = vcombine.low %v2712, %v2720
    %v2722 = vcombine.high %v2712, %v2720
    %v2724 = vunpack.c.l.s4 1934713408
    %v2725 = vunpack.c.0.s8 %v2724
    %v2726 = vlaneseq
    %v2727 = vshrl.u32 %v2726, 7
    %v2728 = vsub.s32 %v2725, %v2727
    %v2729 = vrot.slane %v2721, %v2728
    %v2731 = vunpack.c.l.s4 1934713408
    %v2732 = vunpack.c.0.s8 %v2731
    %v2733 = vlaneseq
    %v2734 = vshrl.u32 %v2733, 7
    %v2735 = vsub.s32 %v2732, %v2734
    %v2736 = vrot.slane %v2722, %v2735
    %v2737 = vcombine.high %v2729, 0
    %v2738 = vcombine.high %v2736, 0
    %v2739 = vcombine.low %v2582, %v2586
    %v2741 = vunpack.c.l.s4 1983009808
    %v2742 = vunpack.c.0.s8 %v2741
    %v2743 = vlaneseq
    %v2744 = vshrl.u32 %v2743, 7
    %v2745 = vsub.s32 %v2742, %v2744
    %v2746 = vrot.slane %v2739, %v2745
    %v2747 = vcombine.low %v2584, %v2588
    %v2749 = vunpack.c.l.s4 1983009808
    %v2750 = vunpack.c.0.s8 %v2749
    %v2751 = vlaneseq
    %v2752 = vshrl.u32 %v2751, 7
    %v2753 = vsub.s32 %v2750, %v2752
    %v2754 = vrot.slane %v2747, %v2753
    %v2755 = vcombine.low %v2746, %v2754
    %v2756 = vcombine.high %v2746, %v2754
    %v2758 = vunpack.c.l.s4 1934713408
    %v2759 = vunpack.c.0.s8 %v2758
    %v2760 = vlaneseq
    %v2761 = vshrl.u32 %v2760, 7
    %v2762 = vsub.s32 %v2759, %v2761
    %v2763 = vrot.slane %v2755, %v2762
    %v2765 = vunpack.c.l.s4 1934713408
    %v2766 = vunpack.c.0.s8 %v2765
    %v2767 = vlaneseq
    %v2768 = vshrl.u32 %v2767, 7
    %v2769 = vsub.s32 %v2766, %v2768
    %v2770 = vrot.slane %v2756, %v2769
    %v2771 = vcombine.high %v2763, 0
    %v2772 = vcombine.high %v2770, 0
    %v2775 = vpack.i.b16 %v2695, %v2661
    %v2777 = vshrl.u32 %v2661, 16
    %v2778 = vshrl.u32 %v2695, 16
    %v2779 = vpack.i.b16 %v2778, %v2777
    %v2783 = vpack.i.b16 %v2703, %v2669
    %v2785 = vshrl.u32 %v2669, 16
    %v2786 = vshrl.u32 %v2703, 16
    %v2787 = vpack.i.b16 %v2786, %v2785
    %v2791 = vpack.i.b16 %v2702, %v2668
    %v2793 = vshrl.u32 %v2668, 16
    %v2794 = vshrl.u32 %v2702, 16
    %v2795 = vpack.i.b16 %v2794, %v2793
    %v2799 = vpack.i.b16 %v2704, %v2670
    %v2801 = vshrl.u32 %v2670, 16
    %v2802 = vshrl.u32 %v2704, 16
    %v2803 = vpack.i.b16 %v2802, %v2801
    %v2807 = vpack.i.b16 %v2763, %v2729
    %v2809 = vshrl.u32 %v2729, 16
    %v2810 = vshrl.u32 %v2763, 16
    %v2811 = vpack.i.b16 %v2810, %v2809
    %v2815 = vpack.i.b16 %v2771, %v2737
    %v2817 = vshrl.u32 %v2737, 16
    %v2818 = vshrl.u32 %v2771, 16
    %v2819 = vpack.i.b16 %v2818, %v2817
    %v2823 = vpack.i.b16 %v2770, %v2736
    %v2825 = vshrl.u32 %v2736, 16
    %v2826 = vshrl.u32 %v2770, 16
    %v2827 = vpack.i.b16 %v2826, %v2825
    %v2831 = vpack.i.b16 %v2772, %v2738
    %v2833 = vshrl.u32 %v2738, 16
    %v2834 = vshrl.u32 %v2772, 16
    %v2835 = vpack.i.b16 %v2834, %v2833
    %v2837 = vcombine.low %v2775, %v2791
    %v2839 = vunpack.c.l.s4 1983009808
    %v2840 = vunpack.c.0.s8 %v2839
    %v2841 = vlaneseq
    %v2842 = vshrl.u32 %v2841, 7
    %v2843 = vsub.s32 %v2840, %v2842
    %v2844 = vrot.slane %v2837, %v2843
    %v2845 = vcombine.low %v2783, %v2799
    %v2847 = vunpack.c.l.s4 1983009808
    %v2848 = vunpack.c.0.s8 %v2847
    %v2849 = vlaneseq
    %v2850 = vshrl.u32 %v2849, 7
    %v2851 = vsub.s32 %v2848, %v2850
    %v2852 = vrot.slane %v2845, %v2851
    %v2853 = vcombine.low %v2844, %v2852
    %v2854 = vcombine.high %v2844, %v2852
    %v2856 = vunpack.c.l.s4 1934713408
    %v2857 = vunpack.c.0.s8 %v2856
    %v2858 = vlaneseq
    %v2859 = vshrl.u32 %v2858, 7
    %v2860 = vsub.s32 %v2857, %v2859
    %v2861 = vrot.slane %v2853, %v2860
    %v2863 = vunpack.c.l.s4 1934713408
    %v2864 = vunpack.c.0.s8 %v2863
    %v2865 = vlaneseq
    %v2866 = vshrl.u32 %v2865, 7
    %v2867 = vsub.s32 %v2864, %v2866
    %v2868 = vrot.slane %v2854, %v2867
    %v2869 = vcombine.high %v2861, 0
    %v2870 = vcombine.high %v2868, 0
    %v2871 = vcombine.low %v2779, %v2795
    %v2873 = vunpack.c.l.s4 1983009808
    %v2874 = vunpack.c.0.s8 %v2873
    %v2875 = vlaneseq
    %v2876 = vshrl.u32 %v2875, 7
    %v2877 = vsub.s32 %v2874, %v2876
    %v2878 = vrot.slane %v2871, %v2877
    %v2879 = vcombine.low %v2787, %v2803
    %v2881 = vunpack.c.l.s4 1983009808
    %v2882 = vunpack.c.0.s8 %v2881
    %v2883 = vlaneseq
    %v2884 = vshrl.u32 %v2883, 7
    %v2885 = vsub.s32 %v2882, %v2884
    %v2886 = vrot.slane %v2879, %v2885
    %v2887 = vcombine.low %v2878, %v2886
    %v2888 = vcombine.high %v2878, %v2886
    %v2890 = vunpack.c.l.s4 1934713408
    %v2891 = vunpack.c.0.s8 %v2890
    %v2892 = vlaneseq
    %v2893 = vshrl.u32 %v2892, 7
    %v2894 = vsub.s32 %v2891, %v2893
    %v2895 = vrot.slane %v2887, %v2894
    %v2897 = vunpack.c.l.s4 1934713408
    %v2898 = vunpack.c.0.s8 %v2897
    %v2899 = vlaneseq
    %v2900 = vshrl.u32 %v2899, 7
    %v2901 = vsub.s32 %v2898, %v2900
    %v2902 = vrot.slane %v2888, %v2901
    %v2903 = vcombine.high %v2895, 0
    %v2904 = vcombine.high %v2902, 0
    %v2905 = vcombine.low %v2807, %v2823
    %v2907 = vunpack.c.l.s4 1983009808
    %v2908 = vunpack.c.0.s8 %v2907
    %v2909 = vlaneseq
    %v2910 = vshrl.u32 %v2909, 7
    %v2911 = vsub.s32 %v2908, %v2910
    %v2912 = vrot.slane %v2905, %v2911
    %v2913 = vcombine.low %v2815, %v2831
    %v2915 = vunpack.c.l.s4 1983009808
    %v2916 = vunpack.c.0.s8 %v2915
    %v2917 = vlaneseq
    %v2918 = vshrl.u32 %v2917, 7
    %v2919 = vsub.s32 %v2916, %v2918
    %v2920 = vrot.slane %v2913, %v2919
    %v2921 = vcombine.low %v2912, %v2920
    %v2922 = vcombine.high %v2912, %v2920
    %v2924 = vunpack.c.l.s4 1934713408
    %v2925 = vunpack.c.0.s8 %v2924
    %v2926 = vlaneseq
    %v2927 = vshrl.u32 %v2926, 7
    %v2928 = vsub.s32 %v2925, %v2927
    %v2929 = vrot.slane %v2921, %v2928
    %v2931 = vunpack.c.l.s4 1934713408
    %v2932 = vunpack.c.0.s8 %v2931
    %v2933 = vlaneseq
    %v2934 = vshrl.u32 %v2933, 7
    %v2935 = vsub.s32 %v2932, %v2934
    %v2936 = vrot.slane %v2922, %v2935
    %v2937 = vcombine.high %v2929, 0
    %v2938 = vcombine.high %v2936, 0
    %v2939 = vcombine.low %v2811, %v2827
    %v2941 = vunpack.c.l.s4 1983009808
    %v2942 = vunpack.c.0.s8 %v2941
    %v2943 = vlaneseq
    %v2944 = vshrl.u32 %v2943, 7
    %v2945 = vsub.s32 %v2942, %v2944
    %v2946 = vrot.slane %v2939, %v2945
    %v2947 = vcombine.low %v2819, %v2835
    %v2949 = vunpack.c.l.s4 1983009808
    %v2950 = vunpack.c.0.s8 %v2949
    %v2951 = vlaneseq
    %v2952 = vshrl.u32 %v2951, 7
    %v2953 = vsub.s32 %v2950, %v2952
    %v2954 = vrot.slane %v2947, %v2953
    %v2955 = vcombine.low %v2946, %v2954
    %v2956 = vcombine.high %v2946, %v2954
    %v2958 = vunpack.c.l.s4 1934713408
    %v2959 = vunpack.c.0.s8 %v2958
    %v2960 = vlaneseq
    %v2961 = vshrl.u32 %v2960, 7
    %v2962 = vsub.s32 %v2959, %v2961
    %v2963 = vrot.slane %v2955, %v2962
    %v2965 = vunpack.c.l.s4 1934713408
    %v2966 = vunpack.c.0.s8 %v2965
    %v2967 = vlaneseq
    %v2968 = vshrl.u32 %v2967, 7
    %v2969 = vsub.s32 %v2966, %v2968
    %v2970 = vrot.slane %v2956, %v2969
    %v2971 = vcombine.high %v2963, 0
    %v2972 = vcombine.high %v2970, 0
    %v2975 = vpack.i.b16 %v2895, %v2861
    %v2976 = vshrl.u32 %v2861, 16
    %v2977 = vshrl.u32 %v2895, 16
    %v2978 = vpack.i.b16 %v2977, %v2976
    %v2981 = vpack.i.b16 %v2903, %v2869
    %v2982 = vshrl.u32 %v2869, 16
    %v2983 = vshrl.u32 %v2903, 16
    %v2984 = vpack.i.b16 %v2983, %v2982
    %v2987 = vpack.i.b16 %v2902, %v2868
    %v2988 = vshrl.u32 %v2868, 16
    %v2989 = vshrl.u32 %v2902, 16
    %v2990 = vpack.i.b16 %v2989, %v2988
    %v2993 = vpack.i.b16 %v2904, %v2870
    %v2994 = vshrl.u32 %v2870, 16
    %v2995 = vshrl.u32 %v2904, 16
    %v2996 = vpack.i.b16 %v2995, %v2994
    %v2999 = vpack.i.b16 %v2963, %v2929
    %v3000 = vshrl.u32 %v2929, 16
    %v3001 = vshrl.u32 %v2963, 16
    %v3002 = vpack.i.b16 %v3001, %v3000
    %v3005 = vpack.i.b16 %v2971, %v2937
    %v3006 = vshrl.u32 %v2937, 16
    %v3007 = vshrl.u32 %v2971, 16
    %v3008 = vpack.i.b16 %v3007, %v3006
    %v3011 = vpack.i.b16 %v2970, %v2936
    %v3012 = vshrl.u32 %v2936, 16
    %v3013 = vshrl.u32 %v2970, 16
    %v3014 = vpack.i.b16 %v3013, %v3012
    %v3017 = vpack.i.b16 %v2972, %v2938
    %v3018 = vshrl.u32 %v2938, 16
    %v3019 = vshrl.u32 %v2972, 16
    %v3020 = vpack.i.b16 %v3019, %v3018
    %v3021 = vunpack.c.l.b16 %v2978
    %v3022 = vpack.c.b16 %v3021, %v3021
    %3023 = vrot.lane.b32.xlu0 %v3022, 32
    %v3024 = vpop.permute.xlu0 %3023
    %v3025 = vunpack.c.l.b16 %v2981
    %v3026 = vpack.c.b16 %v3025, %v3025
    %3027 = vrot.lane.b32.xlu0 %v3026, 64
    %v3028 = vpop.permute.xlu0 %3027
    %v3029 = vunpack.c.l.b16 %v2984
    %v3030 = vpack.c.b16 %v3029, %v3029
    %3031 = vrot.lane.b32.xlu0 %v3030, 96
    %v3032 = vpop.permute.xlu0 %3031
    %v3033 = vunpack.c.l.b16 %v2990
    %v3034 = vpack.c.b16 %v3033, %v3033
    %3035 = vrot.lane.b32.xlu0 %v3034, 32
    %v3036 = vpop.permute.xlu0 %3035
    %v3037 = vunpack.c.l.b16 %v2993
    %v3038 = vpack.c.b16 %v3037, %v3037
    %3039 = vrot.lane.b32.xlu0 %v3038, 64
    %v3040 = vpop.permute.xlu0 %3039
    %v3041 = vunpack.c.l.b16 %v2996
    %v3042 = vpack.c.b16 %v3041, %v3041
    %3043 = vrot.lane.b32.xlu0 %v3042, 96
    %v3044 = vpop.permute.xlu0 %3043
    %v3045 = vunpack.c.l.b16 %v3002
    %v3046 = vpack.c.b16 %v3045, %v3045
    %3047 = vrot.lane.b32.xlu0 %v3046, 32
    %v3048 = vpop.permute.xlu0 %3047
    %v3049 = vunpack.c.l.b16 %v3005
    %v3050 = vpack.c.b16 %v3049, %v3049
    %3051 = vrot.lane.b32.xlu0 %v3050, 64
    %v3052 = vpop.permute.xlu0 %3051
    %v3053 = vunpack.c.l.b16 %v3008
    %v3054 = vpack.c.b16 %v3053, %v3053
    %3055 = vrot.lane.b32.xlu0 %v3054, 96
    %v3056 = vpop.permute.xlu0 %3055
    %v3057 = vunpack.c.l.b16 %v3014
    %v3058 = vpack.c.b16 %v3057, %v3057
    %3059 = vrot.lane.b32.xlu0 %v3058, 32
    %v3060 = vpop.permute.xlu0 %3059
    %v3061 = vunpack.c.l.b16 %v3017
    %v3062 = vpack.c.b16 %v3061, %v3061
    %3063 = vrot.lane.b32.xlu0 %v3062, 64
    %v3064 = vpop.permute.xlu0 %3063
    %v3065 = vunpack.c.l.b16 %v3020
    %v3066 = vpack.c.b16 %v3065, %v3065
    %3067 = vrot.lane.b32.xlu0 %v3066, 96
    %v3068 = vpop.permute.xlu0 %3067
    %v3071 = vsel %vm526, %v2975, %v3024
    %v3073 = vsel %vm530, %v3071, %v3028
    %v3075 = vsel %vm533, %v3073, %v3032
    %v3078 = vsel %vm526, %v2987, %v3036
    %v3080 = vsel %vm530, %v3078, %v3040
    %v3082 = vsel %vm533, %v3080, %v3044
    %v3085 = vsel %vm526, %v2999, %v3048
    %v3087 = vsel %vm530, %v3085, %v3052
    %v3089 = vsel %vm533, %v3087, %v3056
    %v3092 = vsel %vm526, %v3011, %v3060
    %v3094 = vsel %vm530, %v3092, %v3064
    %v3096 = vsel %vm533, %v3094, %v3068
    %vm3097 = vcmask 64512
    %v3099 = vsel %vm3097, %v48, 0
    %vm3101 = vcmask 1043456
    %v3102 = vsel %vm3101, %v3075, 0
    %v3104 = vsel %vm3101, %v3082, 0
    %v3106 = vsel %vm3101, %v3089, 0
    %v3108 = vsel %vm3101, %v3096, 0
    %3110 = vmatprep.subr.bf16.mxu0 0
    %3111 = vmatpush1.bf16.msra.mxu0 0
    %3112 = vmatprep.subr.bf16.mxu0 0
    %3113 = vmatpush1.bf16.msra.mxu0 0
    %3114 = vmatprep.subr.bf16.mxu0 0
    %3115 = vmatpush1.bf16.msra.mxu0 0
    %3116 = vmatprep.subr.bf16.mxu0 0
    %3117 = vmatpush1.bf16.msra.mxu0 0
    %3118 = vmatprep.subr.bf16.mxu0 0
    %3119 = vmatpush1.bf16.msra.mxu0 0
    %3120 = vmatprep.subr.bf16.mxu0 0
    %3121 = vmatpush1.bf16.msra.mxu0 0
    %3122 = vmatprep.subr.bf16.mxu0 0
    %3123 = vmatpush1.bf16.msra.mxu0 0
    %3124 = vmatprep.subr.bf16.mxu0 %v3104
    %3125 = vmatpush1.bf16.msra.mxu0 %v3102
    %3126 = vmatprep.subr.bf16.mxu0 0
    %3127 = vmatpush2.bf16.msra.mxu0 0
    %3128 = vmatprep.subr.bf16.mxu0 0
    %3129 = vmatpush2.bf16.msra.mxu0 0
    %3130 = vmatprep.subr.bf16.mxu0 0
    %3131 = vmatpush2.bf16.msra.mxu0 0
    %3132 = vmatprep.subr.bf16.mxu0 0
    %3133 = vmatpush2.bf16.msra.mxu0 0
    %3134 = vmatprep.subr.bf16.mxu0 0
    %3135 = vmatpush2.bf16.msra.mxu0 0
    %3136 = vmatprep.subr.bf16.mxu0 0
    %3137 = vmatpush2.bf16.msra.mxu0 0
    %3138 = vmatprep.subr.bf16.mxu0 0
    %3139 = vmatpush2.bf16.msra.mxu0 0
    %3140 = vmatprep.subr.bf16.mxu0 0
    %3141 = vmatpush2.bf16.msra.mxu0 0
    %3142 = vmatprep.mubr.bf16.mxu0 0
    %3143 = vmatmul.mubr.bf16.gmra.mxu0 %v3099
    %v3144 = vpop.f32.mrf.mxu0
    %v3145 = vadd.f32 %v627, %v3144
    %v3146 = vpop.f32.mrf.mxu0
    %v3147 = vadd.f32 %v630, %v3146
    %v3148 = vpop.f32.mrf.mxu0
    %v3149 = vpop.f32.mrf.mxu0
    %3150 = vdwg.mxu0
    %3151 = vmatprep.subr.bf16.mxu0 0
    %3152 = vmatpush1.bf16.msra.mxu0 0
    %3153 = vmatprep.subr.bf16.mxu0 0
    %3154 = vmatpush1.bf16.msra.mxu0 0
    %3155 = vmatprep.subr.bf16.mxu0 0
    %3156 = vmatpush1.bf16.msra.mxu0 0
    %3157 = vmatprep.subr.bf16.mxu0 0
    %3158 = vmatpush1.bf16.msra.mxu0 0
    %3159 = vmatprep.subr.bf16.mxu0 0
    %3160 = vmatpush1.bf16.msra.mxu0 0
    %3161 = vmatprep.subr.bf16.mxu0 0
    %3162 = vmatpush1.bf16.msra.mxu0 0
    %3163 = vmatprep.subr.bf16.mxu0 0
    %3164 = vmatpush1.bf16.msra.mxu0 0
    %3165 = vmatprep.subr.bf16.mxu0 %v3108
    %3166 = vmatpush1.bf16.msra.mxu0 %v3106
    %3167 = vmatprep.subr.bf16.mxu0 0
    %3168 = vmatpush2.bf16.msra.mxu0 0
    %3169 = vmatprep.subr.bf16.mxu0 0
    %3170 = vmatpush2.bf16.msra.mxu0 0
    %3171 = vmatprep.subr.bf16.mxu0 0
    %3172 = vmatpush2.bf16.msra.mxu0 0
    %3173 = vmatprep.subr.bf16.mxu0 0
    %3174 = vmatpush2.bf16.msra.mxu0 0
    %3175 = vmatprep.subr.bf16.mxu0 0
    %3176 = vmatpush2.bf16.msra.mxu0 0
    %3177 = vmatprep.subr.bf16.mxu0 0
    %3178 = vmatpush2.bf16.msra.mxu0 0
    %3179 = vmatprep.subr.bf16.mxu0 0
    %3180 = vmatpush2.bf16.msra.mxu0 0
    %3181 = vmatprep.subr.bf16.mxu0 0
    %3182 = vmatpush2.bf16.msra.mxu0 0
    %3183 = vmatprep.mubr.bf16.mxu0 0
    %3184 = vmatmul.mubr.bf16.gmra.mxu0 %v3099
    %v3185 = vpop.f32.mrf.mxu0
    %v3186 = vadd.f32 %v627, %v3185
    %v3187 = vpop.f32.mrf.mxu0
    %v3188 = vadd.f32 %v630, %v3187
    %v3189 = vpop.f32.mrf.mxu0
    %v3190 = vpop.f32.mrf.mxu0
    %3191 = vdwg.mxu0
    %3193 = vrot.lane.b32.xlu0 %v3145, 96
    %v3194 = vpop.permute.xlu0 %3193
    %3196 = vrot.lane.b32.xlu0 %v3145, 64
    %v3197 = vpop.permute.xlu0 %3196
    %3199 = vrot.lane.b32.xlu0 %v3145, 32
    %v3200 = vpop.permute.xlu0 %3199
    %3203 = vrot.lane.b32.xlu0 %v3147, 96
    %v3204 = vpop.permute.xlu0 %3203
    %3206 = vrot.lane.b32.xlu0 %v3147, 64
    %v3207 = vpop.permute.xlu0 %3206
    %3209 = vrot.lane.b32.xlu0 %v3147, 32
    %v3210 = vpop.permute.xlu0 %3209
    %3213 = vrot.lane.b32.xlu0 %v3186, 96
    %v3214 = vpop.permute.xlu0 %3213
    %3216 = vrot.lane.b32.xlu0 %v3186, 64
    %v3217 = vpop.permute.xlu0 %3216
    %3219 = vrot.lane.b32.xlu0 %v3186, 32
    %v3220 = vpop.permute.xlu0 %3219
    %3223 = vrot.lane.b32.xlu0 %v3188, 96
    %v3224 = vpop.permute.xlu0 %3223
    %3226 = vrot.lane.b32.xlu0 %v3188, 64
    %v3227 = vpop.permute.xlu0 %3226
    %3229 = vrot.lane.b32.xlu0 %v3188, 32
    %v3230 = vpop.permute.xlu0 %3229
    %v3232 = vcombine.low %v3145, %v3197
    %v3233 = vcombine.high %v3145, %v3197
    %v3235 = vunpack.c.l.s4 1983009808
    %v3236 = vunpack.c.0.s8 %v3235
    %v3237 = vlaneseq
    %v3238 = vshrl.u32 %v3237, 7
    %v3239 = vsub.s32 %v3236, %v3238
    %v3240 = vrot.slane %v3232, %v3239
    %v3242 = vunpack.c.l.s4 1983009808
    %v3243 = vunpack.c.0.s8 %v3242
    %v3244 = vlaneseq
    %v3245 = vshrl.u32 %v3244, 7
    %v3246 = vsub.s32 %v3243, %v3245
    %v3247 = vrot.slane %v3233, %v3246
    %v3248 = vcombine.low %v3194, %v3200
    %v3249 = vcombine.high %v3194, %v3200
    %v3251 = vunpack.c.l.s4 1983009808
    %v3252 = vunpack.c.0.s8 %v3251
    %v3253 = vlaneseq
    %v3254 = vshrl.u32 %v3253, 7
    %v3255 = vsub.s32 %v3252, %v3254
    %v3256 = vrot.slane %v3248, %v3255
    %v3258 = vunpack.c.l.s4 1983009808
    %v3259 = vunpack.c.0.s8 %v3258
    %v3260 = vlaneseq
    %v3261 = vshrl.u32 %v3260, 7
    %v3262 = vsub.s32 %v3259, %v3261
    %v3263 = vrot.slane %v3249, %v3262
    %v3264 = vcombine.low %v3147, %v3207
    %v3265 = vcombine.high %v3147, %v3207
    %v3267 = vunpack.c.l.s4 1983009808
    %v3268 = vunpack.c.0.s8 %v3267
    %v3269 = vlaneseq
    %v3270 = vshrl.u32 %v3269, 7
    %v3271 = vsub.s32 %v3268, %v3270
    %v3272 = vrot.slane %v3264, %v3271
    %v3274 = vunpack.c.l.s4 1983009808
    %v3275 = vunpack.c.0.s8 %v3274
    %v3276 = vlaneseq
    %v3277 = vshrl.u32 %v3276, 7
    %v3278 = vsub.s32 %v3275, %v3277
    %v3279 = vrot.slane %v3265, %v3278
    %v3280 = vcombine.low %v3204, %v3210
    %v3281 = vcombine.high %v3204, %v3210
    %v3283 = vunpack.c.l.s4 1983009808
    %v3284 = vunpack.c.0.s8 %v3283
    %v3285 = vlaneseq
    %v3286 = vshrl.u32 %v3285, 7
    %v3287 = vsub.s32 %v3284, %v3286
    %v3288 = vrot.slane %v3280, %v3287
    %v3290 = vunpack.c.l.s4 1983009808
    %v3291 = vunpack.c.0.s8 %v3290
    %v3292 = vlaneseq
    %v3293 = vshrl.u32 %v3292, 7
    %v3294 = vsub.s32 %v3291, %v3293
    %v3295 = vrot.slane %v3281, %v3294
    %v3296 = vcombine.low %v3240, %v3256
    %v3297 = vcombine.high %v3240, %v3256
    %v3299 = vunpack.c.l.s4 1934713408
    %v3300 = vunpack.c.0.s8 %v3299
    %v3301 = vlaneseq
    %v3302 = vshrl.u32 %v3301, 7
    %v3303 = vsub.s32 %v3300, %v3302
    %v3304 = vrot.slane %v3296, %v3303
    %v3306 = vunpack.c.l.s4 1934713408
    %v3307 = vunpack.c.0.s8 %v3306
    %v3308 = vlaneseq
    %v3309 = vshrl.u32 %v3308, 7
    %v3310 = vsub.s32 %v3307, %v3309
    %v3311 = vrot.slane %v3297, %v3310
    %v3312 = vcombine.low %v3247, %v3263
    %v3313 = vcombine.high %v3247, %v3263
    %v3315 = vunpack.c.l.s4 1934713408
    %v3316 = vunpack.c.0.s8 %v3315
    %v3317 = vlaneseq
    %v3318 = vshrl.u32 %v3317, 7
    %v3319 = vsub.s32 %v3316, %v3318
    %v3320 = vrot.slane %v3312, %v3319
    %v3322 = vunpack.c.l.s4 1934713408
    %v3323 = vunpack.c.0.s8 %v3322
    %v3324 = vlaneseq
    %v3325 = vshrl.u32 %v3324, 7
    %v3326 = vsub.s32 %v3323, %v3325
    %v3327 = vrot.slane %v3313, %v3326
    %v3328 = vcombine.low %v3272, %v3288
    %v3329 = vcombine.high %v3272, %v3288
    %v3331 = vunpack.c.l.s4 1934713408
    %v3332 = vunpack.c.0.s8 %v3331
    %v3333 = vlaneseq
    %v3334 = vshrl.u32 %v3333, 7
    %v3335 = vsub.s32 %v3332, %v3334
    %v3336 = vrot.slane %v3328, %v3335
    %v3338 = vunpack.c.l.s4 1934713408
    %v3339 = vunpack.c.0.s8 %v3338
    %v3340 = vlaneseq
    %v3341 = vshrl.u32 %v3340, 7
    %v3342 = vsub.s32 %v3339, %v3341
    %v3343 = vrot.slane %v3329, %v3342
    %v3344 = vcombine.low %v3279, %v3295
    %v3345 = vcombine.high %v3279, %v3295
    %v3347 = vunpack.c.l.s4 1934713408
    %v3348 = vunpack.c.0.s8 %v3347
    %v3349 = vlaneseq
    %v3350 = vshrl.u32 %v3349, 7
    %v3351 = vsub.s32 %v3348, %v3350
    %v3352 = vrot.slane %v3344, %v3351
    %v3354 = vunpack.c.l.s4 1934713408
    %v3355 = vunpack.c.0.s8 %v3354
    %v3356 = vlaneseq
    %v3357 = vshrl.u32 %v3356, 7
    %v3358 = vsub.s32 %v3355, %v3357
    %v3359 = vrot.slane %v3345, %v3358
    %v3360 = vcombine.low %v3304, %v3336
    %v3361 = vcombine.high %v3304, %v3336
    %v3362 = vcombine.low %v3311, %v3343
    %v3363 = vcombine.high %v3311, %v3343
    %v3364 = vcombine.low %v3320, %v3352
    %v3365 = vcombine.high %v3320, %v3352
    %v3366 = vcombine.low %v3327, %v3359
    %v3367 = vcombine.high %v3327, %v3359
    %v3368 = vcombine.low %v3186, %v3217
    %v3369 = vcombine.high %v3186, %v3217
    %v3371 = vunpack.c.l.s4 1983009808
    %v3372 = vunpack.c.0.s8 %v3371
    %v3373 = vlaneseq
    %v3374 = vshrl.u32 %v3373, 7
    %v3375 = vsub.s32 %v3372, %v3374
    %v3376 = vrot.slane %v3368, %v3375
    %v3378 = vunpack.c.l.s4 1983009808
    %v3379 = vunpack.c.0.s8 %v3378
    %v3380 = vlaneseq
    %v3381 = vshrl.u32 %v3380, 7
    %v3382 = vsub.s32 %v3379, %v3381
    %v3383 = vrot.slane %v3369, %v3382
    %v3384 = vcombine.low %v3214, %v3220
    %v3385 = vcombine.high %v3214, %v3220
    %v3387 = vunpack.c.l.s4 1983009808
    %v3388 = vunpack.c.0.s8 %v3387
    %v3389 = vlaneseq
    %v3390 = vshrl.u32 %v3389, 7
    %v3391 = vsub.s32 %v3388, %v3390
    %v3392 = vrot.slane %v3384, %v3391
    %v3394 = vunpack.c.l.s4 1983009808
    %v3395 = vunpack.c.0.s8 %v3394
    %v3396 = vlaneseq
    %v3397 = vshrl.u32 %v3396, 7
    %v3398 = vsub.s32 %v3395, %v3397
    %v3399 = vrot.slane %v3385, %v3398
    %v3400 = vcombine.low %v3188, %v3227
    %v3401 = vcombine.high %v3188, %v3227
    %v3403 = vunpack.c.l.s4 1983009808
    %v3404 = vunpack.c.0.s8 %v3403
    %v3405 = vlaneseq
    %v3406 = vshrl.u32 %v3405, 7
    %v3407 = vsub.s32 %v3404, %v3406
    %v3408 = vrot.slane %v3400, %v3407
    %v3410 = vunpack.c.l.s4 1983009808
    %v3411 = vunpack.c.0.s8 %v3410
    %v3412 = vlaneseq
    %v3413 = vshrl.u32 %v3412, 7
    %v3414 = vsub.s32 %v3411, %v3413
    %v3415 = vrot.slane %v3401, %v3414
    %v3416 = vcombine.low %v3224, %v3230
    %v3417 = vcombine.high %v3224, %v3230
    %v3419 = vunpack.c.l.s4 1983009808
    %v3420 = vunpack.c.0.s8 %v3419
    %v3421 = vlaneseq
    %v3422 = vshrl.u32 %v3421, 7
    %v3423 = vsub.s32 %v3420, %v3422
    %v3424 = vrot.slane %v3416, %v3423
    %v3426 = vunpack.c.l.s4 1983009808
    %v3427 = vunpack.c.0.s8 %v3426
    %v3428 = vlaneseq
    %v3429 = vshrl.u32 %v3428, 7
    %v3430 = vsub.s32 %v3427, %v3429
    %v3431 = vrot.slane %v3417, %v3430
    %v3432 = vcombine.low %v3376, %v3392
    %v3433 = vcombine.high %v3376, %v3392
    %v3435 = vunpack.c.l.s4 1934713408
    %v3436 = vunpack.c.0.s8 %v3435
    %v3437 = vlaneseq
    %v3438 = vshrl.u32 %v3437, 7
    %v3439 = vsub.s32 %v3436, %v3438
    %v3440 = vrot.slane %v3432, %v3439
    %v3442 = vunpack.c.l.s4 1934713408
    %v3443 = vunpack.c.0.s8 %v3442
    %v3444 = vlaneseq
    %v3445 = vshrl.u32 %v3444, 7
    %v3446 = vsub.s32 %v3443, %v3445
    %v3447 = vrot.slane %v3433, %v3446
    %v3448 = vcombine.low %v3383, %v3399
    %v3449 = vcombine.high %v3383, %v3399
    %v3451 = vunpack.c.l.s4 1934713408
    %v3452 = vunpack.c.0.s8 %v3451
    %v3453 = vlaneseq
    %v3454 = vshrl.u32 %v3453, 7
    %v3455 = vsub.s32 %v3452, %v3454
    %v3456 = vrot.slane %v3448, %v3455
    %v3458 = vunpack.c.l.s4 1934713408
    %v3459 = vunpack.c.0.s8 %v3458
    %v3460 = vlaneseq
    %v3461 = vshrl.u32 %v3460, 7
    %v3462 = vsub.s32 %v3459, %v3461
    %v3463 = vrot.slane %v3449, %v3462
    %v3464 = vcombine.low %v3408, %v3424
    %v3465 = vcombine.high %v3408, %v3424
    %v3467 = vunpack.c.l.s4 1934713408
    %v3468 = vunpack.c.0.s8 %v3467
    %v3469 = vlaneseq
    %v3470 = vshrl.u32 %v3469, 7
    %v3471 = vsub.s32 %v3468, %v3470
    %v3472 = vrot.slane %v3464, %v3471
    %v3474 = vunpack.c.l.s4 1934713408
    %v3475 = vunpack.c.0.s8 %v3474
    %v3476 = vlaneseq
    %v3477 = vshrl.u32 %v3476, 7
    %v3478 = vsub.s32 %v3475, %v3477
    %v3479 = vrot.slane %v3465, %v3478
    %v3480 = vcombine.low %v3415, %v3431
    %v3481 = vcombine.high %v3415, %v3431
    %v3483 = vunpack.c.l.s4 1934713408
    %v3484 = vunpack.c.0.s8 %v3483
    %v3485 = vlaneseq
    %v3486 = vshrl.u32 %v3485, 7
    %v3487 = vsub.s32 %v3484, %v3486
    %v3488 = vrot.slane %v3480, %v3487
    %v3490 = vunpack.c.l.s4 1934713408
    %v3491 = vunpack.c.0.s8 %v3490
    %v3492 = vlaneseq
    %v3493 = vshrl.u32 %v3492, 7
    %v3494 = vsub.s32 %v3491, %v3493
    %v3495 = vrot.slane %v3481, %v3494
    %v3496 = vcombine.low %v3440, %v3472
    %v3497 = vcombine.high %v3440, %v3472
    %v3498 = vcombine.low %v3447, %v3479
    %v3499 = vcombine.high %v3447, %v3479
    %v3500 = vcombine.low %v3456, %v3488
    %v3501 = vcombine.high %v3456, %v3488
    %v3502 = vcombine.low %v3463, %v3495
    %v3503 = vcombine.high %v3463, %v3495
    %v3504 = vcombine.low %v2589, %v2593
    %v3506 = vunpack.c.l.s4 1983009808
    %v3507 = vunpack.c.0.s8 %v3506
    %v3508 = vlaneseq
    %v3509 = vshrl.u32 %v3508, 7
    %v3510 = vsub.s32 %v3507, %v3509
    %v3511 = vrot.slane %v3504, %v3510
    %v3512 = vcombine.low %v2591, %v2595
    %v3514 = vunpack.c.l.s4 1983009808
    %v3515 = vunpack.c.0.s8 %v3514
    %v3516 = vlaneseq
    %v3517 = vshrl.u32 %v3516, 7
    %v3518 = vsub.s32 %v3515, %v3517
    %v3519 = vrot.slane %v3512, %v3518
    %v3520 = vcombine.low %v3511, %v3519
    %v3521 = vcombine.high %v3511, %v3519
    %v3523 = vunpack.c.l.s4 1934713408
    %v3524 = vunpack.c.0.s8 %v3523
    %v3525 = vlaneseq
    %v3526 = vshrl.u32 %v3525, 7
    %v3527 = vsub.s32 %v3524, %v3526
    %v3528 = vrot.slane %v3520, %v3527
    %v3530 = vunpack.c.l.s4 1934713408
    %v3531 = vunpack.c.0.s8 %v3530
    %v3532 = vlaneseq
    %v3533 = vshrl.u32 %v3532, 7
    %v3534 = vsub.s32 %v3531, %v3533
    %v3535 = vrot.slane %v3521, %v3534
    %v3536 = vcombine.high %v3528, 0
    %v3537 = vcombine.high %v3535, 0
    %v3538 = vcombine.low %v2590, %v2594
    %v3540 = vunpack.c.l.s4 1983009808
    %v3541 = vunpack.c.0.s8 %v3540
    %v3542 = vlaneseq
    %v3543 = vshrl.u32 %v3542, 7
    %v3544 = vsub.s32 %v3541, %v3543
    %v3545 = vrot.slane %v3538, %v3544
    %v3546 = vcombine.low %v2592, %v2596
    %v3548 = vunpack.c.l.s4 1983009808
    %v3549 = vunpack.c.0.s8 %v3548
    %v3550 = vlaneseq
    %v3551 = vshrl.u32 %v3550, 7
    %v3552 = vsub.s32 %v3549, %v3551
    %v3553 = vrot.slane %v3546, %v3552
    %v3554 = vcombine.low %v3545, %v3553
    %v3555 = vcombine.high %v3545, %v3553
    %v3557 = vunpack.c.l.s4 1934713408
    %v3558 = vunpack.c.0.s8 %v3557
    %v3559 = vlaneseq
    %v3560 = vshrl.u32 %v3559, 7
    %v3561 = vsub.s32 %v3558, %v3560
    %v3562 = vrot.slane %v3554, %v3561
    %v3564 = vunpack.c.l.s4 1934713408
    %v3565 = vunpack.c.0.s8 %v3564
    %v3566 = vlaneseq
    %v3567 = vshrl.u32 %v3566, 7
    %v3568 = vsub.s32 %v3565, %v3567
    %v3569 = vrot.slane %v3555, %v3568
    %v3570 = vcombine.high %v3562, 0
    %v3571 = vcombine.high %v3569, 0
    %v3572 = vcombine.low %v2597, %v2601
    %v3574 = vunpack.c.l.s4 1983009808
    %v3575 = vunpack.c.0.s8 %v3574
    %v3576 = vlaneseq
    %v3577 = vshrl.u32 %v3576, 7
    %v3578 = vsub.s32 %v3575, %v3577
    %v3579 = vrot.slane %v3572, %v3578
    %v3580 = vcombine.low %v2599, %v2603
    %v3582 = vunpack.c.l.s4 1983009808
    %v3583 = vunpack.c.0.s8 %v3582
    %v3584 = vlaneseq
    %v3585 = vshrl.u32 %v3584, 7
    %v3586 = vsub.s32 %v3583, %v3585
    %v3587 = vrot.slane %v3580, %v3586
    %v3588 = vcombine.low %v3579, %v3587
    %v3589 = vcombine.high %v3579, %v3587
    %v3591 = vunpack.c.l.s4 1934713408
    %v3592 = vunpack.c.0.s8 %v3591
    %v3593 = vlaneseq
    %v3594 = vshrl.u32 %v3593, 7
    %v3595 = vsub.s32 %v3592, %v3594
    %v3596 = vrot.slane %v3588, %v3595
    %v3598 = vunpack.c.l.s4 1934713408
    %v3599 = vunpack.c.0.s8 %v3598
    %v3600 = vlaneseq
    %v3601 = vshrl.u32 %v3600, 7
    %v3602 = vsub.s32 %v3599, %v3601
    %v3603 = vrot.slane %v3589, %v3602
    %v3604 = vcombine.high %v3596, 0
    %v3605 = vcombine.high %v3603, 0
    %v3606 = vcombine.low %v2598, %v2602
    %v3608 = vunpack.c.l.s4 1983009808
    %v3609 = vunpack.c.0.s8 %v3608
    %v3610 = vlaneseq
    %v3611 = vshrl.u32 %v3610, 7
    %v3612 = vsub.s32 %v3609, %v3611
    %v3613 = vrot.slane %v3606, %v3612
    %v3614 = vcombine.low %v2600, %v2604
    %v3616 = vunpack.c.l.s4 1983009808
    %v3617 = vunpack.c.0.s8 %v3616
    %v3618 = vlaneseq
    %v3619 = vshrl.u32 %v3618, 7
    %v3620 = vsub.s32 %v3617, %v3619
    %v3621 = vrot.slane %v3614, %v3620
    %v3622 = vcombine.low %v3613, %v3621
    %v3623 = vcombine.high %v3613, %v3621
    %v3625 = vunpack.c.l.s4 1934713408
    %v3626 = vunpack.c.0.s8 %v3625
    %v3627 = vlaneseq
    %v3628 = vshrl.u32 %v3627, 7
    %v3629 = vsub.s32 %v3626, %v3628
    %v3630 = vrot.slane %v3622, %v3629
    %v3632 = vunpack.c.l.s4 1934713408
    %v3633 = vunpack.c.0.s8 %v3632
    %v3634 = vlaneseq
    %v3635 = vshrl.u32 %v3634, 7
    %v3636 = vsub.s32 %v3633, %v3635
    %v3637 = vrot.slane %v3623, %v3636
    %v3638 = vcombine.high %v3630, 0
    %v3639 = vcombine.high %v3637, 0
    %v3642 = vpack.i.b16 %v3562, %v3528
    %v3644 = vshrl.u32 %v3528, 16
    %v3645 = vshrl.u32 %v3562, 16
    %v3646 = vpack.i.b16 %v3645, %v3644
    %v3650 = vpack.i.b16 %v3570, %v3536
    %v3652 = vshrl.u32 %v3536, 16
    %v3653 = vshrl.u32 %v3570, 16
    %v3654 = vpack.i.b16 %v3653, %v3652
    %v3658 = vpack.i.b16 %v3569, %v3535
    %v3660 = vshrl.u32 %v3535, 16
    %v3661 = vshrl.u32 %v3569, 16
    %v3662 = vpack.i.b16 %v3661, %v3660
    %v3666 = vpack.i.b16 %v3571, %v3537
    %v3668 = vshrl.u32 %v3537, 16
    %v3669 = vshrl.u32 %v3571, 16
    %v3670 = vpack.i.b16 %v3669, %v3668
    %v3674 = vpack.i.b16 %v3630, %v3596
    %v3676 = vshrl.u32 %v3596, 16
    %v3677 = vshrl.u32 %v3630, 16
    %v3678 = vpack.i.b16 %v3677, %v3676
    %v3682 = vpack.i.b16 %v3638, %v3604
    %v3684 = vshrl.u32 %v3604, 16
    %v3685 = vshrl.u32 %v3638, 16
    %v3686 = vpack.i.b16 %v3685, %v3684
    %v3690 = vpack.i.b16 %v3637, %v3603
    %v3692 = vshrl.u32 %v3603, 16
    %v3693 = vshrl.u32 %v3637, 16
    %v3694 = vpack.i.b16 %v3693, %v3692
    %v3698 = vpack.i.b16 %v3639, %v3605
    %v3700 = vshrl.u32 %v3605, 16
    %v3701 = vshrl.u32 %v3639, 16
    %v3702 = vpack.i.b16 %v3701, %v3700
    %v3704 = vcombine.low %v3642, %v3658
    %v3706 = vunpack.c.l.s4 1983009808
    %v3707 = vunpack.c.0.s8 %v3706
    %v3708 = vlaneseq
    %v3709 = vshrl.u32 %v3708, 7
    %v3710 = vsub.s32 %v3707, %v3709
    %v3711 = vrot.slane %v3704, %v3710
    %v3712 = vcombine.low %v3650, %v3666
    %v3714 = vunpack.c.l.s4 1983009808
    %v3715 = vunpack.c.0.s8 %v3714
    %v3716 = vlaneseq
    %v3717 = vshrl.u32 %v3716, 7
    %v3718 = vsub.s32 %v3715, %v3717
    %v3719 = vrot.slane %v3712, %v3718
    %v3720 = vcombine.low %v3711, %v3719
    %v3721 = vcombine.high %v3711, %v3719
    %v3723 = vunpack.c.l.s4 1934713408
    %v3724 = vunpack.c.0.s8 %v3723
    %v3725 = vlaneseq
    %v3726 = vshrl.u32 %v3725, 7
    %v3727 = vsub.s32 %v3724, %v3726
    %v3728 = vrot.slane %v3720, %v3727
    %v3730 = vunpack.c.l.s4 1934713408
    %v3731 = vunpack.c.0.s8 %v3730
    %v3732 = vlaneseq
    %v3733 = vshrl.u32 %v3732, 7
    %v3734 = vsub.s32 %v3731, %v3733
    %v3735 = vrot.slane %v3721, %v3734
    %v3736 = vcombine.high %v3728, 0
    %v3737 = vcombine.high %v3735, 0
    %v3738 = vcombine.low %v3646, %v3662
    %v3740 = vunpack.c.l.s4 1983009808
    %v3741 = vunpack.c.0.s8 %v3740
    %v3742 = vlaneseq
    %v3743 = vshrl.u32 %v3742, 7
    %v3744 = vsub.s32 %v3741, %v3743
    %v3745 = vrot.slane %v3738, %v3744
    %v3746 = vcombine.low %v3654, %v3670
    %v3748 = vunpack.c.l.s4 1983009808
    %v3749 = vunpack.c.0.s8 %v3748
    %v3750 = vlaneseq
    %v3751 = vshrl.u32 %v3750, 7
    %v3752 = vsub.s32 %v3749, %v3751
    %v3753 = vrot.slane %v3746, %v3752
    %v3754 = vcombine.low %v3745, %v3753
    %v3755 = vcombine.high %v3745, %v3753
    %v3757 = vunpack.c.l.s4 1934713408
    %v3758 = vunpack.c.0.s8 %v3757
    %v3759 = vlaneseq
    %v3760 = vshrl.u32 %v3759, 7
    %v3761 = vsub.s32 %v3758, %v3760
    %v3762 = vrot.slane %v3754, %v3761
    %v3764 = vunpack.c.l.s4 1934713408
    %v3765 = vunpack.c.0.s8 %v3764
    %v3766 = vlaneseq
    %v3767 = vshrl.u32 %v3766, 7
    %v3768 = vsub.s32 %v3765, %v3767
    %v3769 = vrot.slane %v3755, %v3768
    %v3770 = vcombine.high %v3762, 0
    %v3771 = vcombine.high %v3769, 0
    %v3772 = vcombine.low %v3674, %v3690
    %v3774 = vunpack.c.l.s4 1983009808
    %v3775 = vunpack.c.0.s8 %v3774
    %v3776 = vlaneseq
    %v3777 = vshrl.u32 %v3776, 7
    %v3778 = vsub.s32 %v3775, %v3777
    %v3779 = vrot.slane %v3772, %v3778
    %v3780 = vcombine.low %v3682, %v3698
    %v3782 = vunpack.c.l.s4 1983009808
    %v3783 = vunpack.c.0.s8 %v3782
    %v3784 = vlaneseq
    %v3785 = vshrl.u32 %v3784, 7
    %v3786 = vsub.s32 %v3783, %v3785
    %v3787 = vrot.slane %v3780, %v3786
    %v3788 = vcombine.low %v3779, %v3787
    %v3789 = vcombine.high %v3779, %v3787
    %v3791 = vunpack.c.l.s4 1934713408
    %v3792 = vunpack.c.0.s8 %v3791
    %v3793 = vlaneseq
    %v3794 = vshrl.u32 %v3793, 7
    %v3795 = vsub.s32 %v3792, %v3794
    %v3796 = vrot.slane %v3788, %v3795
    %v3798 = vunpack.c.l.s4 1934713408
    %v3799 = vunpack.c.0.s8 %v3798
    %v3800 = vlaneseq
    %v3801 = vshrl.u32 %v3800, 7
    %v3802 = vsub.s32 %v3799, %v3801
    %v3803 = vrot.slane %v3789, %v3802
    %v3804 = vcombine.high %v3796, 0
    %v3805 = vcombine.high %v3803, 0
    %v3806 = vcombine.low %v3678, %v3694
    %v3808 = vunpack.c.l.s4 1983009808
    %v3809 = vunpack.c.0.s8 %v3808
    %v3810 = vlaneseq
    %v3811 = vshrl.u32 %v3810, 7
    %v3812 = vsub.s32 %v3809, %v3811
    %v3813 = vrot.slane %v3806, %v3812
    %v3814 = vcombine.low %v3686, %v3702
    %v3816 = vunpack.c.l.s4 1983009808
    %v3817 = vunpack.c.0.s8 %v3816
    %v3818 = vlaneseq
    %v3819 = vshrl.u32 %v3818, 7
    %v3820 = vsub.s32 %v3817, %v3819
    %v3821 = vrot.slane %v3814, %v3820
    %v3822 = vcombine.low %v3813, %v3821
    %v3823 = vcombine.high %v3813, %v3821
    %v3825 = vunpack.c.l.s4 1934713408
    %v3826 = vunpack.c.0.s8 %v3825
    %v3827 = vlaneseq
    %v3828 = vshrl.u32 %v3827, 7
    %v3829 = vsub.s32 %v3826, %v3828
    %v3830 = vrot.slane %v3822, %v3829
    %v3832 = vunpack.c.l.s4 1934713408
    %v3833 = vunpack.c.0.s8 %v3832
    %v3834 = vlaneseq
    %v3835 = vshrl.u32 %v3834, 7
    %v3836 = vsub.s32 %v3833, %v3835
    %v3837 = vrot.slane %v3823, %v3836
    %v3838 = vcombine.high %v3830, 0
    %v3839 = vcombine.high %v3837, 0
    %v3842 = vpack.i.b16 %v3762, %v3728
    %v3843 = vshrl.u32 %v3728, 16
    %v3844 = vshrl.u32 %v3762, 16
    %v3845 = vpack.i.b16 %v3844, %v3843
    %v3848 = vpack.i.b16 %v3770, %v3736
    %v3849 = vshrl.u32 %v3736, 16
    %v3850 = vshrl.u32 %v3770, 16
    %v3851 = vpack.i.b16 %v3850, %v3849
    %v3854 = vpack.i.b16 %v3769, %v3735
    %v3855 = vshrl.u32 %v3735, 16
    %v3856 = vshrl.u32 %v3769, 16
    %v3857 = vpack.i.b16 %v3856, %v3855
    %v3860 = vpack.i.b16 %v3771, %v3737
    %v3861 = vshrl.u32 %v3737, 16
    %v3862 = vshrl.u32 %v3771, 16
    %v3863 = vpack.i.b16 %v3862, %v3861
    %v3866 = vpack.i.b16 %v3830, %v3796
    %v3867 = vshrl.u32 %v3796, 16
    %v3868 = vshrl.u32 %v3830, 16
    %v3869 = vpack.i.b16 %v3868, %v3867
    %v3872 = vpack.i.b16 %v3838, %v3804
    %v3873 = vshrl.u32 %v3804, 16
    %v3874 = vshrl.u32 %v3838, 16
    %v3875 = vpack.i.b16 %v3874, %v3873
    %v3878 = vpack.i.b16 %v3837, %v3803
    %v3879 = vshrl.u32 %v3803, 16
    %v3880 = vshrl.u32 %v3837, 16
    %v3881 = vpack.i.b16 %v3880, %v3879
    %v3884 = vpack.i.b16 %v3839, %v3805
    %v3885 = vshrl.u32 %v3805, 16
    %v3886 = vshrl.u32 %v3839, 16
    %v3887 = vpack.i.b16 %v3886, %v3885
    %v3888 = vunpack.c.l.b16 %v3845
    %v3889 = vpack.c.b16 %v3888, %v3888
    %3890 = vrot.lane.b32.xlu0 %v3889, 32
    %v3891 = vpop.permute.xlu0 %3890
    %v3892 = vunpack.c.l.b16 %v3848
    %v3893 = vpack.c.b16 %v3892, %v3892
    %3894 = vrot.lane.b32.xlu0 %v3893, 64
    %v3895 = vpop.permute.xlu0 %3894
    %v3896 = vunpack.c.l.b16 %v3851
    %v3897 = vpack.c.b16 %v3896, %v3896
    %3898 = vrot.lane.b32.xlu0 %v3897, 96
    %v3899 = vpop.permute.xlu0 %3898
    %v3900 = vunpack.c.l.b16 %v3857
    %v3901 = vpack.c.b16 %v3900, %v3900
    %3902 = vrot.lane.b32.xlu0 %v3901, 32
    %v3903 = vpop.permute.xlu0 %3902
    %v3904 = vunpack.c.l.b16 %v3860
    %v3905 = vpack.c.b16 %v3904, %v3904
    %3906 = vrot.lane.b32.xlu0 %v3905, 64
    %v3907 = vpop.permute.xlu0 %3906
    %v3908 = vunpack.c.l.b16 %v3863
    %v3909 = vpack.c.b16 %v3908, %v3908
    %3910 = vrot.lane.b32.xlu0 %v3909, 96
    %v3911 = vpop.permute.xlu0 %3910
    %v3912 = vunpack.c.l.b16 %v3869
    %v3913 = vpack.c.b16 %v3912, %v3912
    %3914 = vrot.lane.b32.xlu0 %v3913, 32
    %v3915 = vpop.permute.xlu0 %3914
    %v3916 = vunpack.c.l.b16 %v3872
    %v3917 = vpack.c.b16 %v3916, %v3916
    %3918 = vrot.lane.b32.xlu0 %v3917, 64
    %v3919 = vpop.permute.xlu0 %3918
    %v3920 = vunpack.c.l.b16 %v3875
    %v3921 = vpack.c.b16 %v3920, %v3920
    %3922 = vrot.lane.b32.xlu0 %v3921, 96
    %v3923 = vpop.permute.xlu0 %3922
    %v3924 = vunpack.c.l.b16 %v3881
    %v3925 = vpack.c.b16 %v3924, %v3924
    %3926 = vrot.lane.b32.xlu0 %v3925, 32
    %v3927 = vpop.permute.xlu0 %3926
    %v3928 = vunpack.c.l.b16 %v3884
    %v3929 = vpack.c.b16 %v3928, %v3928
    %3930 = vrot.lane.b32.xlu0 %v3929, 64
    %v3931 = vpop.permute.xlu0 %3930
    %v3932 = vunpack.c.l.b16 %v3887
    %v3933 = vpack.c.b16 %v3932, %v3932
    %3934 = vrot.lane.b32.xlu0 %v3933, 96
    %v3935 = vpop.permute.xlu0 %3934
    %v3938 = vsel %vm526, %v3842, %v3891
    %v3940 = vsel %vm530, %v3938, %v3895
    %v3942 = vsel %vm533, %v3940, %v3899
    %v3945 = vsel %vm526, %v3854, %v3903
    %v3947 = vsel %vm530, %v3945, %v3907
    %v3949 = vsel %vm533, %v3947, %v3911
    %v3952 = vsel %vm526, %v3866, %v3915
    %v3954 = vsel %vm530, %v3952, %v3919
    %v3956 = vsel %vm533, %v3954, %v3923
    %v3959 = vsel %vm526, %v3878, %v3927
    %v3961 = vsel %vm530, %v3959, %v3931
    %v3963 = vsel %vm533, %v3961, %v3935
    %v3965 = vsel %vm3097, %v49, 0
    %v3967 = vsel %vm3101, %v3942, 0
    %v3969 = vsel %vm3101, %v3949, 0
    %v3971 = vsel %vm3101, %v3956, 0
    %v3973 = vsel %vm3101, %v3963, 0
    %3975 = vmatprep.subr.bf16.mxu0 0
    %3976 = vmatpush1.bf16.msra.mxu0 0
    %3977 = vmatprep.subr.bf16.mxu0 0
    %3978 = vmatpush1.bf16.msra.mxu0 0
    %3979 = vmatprep.subr.bf16.mxu0 0
    %3980 = vmatpush1.bf16.msra.mxu0 0
    %3981 = vmatprep.subr.bf16.mxu0 0
    %3982 = vmatpush1.bf16.msra.mxu0 0
    %3983 = vmatprep.subr.bf16.mxu0 0
    %3984 = vmatpush1.bf16.msra.mxu0 0
    %3985 = vmatprep.subr.bf16.mxu0 0
    %3986 = vmatpush1.bf16.msra.mxu0 0
    %3987 = vmatprep.subr.bf16.mxu0 0
    %3988 = vmatpush1.bf16.msra.mxu0 0
    %3989 = vmatprep.subr.bf16.mxu0 %v3969
    %3990 = vmatpush1.bf16.msra.mxu0 %v3967
    %3991 = vmatprep.subr.bf16.mxu0 0
    %3992 = vmatpush2.bf16.msra.mxu0 0
    %3993 = vmatprep.subr.bf16.mxu0 0
    %3994 = vmatpush2.bf16.msra.mxu0 0
    %3995 = vmatprep.subr.bf16.mxu0 0
    %3996 = vmatpush2.bf16.msra.mxu0 0
    %3997 = vmatprep.subr.bf16.mxu0 0
    %3998 = vmatpush2.bf16.msra.mxu0 0
    %3999 = vmatprep.subr.bf16.mxu0 0
    %4000 = vmatpush2.bf16.msra.mxu0 0
    %4001 = vmatprep.subr.bf16.mxu0 0
    %4002 = vmatpush2.bf16.msra.mxu0 0
    %4003 = vmatprep.subr.bf16.mxu0 0
    %4004 = vmatpush2.bf16.msra.mxu0 0
    %4005 = vmatprep.subr.bf16.mxu0 0
    %4006 = vmatpush2.bf16.msra.mxu0 0
    %4007 = vmatprep.mubr.bf16.mxu0 0
    %4008 = vmatmul.mubr.bf16.gmra.mxu0 %v3965
    %v4009 = vpop.f32.mrf.mxu0
    %v4010 = vadd.f32 %v627, %v4009
    %v4011 = vpop.f32.mrf.mxu0
    %v4012 = vadd.f32 %v630, %v4011
    %v4013 = vpop.f32.mrf.mxu0
    %v4014 = vpop.f32.mrf.mxu0
    %4015 = vdwg.mxu0
    %4016 = vmatprep.subr.bf16.mxu0 0
    %4017 = vmatpush1.bf16.msra.mxu0 0
    %4018 = vmatprep.subr.bf16.mxu0 0
    %4019 = vmatpush1.bf16.msra.mxu0 0
    %4020 = vmatprep.subr.bf16.mxu0 0
    %4021 = vmatpush1.bf16.msra.mxu0 0
    %4022 = vmatprep.subr.bf16.mxu0 0
    %4023 = vmatpush1.bf16.msra.mxu0 0
    %4024 = vmatprep.subr.bf16.mxu0 0
    %4025 = vmatpush1.bf16.msra.mxu0 0
    %4026 = vmatprep.subr.bf16.mxu0 0
    %4027 = vmatpush1.bf16.msra.mxu0 0
    %4028 = vmatprep.subr.bf16.mxu0 0
    %4029 = vmatpush1.bf16.msra.mxu0 0
    %4030 = vmatprep.subr.bf16.mxu0 %v3973
    %4031 = vmatpush1.bf16.msra.mxu0 %v3971
    %4032 = vmatprep.subr.bf16.mxu0 0
    %4033 = vmatpush2.bf16.msra.mxu0 0
    %4034 = vmatprep.subr.bf16.mxu0 0
    %4035 = vmatpush2.bf16.msra.mxu0 0
    %4036 = vmatprep.subr.bf16.mxu0 0
    %4037 = vmatpush2.bf16.msra.mxu0 0
    %4038 = vmatprep.subr.bf16.mxu0 0
    %4039 = vmatpush2.bf16.msra.mxu0 0
    %4040 = vmatprep.subr.bf16.mxu0 0
    %4041 = vmatpush2.bf16.msra.mxu0 0
    %4042 = vmatprep.subr.bf16.mxu0 0
    %4043 = vmatpush2.bf16.msra.mxu0 0
    %4044 = vmatprep.subr.bf16.mxu0 0
    %4045 = vmatpush2.bf16.msra.mxu0 0
    %4046 = vmatprep.subr.bf16.mxu0 0
    %4047 = vmatpush2.bf16.msra.mxu0 0
    %4048 = vmatprep.mubr.bf16.mxu0 0
    %4049 = vmatmul.mubr.bf16.gmra.mxu0 %v3965
    %v4050 = vpop.f32.mrf.mxu0
    %v4051 = vadd.f32 %v627, %v4050
    %v4052 = vpop.f32.mrf.mxu0
    %v4053 = vadd.f32 %v630, %v4052
    %v4054 = vpop.f32.mrf.mxu0
    %v4055 = vpop.f32.mrf.mxu0
    %4056 = vdwg.mxu0
    %4058 = vrot.lane.b32.xlu0 %v4010, 96
    %v4059 = vpop.permute.xlu0 %4058
    %4061 = vrot.lane.b32.xlu0 %v4010, 64
    %v4062 = vpop.permute.xlu0 %4061
    %4064 = vrot.lane.b32.xlu0 %v4010, 32
    %v4065 = vpop.permute.xlu0 %4064
    %4068 = vrot.lane.b32.xlu0 %v4012, 96
    %v4069 = vpop.permute.xlu0 %4068
    %4071 = vrot.lane.b32.xlu0 %v4012, 64
    %v4072 = vpop.permute.xlu0 %4071
    %4074 = vrot.lane.b32.xlu0 %v4012, 32
    %v4075 = vpop.permute.xlu0 %4074
    %4078 = vrot.lane.b32.xlu0 %v4051, 96
    %v4079 = vpop.permute.xlu0 %4078
    %4081 = vrot.lane.b32.xlu0 %v4051, 64
    %v4082 = vpop.permute.xlu0 %4081
    %4084 = vrot.lane.b32.xlu0 %v4051, 32
    %v4085 = vpop.permute.xlu0 %4084
    %4088 = vrot.lane.b32.xlu0 %v4053, 96
    %v4089 = vpop.permute.xlu0 %4088
    %4091 = vrot.lane.b32.xlu0 %v4053, 64
    %v4092 = vpop.permute.xlu0 %4091
    %4094 = vrot.lane.b32.xlu0 %v4053, 32
    %v4095 = vpop.permute.xlu0 %4094
    %v4097 = vcombine.low %v4010, %v4062
    %v4098 = vcombine.high %v4010, %v4062
    %v4100 = vunpack.c.l.s4 1983009808
    %v4101 = vunpack.c.0.s8 %v4100
    %v4102 = vlaneseq
    %v4103 = vshrl.u32 %v4102, 7
    %v4104 = vsub.s32 %v4101, %v4103
    %v4105 = vrot.slane %v4097, %v4104
    %v4107 = vunpack.c.l.s4 1983009808
    %v4108 = vunpack.c.0.s8 %v4107
    %v4109 = vlaneseq
    %v4110 = vshrl.u32 %v4109, 7
    %v4111 = vsub.s32 %v4108, %v4110
    %v4112 = vrot.slane %v4098, %v4111
    %v4113 = vcombine.low %v4059, %v4065
    %v4114 = vcombine.high %v4059, %v4065
    %v4116 = vunpack.c.l.s4 1983009808
    %v4117 = vunpack.c.0.s8 %v4116
    %v4118 = vlaneseq
    %v4119 = vshrl.u32 %v4118, 7
    %v4120 = vsub.s32 %v4117, %v4119
    %v4121 = vrot.slane %v4113, %v4120
    %v4123 = vunpack.c.l.s4 1983009808
    %v4124 = vunpack.c.0.s8 %v4123
    %v4125 = vlaneseq
    %v4126 = vshrl.u32 %v4125, 7
    %v4127 = vsub.s32 %v4124, %v4126
    %v4128 = vrot.slane %v4114, %v4127
    %v4129 = vcombine.low %v4012, %v4072
    %v4130 = vcombine.high %v4012, %v4072
    %v4132 = vunpack.c.l.s4 1983009808
    %v4133 = vunpack.c.0.s8 %v4132
    %v4134 = vlaneseq
    %v4135 = vshrl.u32 %v4134, 7
    %v4136 = vsub.s32 %v4133, %v4135
    %v4137 = vrot.slane %v4129, %v4136
    %v4139 = vunpack.c.l.s4 1983009808
    %v4140 = vunpack.c.0.s8 %v4139
    %v4141 = vlaneseq
    %v4142 = vshrl.u32 %v4141, 7
    %v4143 = vsub.s32 %v4140, %v4142
    %v4144 = vrot.slane %v4130, %v4143
    %v4145 = vcombine.low %v4069, %v4075
    %v4146 = vcombine.high %v4069, %v4075
    %v4148 = vunpack.c.l.s4 1983009808
    %v4149 = vunpack.c.0.s8 %v4148
    %v4150 = vlaneseq
    %v4151 = vshrl.u32 %v4150, 7
    %v4152 = vsub.s32 %v4149, %v4151
    %v4153 = vrot.slane %v4145, %v4152
    %v4155 = vunpack.c.l.s4 1983009808
    %v4156 = vunpack.c.0.s8 %v4155
    %v4157 = vlaneseq
    %v4158 = vshrl.u32 %v4157, 7
    %v4159 = vsub.s32 %v4156, %v4158
    %v4160 = vrot.slane %v4146, %v4159
    %v4161 = vcombine.low %v4105, %v4121
    %v4162 = vcombine.high %v4105, %v4121
    %v4164 = vunpack.c.l.s4 1934713408
    %v4165 = vunpack.c.0.s8 %v4164
    %v4166 = vlaneseq
    %v4167 = vshrl.u32 %v4166, 7
    %v4168 = vsub.s32 %v4165, %v4167
    %v4169 = vrot.slane %v4161, %v4168
    %v4171 = vunpack.c.l.s4 1934713408
    %v4172 = vunpack.c.0.s8 %v4171
    %v4173 = vlaneseq
    %v4174 = vshrl.u32 %v4173, 7
    %v4175 = vsub.s32 %v4172, %v4174
    %v4176 = vrot.slane %v4162, %v4175
    %v4177 = vcombine.low %v4112, %v4128
    %v4178 = vcombine.high %v4112, %v4128
    %v4180 = vunpack.c.l.s4 1934713408
    %v4181 = vunpack.c.0.s8 %v4180
    %v4182 = vlaneseq
    %v4183 = vshrl.u32 %v4182, 7
    %v4184 = vsub.s32 %v4181, %v4183
    %v4185 = vrot.slane %v4177, %v4184
    %v4187 = vunpack.c.l.s4 1934713408
    %v4188 = vunpack.c.0.s8 %v4187
    %v4189 = vlaneseq
    %v4190 = vshrl.u32 %v4189, 7
    %v4191 = vsub.s32 %v4188, %v4190
    %v4192 = vrot.slane %v4178, %v4191
    %v4193 = vcombine.low %v4137, %v4153
    %v4194 = vcombine.high %v4137, %v4153
    %v4196 = vunpack.c.l.s4 1934713408
    %v4197 = vunpack.c.0.s8 %v4196
    %v4198 = vlaneseq
    %v4199 = vshrl.u32 %v4198, 7
    %v4200 = vsub.s32 %v4197, %v4199
    %v4201 = vrot.slane %v4193, %v4200
    %v4203 = vunpack.c.l.s4 1934713408
    %v4204 = vunpack.c.0.s8 %v4203
    %v4205 = vlaneseq
    %v4206 = vshrl.u32 %v4205, 7
    %v4207 = vsub.s32 %v4204, %v4206
    %v4208 = vrot.slane %v4194, %v4207
    %v4209 = vcombine.low %v4144, %v4160
    %v4210 = vcombine.high %v4144, %v4160
    %v4212 = vunpack.c.l.s4 1934713408
    %v4213 = vunpack.c.0.s8 %v4212
    %v4214 = vlaneseq
    %v4215 = vshrl.u32 %v4214, 7
    %v4216 = vsub.s32 %v4213, %v4215
    %v4217 = vrot.slane %v4209, %v4216
    %v4219 = vunpack.c.l.s4 1934713408
    %v4220 = vunpack.c.0.s8 %v4219
    %v4221 = vlaneseq
    %v4222 = vshrl.u32 %v4221, 7
    %v4223 = vsub.s32 %v4220, %v4222
    %v4224 = vrot.slane %v4210, %v4223
    %v4225 = vcombine.low %v4169, %v4201
    %v4226 = vcombine.high %v4169, %v4201
    %v4227 = vcombine.low %v4176, %v4208
    %v4228 = vcombine.high %v4176, %v4208
    %v4229 = vcombine.low %v4185, %v4217
    %v4230 = vcombine.high %v4185, %v4217
    %v4231 = vcombine.low %v4192, %v4224
    %v4232 = vcombine.high %v4192, %v4224
    %v4233 = vcombine.low %v4051, %v4082
    %v4234 = vcombine.high %v4051, %v4082
    %v4236 = vunpack.c.l.s4 1983009808
    %v4237 = vunpack.c.0.s8 %v4236
    %v4238 = vlaneseq
    %v4239 = vshrl.u32 %v4238, 7
    %v4240 = vsub.s32 %v4237, %v4239
    %v4241 = vrot.slane %v4233, %v4240
    %v4243 = vunpack.c.l.s4 1983009808
    %v4244 = vunpack.c.0.s8 %v4243
    %v4245 = vlaneseq
    %v4246 = vshrl.u32 %v4245, 7
    %v4247 = vsub.s32 %v4244, %v4246
    %v4248 = vrot.slane %v4234, %v4247
    %v4249 = vcombine.low %v4079, %v4085
    %v4250 = vcombine.high %v4079, %v4085
    %v4252 = vunpack.c.l.s4 1983009808
    %v4253 = vunpack.c.0.s8 %v4252
    %v4254 = vlaneseq
    %v4255 = vshrl.u32 %v4254, 7
    %v4256 = vsub.s32 %v4253, %v4255
    %v4257 = vrot.slane %v4249, %v4256
    %v4259 = vunpack.c.l.s4 1983009808
    %v4260 = vunpack.c.0.s8 %v4259
    %v4261 = vlaneseq
    %v4262 = vshrl.u32 %v4261, 7
    %v4263 = vsub.s32 %v4260, %v4262
    %v4264 = vrot.slane %v4250, %v4263
    %v4265 = vcombine.low %v4053, %v4092
    %v4266 = vcombine.high %v4053, %v4092
    %v4268 = vunpack.c.l.s4 1983009808
    %v4269 = vunpack.c.0.s8 %v4268
    %v4270 = vlaneseq
    %v4271 = vshrl.u32 %v4270, 7
    %v4272 = vsub.s32 %v4269, %v4271
    %v4273 = vrot.slane %v4265, %v4272
    %v4275 = vunpack.c.l.s4 1983009808
    %v4276 = vunpack.c.0.s8 %v4275
    %v4277 = vlaneseq
    %v4278 = vshrl.u32 %v4277, 7
    %v4279 = vsub.s32 %v4276, %v4278
    %v4280 = vrot.slane %v4266, %v4279
    %v4281 = vcombine.low %v4089, %v4095
    %v4282 = vcombine.high %v4089, %v4095
    %v4284 = vunpack.c.l.s4 1983009808
    %v4285 = vunpack.c.0.s8 %v4284
    %v4286 = vlaneseq
    %v4287 = vshrl.u32 %v4286, 7
    %v4288 = vsub.s32 %v4285, %v4287
    %v4289 = vrot.slane %v4281, %v4288
    %v4291 = vunpack.c.l.s4 1983009808
    %v4292 = vunpack.c.0.s8 %v4291
    %v4293 = vlaneseq
    %v4294 = vshrl.u32 %v4293, 7
    %v4295 = vsub.s32 %v4292, %v4294
    %v4296 = vrot.slane %v4282, %v4295
    %v4297 = vcombine.low %v4241, %v4257
    %v4298 = vcombine.high %v4241, %v4257
    %v4300 = vunpack.c.l.s4 1934713408
    %v4301 = vunpack.c.0.s8 %v4300
    %v4302 = vlaneseq
    %v4303 = vshrl.u32 %v4302, 7
    %v4304 = vsub.s32 %v4301, %v4303
    %v4305 = vrot.slane %v4297, %v4304
    %v4307 = vunpack.c.l.s4 1934713408
    %v4308 = vunpack.c.0.s8 %v4307
    %v4309 = vlaneseq
    %v4310 = vshrl.u32 %v4309, 7
    %v4311 = vsub.s32 %v4308, %v4310
    %v4312 = vrot.slane %v4298, %v4311
    %v4313 = vcombine.low %v4248, %v4264
    %v4314 = vcombine.high %v4248, %v4264
    %v4316 = vunpack.c.l.s4 1934713408
    %v4317 = vunpack.c.0.s8 %v4316
    %v4318 = vlaneseq
    %v4319 = vshrl.u32 %v4318, 7
    %v4320 = vsub.s32 %v4317, %v4319
    %v4321 = vrot.slane %v4313, %v4320
    %v4323 = vunpack.c.l.s4 1934713408
    %v4324 = vunpack.c.0.s8 %v4323
    %v4325 = vlaneseq
    %v4326 = vshrl.u32 %v4325, 7
    %v4327 = vsub.s32 %v4324, %v4326
    %v4328 = vrot.slane %v4314, %v4327
    %v4329 = vcombine.low %v4273, %v4289
    %v4330 = vcombine.high %v4273, %v4289
    %v4332 = vunpack.c.l.s4 1934713408
    %v4333 = vunpack.c.0.s8 %v4332
    %v4334 = vlaneseq
    %v4335 = vshrl.u32 %v4334, 7
    %v4336 = vsub.s32 %v4333, %v4335
    %v4337 = vrot.slane %v4329, %v4336
    %v4339 = vunpack.c.l.s4 1934713408
    %v4340 = vunpack.c.0.s8 %v4339
    %v4341 = vlaneseq
    %v4342 = vshrl.u32 %v4341, 7
    %v4343 = vsub.s32 %v4340, %v4342
    %v4344 = vrot.slane %v4330, %v4343
    %v4345 = vcombine.low %v4280, %v4296
    %v4346 = vcombine.high %v4280, %v4296
    %v4348 = vunpack.c.l.s4 1934713408
    %v4349 = vunpack.c.0.s8 %v4348
    %v4350 = vlaneseq
    %v4351 = vshrl.u32 %v4350, 7
    %v4352 = vsub.s32 %v4349, %v4351
    %v4353 = vrot.slane %v4345, %v4352
    %v4355 = vunpack.c.l.s4 1934713408
    %v4356 = vunpack.c.0.s8 %v4355
    %v4357 = vlaneseq
    %v4358 = vshrl.u32 %v4357, 7
    %v4359 = vsub.s32 %v4356, %v4358
    %v4360 = vrot.slane %v4346, %v4359
    %v4361 = vcombine.low %v4305, %v4337
    %v4362 = vcombine.high %v4305, %v4337
    %v4363 = vcombine.low %v4312, %v4344
    %v4364 = vcombine.high %v4312, %v4344
    %v4365 = vcombine.low %v4321, %v4353
    %v4366 = vcombine.high %v4321, %v4353
    %v4367 = vcombine.low %v4328, %v4360
    %v4368 = vcombine.high %v4328, %v4360
    %v4369 = vpack.c.bf16 %v3496, %v3360
    %v4370 = vpack.c.bf16 %v3497, %v3361
    %v4371 = vpack.c.bf16 %v3498, %v3362
    %v4372 = vpack.c.bf16 %v3499, %v3363
    %v4373 = vpack.c.bf16 %v3500, %v3364
    %v4374 = vpack.c.bf16 %v3501, %v3365
    %v4375 = vpack.c.bf16 %v3502, %v3366
    %v4376 = vpack.c.bf16 %v3503, %v3367
    %v4377 = vpack.c.bf16 %v4361, %v4225
    %v4378 = vpack.c.bf16 %v4362, %v4226
    %v4379 = vpack.c.bf16 %v4363, %v4227
    %v4380 = vpack.c.bf16 %v4364, %v4228
    %v4381 = vpack.c.bf16 %v4365, %v4229
    %v4382 = vpack.c.bf16 %v4366, %v4230
    %v4383 = vpack.c.bf16 %v4367, %v4231
    %v4384 = vpack.c.bf16 %v4368, %v4232
    %v4385 = vld [vmem:[%s7] sm:$0xff]
    %v4386 = vld [vmem:[%s7 + $0x8] sm:$0xff]
    %v4387 = vld [vmem:[%s7 + $0x10] sm:$0xff]
    %v4388 = vld [vmem:[%s7 + $0x18] sm:$0xff]
    %v4389 = vpack.c.bf16 %v4386, %v4385
    %v4390 = vpack.c.bf16 %v4388, %v4387
    %v4391 = vld [vmem:[%s8] sm:$0x1]
    %v4393 = vlaneseq
    %v4394 = vshrl.u32 %v4393, 7
    %v4395 = vsub.s32 0, %v4394
    %v4396 = vrot.slane %v4391, %v4395
    %v4399 = vsel %vm526, %v4369, 0
    %v4402 = vsel %vm526, %v4370, 0
    %v4405 = vsel %vm526, %v4371, 0
    %v4408 = vsel %vm526, %v4372, 0
    %v4411 = vsel %vm526, %v4373, 0
    %v4414 = vsel %vm526, %v4374, 0
    %v4417 = vsel %vm526, %v4375, 0
    %v4420 = vsel %vm526, %v4376, 0
    %v4423 = vsel %vm526, %v4377, 0
    %v4426 = vsel %vm526, %v4378, 0
    %v4429 = vsel %vm526, %v4379, 0
    %v4432 = vsel %vm526, %v4380, 0
    %v4435 = vsel %vm526, %v4381, 0
    %v4438 = vsel %vm526, %v4382, 0
    %v4441 = vsel %vm526, %v4383, 0
    %v4444 = vsel %vm526, %v4384, 0
    %4446 = vmatprep.subr.bf16.mxu0 0
    %4447 = vmatpush1.bf16.msra.mxu0 0
    %4448 = vmatprep.subr.bf16.mxu0 0
    %4449 = vmatpush1.bf16.msra.mxu0 0
    %4450 = vmatprep.subr.bf16.mxu0 0
    %4451 = vmatpush1.bf16.msra.mxu0 0
    %4452 = vmatprep.subr.bf16.mxu0 0
    %4453 = vmatpush1.bf16.msra.mxu0 0
    %4454 = vmatprep.subr.bf16.mxu0 0
    %4455 = vmatpush1.bf16.msra.mxu0 0
    %4456 = vmatprep.subr.bf16.mxu0 0
    %4457 = vmatpush1.bf16.msra.mxu0 0
    %4458 = vmatprep.subr.bf16.mxu0 0
    %4459 = vmatpush1.bf16.msra.mxu0 %v4390
    %4460 = vmatprep.subr.bf16.mxu0 0
    %4461 = vmatpush1.bf16.msra.mxu0 %v4389
    %4462 = vmatprep.subr.bf16.mxu0 0
    %4463 = vmatpush2.bf16.msra.mxu0 0
    %4464 = vmatprep.subr.bf16.mxu0 0
    %4465 = vmatpush2.bf16.msra.mxu0 0
    %4466 = vmatprep.subr.bf16.mxu0 0
    %4467 = vmatpush2.bf16.msra.mxu0 0
    %4468 = vmatprep.subr.bf16.mxu0 0
    %4469 = vmatpush2.bf16.msra.mxu0 0
    %4470 = vmatprep.subr.bf16.mxu0 0
    %4471 = vmatpush2.bf16.msra.mxu0 0
    %4472 = vmatprep.subr.bf16.mxu0 0
    %4473 = vmatpush2.bf16.msra.mxu0 0
    %4474 = vmatprep.subr.bf16.mxu0 0
    %4475 = vmatpush2.bf16.msra.mxu0 0
    %4476 = vmatprep.subr.bf16.mxu0 0
    %4477 = vmatpush2.bf16.msra.mxu0 0
    %4478 = vmatprep.mubr.bf16.mxu0 0
    %4479 = vmatmul.mubr.bf16.gmra.mxu0 %v4399
    %v4480 = vpop.f32.mrf.mxu0
    %v4481 = vadd.f32 %v4396, %v4480
    %v4482 = vpop.f32.mrf.mxu0
    %v4483 = vpop.f32.mrf.mxu0
    %v4484 = vadd.f32 %v4396, %v4483
    %v4485 = vpop.f32.mrf.mxu0
    %4486 = vmatprep.mubr.bf16.mxu0 0
    %4487 = vmatmul.mubr.bf16.gmra.mxu0 %v4402
    %v4488 = vpop.f32.mrf.mxu0
    %v4489 = vadd.f32 %v4396, %v4488
    %v4490 = vpop.f32.mrf.mxu0
    %v4491 = vpop.f32.mrf.mxu0
    %v4492 = vadd.f32 %v4396, %v4491
    %v4493 = vpop.f32.mrf.mxu0
    %4494 = vmatprep.mubr.bf16.mxu0 0
    %4495 = vmatmul.mubr.bf16.gmra.mxu0 %v4405
    %v4496 = vpop.f32.mrf.mxu0
    %v4497 = vadd.f32 %v4396, %v4496
    %v4498 = vpop.f32.mrf.mxu0
    %v4499 = vpop.f32.mrf.mxu0
    %v4500 = vadd.f32 %v4396, %v4499
    %v4501 = vpop.f32.mrf.mxu0
    %4502 = vmatprep.mubr.bf16.mxu0 0
    %4503 = vmatmul.mubr.bf16.gmra.mxu0 %v4408
    %v4504 = vpop.f32.mrf.mxu0
    %v4505 = vadd.f32 %v4396, %v4504
    %v4506 = vpop.f32.mrf.mxu0
    %v4507 = vpop.f32.mrf.mxu0
    %v4508 = vadd.f32 %v4396, %v4507
    %v4509 = vpop.f32.mrf.mxu0
    %4510 = vmatprep.mubr.bf16.mxu0 0
    %4511 = vmatmul.mubr.bf16.gmra.mxu0 %v4411
    %v4512 = vpop.f32.mrf.mxu0
    %v4513 = vadd.f32 %v4396, %v4512
    %v4514 = vpop.f32.mrf.mxu0
    %v4515 = vpop.f32.mrf.mxu0
    %v4516 = vadd.f32 %v4396, %v4515
    %v4517 = vpop.f32.mrf.mxu0
    %4518 = vmatprep.mubr.bf16.mxu0 0
    %4519 = vmatmul.mubr.bf16.gmra.mxu0 %v4414
    %v4520 = vpop.f32.mrf.mxu0
    %v4521 = vadd.f32 %v4396, %v4520
    %v4522 = vpop.f32.mrf.mxu0
    %v4523 = vpop.f32.mrf.mxu0
    %v4524 = vadd.f32 %v4396, %v4523
    %v4525 = vpop.f32.mrf.mxu0
    %4526 = vmatprep.mubr.bf16.mxu0 0
    %4527 = vmatmul.mubr.bf16.gmra.mxu0 %v4417
    %v4528 = vpop.f32.mrf.mxu0
    %v4529 = vadd.f32 %v4396, %v4528
    %v4530 = vpop.f32.mrf.mxu0
    %v4531 = vpop.f32.mrf.mxu0
    %v4532 = vadd.f32 %v4396, %v4531
    %v4533 = vpop.f32.mrf.mxu0
    %4534 = vmatprep.mubr.bf16.mxu0 0
    %4535 = vmatmul.mubr.bf16.gmra.mxu0 %v4420
    %v4536 = vpop.f32.mrf.mxu0
    %v4537 = vadd.f32 %v4396, %v4536
    %v4538 = vpop.f32.mrf.mxu0
    %v4539 = vpop.f32.mrf.mxu0
    %v4540 = vadd.f32 %v4396, %v4539
    %v4541 = vpop.f32.mrf.mxu0
    %4542 = vmatprep.mubr.bf16.mxu0 0
    %4543 = vmatmul.mubr.bf16.gmra.mxu0 %v4423
    %v4544 = vpop.f32.mrf.mxu0
    %v4545 = vadd.f32 %v4396, %v4544
    %v4546 = vpop.f32.mrf.mxu0
    %v4547 = vpop.f32.mrf.mxu0
    %v4548 = vadd.f32 %v4396, %v4547
    %v4549 = vpop.f32.mrf.mxu0
    %4550 = vmatprep.mubr.bf16.mxu0 0
    %4551 = vmatmul.mubr.bf16.gmra.mxu0 %v4426
    %v4552 = vpop.f32.mrf.mxu0
    %v4553 = vadd.f32 %v4396, %v4552
    %v4554 = vpop.f32.mrf.mxu0
    %v4555 = vpop.f32.mrf.mxu0
    %v4556 = vadd.f32 %v4396, %v4555
    %v4557 = vpop.f32.mrf.mxu0
    %4558 = vmatprep.mubr.bf16.mxu0 0
    %4559 = vmatmul.mubr.bf16.gmra.mxu0 %v4429
    %v4560 = vpop.f32.mrf.mxu0
    %v4561 = vadd.f32 %v4396, %v4560
    %v4562 = vpop.f32.mrf.mxu0
    %v4563 = vpop.f32.mrf.mxu0
    %v4564 = vadd.f32 %v4396, %v4563
    %v4565 = vpop.f32.mrf.mxu0
    %4566 = vmatprep.mubr.bf16.mxu0 0
    %4567 = vmatmul.mubr.bf16.gmra.mxu0 %v4432
    %v4568 = vpop.f32.mrf.mxu0
    %v4569 = vadd.f32 %v4396, %v4568
    %v4570 = vpop.f32.mrf.mxu0
    %v4571 = vpop.f32.mrf.mxu0
    %v4572 = vadd.f32 %v4396, %v4571
    %v4573 = vpop.f32.mrf.mxu0
    %4574 = vmatprep.mubr.bf16.mxu0 0
    %4575 = vmatmul.mubr.bf16.gmra.mxu0 %v4435
    %v4576 = vpop.f32.mrf.mxu0
    %v4577 = vadd.f32 %v4396, %v4576
    %v4578 = vpop.f32.mrf.mxu0
    %v4579 = vpop.f32.mrf.mxu0
    %v4580 = vadd.f32 %v4396, %v4579
    %v4581 = vpop.f32.mrf.mxu0
    %4582 = vmatprep.mubr.bf16.mxu0 0
    %4583 = vmatmul.mubr.bf16.gmra.mxu0 %v4438
    %v4584 = vpop.f32.mrf.mxu0
    %v4585 = vadd.f32 %v4396, %v4584
    %v4586 = vpop.f32.mrf.mxu0
    %v4587 = vpop.f32.mrf.mxu0
    %v4588 = vadd.f32 %v4396, %v4587
    %v4589 = vpop.f32.mrf.mxu0
    %4590 = vmatprep.mubr.bf16.mxu0 0
    %4591 = vmatmul.mubr.bf16.gmra.mxu0 %v4441
    %v4592 = vpop.f32.mrf.mxu0
    %v4593 = vadd.f32 %v4396, %v4592
    %v4594 = vpop.f32.mrf.mxu0
    %v4595 = vpop.f32.mrf.mxu0
    %v4596 = vadd.f32 %v4396, %v4595
    %v4597 = vpop.f32.mrf.mxu0
    %4598 = vmatprep.mubr.bf16.mxu0 0
    %4599 = vmatmul.mubr.bf16.gmra.mxu0 %v4444
    %v4600 = vpop.f32.mrf.mxu0
    %v4601 = vadd.f32 %v4396, %v4600
    %v4602 = vpop.f32.mrf.mxu0
    %v4603 = vpop.f32.mrf.mxu0
    %v4604 = vadd.f32 %v4396, %v4603
    %v4605 = vpop.f32.mrf.mxu0
    %4606 = vdwg.mxu0
    %v4607 = vld [vmem:[%s9] sm:$0xff]
    %v4608 = vld [vmem:[%s9 + $0x8] sm:$0xff]
    %v4609 = vld [vmem:[%s9 + $0x10] sm:$0xff]
    %v4610 = vld [vmem:[%s9 + $0x18] sm:$0xff]
    %v4611 = vpack.c.bf16 %v4608, %v4607
    %v4612 = vpack.c.bf16 %v4610, %v4609
    %v4613 = vld [vmem:[%s10] sm:$0x1]
    %v4615 = vlaneseq
    %v4616 = vshrl.u32 %v4615, 7
    %v4617 = vsub.s32 0, %v4616
    %v4618 = vrot.slane %v4613, %v4617
    %4620 = vmatprep.subr.bf16.mxu0 0
    %4621 = vmatpush1.bf16.msra.mxu0 0
    %4622 = vmatprep.subr.bf16.mxu0 0
    %4623 = vmatpush1.bf16.msra.mxu0 0
    %4624 = vmatprep.subr.bf16.mxu0 0
    %4625 = vmatpush1.bf16.msra.mxu0 0
    %4626 = vmatprep.subr.bf16.mxu0 0
    %4627 = vmatpush1.bf16.msra.mxu0 0
    %4628 = vmatprep.subr.bf16.mxu0 0
    %4629 = vmatpush1.bf16.msra.mxu0 0
    %4630 = vmatprep.subr.bf16.mxu0 0
    %4631 = vmatpush1.bf16.msra.mxu0 0
    %4632 = vmatprep.subr.bf16.mxu0 0
    %4633 = vmatpush1.bf16.msra.mxu0 %v4612
    %4634 = vmatprep.subr.bf16.mxu0 0
    %4635 = vmatpush1.bf16.msra.mxu0 %v4611
    %4636 = vmatprep.subr.bf16.mxu0 0
    %4637 = vmatpush2.bf16.msra.mxu0 0
    %4638 = vmatprep.subr.bf16.mxu0 0
    %4639 = vmatpush2.bf16.msra.mxu0 0
    %4640 = vmatprep.subr.bf16.mxu0 0
    %4641 = vmatpush2.bf16.msra.mxu0 0
    %4642 = vmatprep.subr.bf16.mxu0 0
    %4643 = vmatpush2.bf16.msra.mxu0 0
    %4644 = vmatprep.subr.bf16.mxu0 0
    %4645 = vmatpush2.bf16.msra.mxu0 0
    %4646 = vmatprep.subr.bf16.mxu0 0
    %4647 = vmatpush2.bf16.msra.mxu0 0
    %4648 = vmatprep.subr.bf16.mxu0 0
    %4649 = vmatpush2.bf16.msra.mxu0 0
    %4650 = vmatprep.subr.bf16.mxu0 0
    %4651 = vmatpush2.bf16.msra.mxu0 0
    %4652 = vmatprep.mubr.bf16.mxu0 0
    %4653 = vmatmul.mubr.bf16.gmra.mxu0 %v4399
    %v4654 = vpop.f32.mrf.mxu0
    %v4655 = vadd.f32 %v4618, %v4654
    %v4656 = vpop.f32.mrf.mxu0
    %v4657 = vpop.f32.mrf.mxu0
    %v4658 = vadd.f32 %v4618, %v4657
    %v4659 = vpop.f32.mrf.mxu0
    %4660 = vmatprep.mubr.bf16.mxu0 0
    %4661 = vmatmul.mubr.bf16.gmra.mxu0 %v4402
    %v4662 = vpop.f32.mrf.mxu0
    %v4663 = vadd.f32 %v4618, %v4662
    %v4664 = vpop.f32.mrf.mxu0
    %v4665 = vpop.f32.mrf.mxu0
    %v4666 = vadd.f32 %v4618, %v4665
    %v4667 = vpop.f32.mrf.mxu0
    %4668 = vmatprep.mubr.bf16.mxu0 0
    %4669 = vmatmul.mubr.bf16.gmra.mxu0 %v4405
    %v4670 = vpop.f32.mrf.mxu0
    %v4671 = vadd.f32 %v4618, %v4670
    %v4672 = vpop.f32.mrf.mxu0
    %v4673 = vpop.f32.mrf.mxu0
    %v4674 = vadd.f32 %v4618, %v4673
    %v4675 = vpop.f32.mrf.mxu0
    %4676 = vmatprep.mubr.bf16.mxu0 0
    %4677 = vmatmul.mubr.bf16.gmra.mxu0 %v4408
    %v4678 = vpop.f32.mrf.mxu0
    %v4679 = vadd.f32 %v4618, %v4678
    %v4680 = vpop.f32.mrf.mxu0
    %v4681 = vpop.f32.mrf.mxu0
    %v4682 = vadd.f32 %v4618, %v4681
    %v4683 = vpop.f32.mrf.mxu0
    %4684 = vmatprep.mubr.bf16.mxu0 0
    %4685 = vmatmul.mubr.bf16.gmra.mxu0 %v4411
    %v4686 = vpop.f32.mrf.mxu0
    %v4687 = vadd.f32 %v4618, %v4686
    %v4688 = vpop.f32.mrf.mxu0
    %v4689 = vpop.f32.mrf.mxu0
    %v4690 = vadd.f32 %v4618, %v4689
    %v4691 = vpop.f32.mrf.mxu0
    %4692 = vmatprep.mubr.bf16.mxu0 0
    %4693 = vmatmul.mubr.bf16.gmra.mxu0 %v4414
    %v4694 = vpop.f32.mrf.mxu0
    %v4695 = vadd.f32 %v4618, %v4694
    %v4696 = vpop.f32.mrf.mxu0
    %v4697 = vpop.f32.mrf.mxu0
    %v4698 = vadd.f32 %v4618, %v4697
    %v4699 = vpop.f32.mrf.mxu0
    %4700 = vmatprep.mubr.bf16.mxu0 0
    %4701 = vmatmul.mubr.bf16.gmra.mxu0 %v4417
    %v4702 = vpop.f32.mrf.mxu0
    %v4703 = vadd.f32 %v4618, %v4702
    %v4704 = vpop.f32.mrf.mxu0
    %v4705 = vpop.f32.mrf.mxu0
    %v4706 = vadd.f32 %v4618, %v4705
    %v4707 = vpop.f32.mrf.mxu0
    %4708 = vmatprep.mubr.bf16.mxu0 0
    %4709 = vmatmul.mubr.bf16.gmra.mxu0 %v4420
    %v4710 = vpop.f32.mrf.mxu0
    %v4711 = vadd.f32 %v4618, %v4710
    %v4712 = vpop.f32.mrf.mxu0
    %v4713 = vpop.f32.mrf.mxu0
    %v4714 = vadd.f32 %v4618, %v4713
    %v4715 = vpop.f32.mrf.mxu0
    %4716 = vmatprep.mubr.bf16.mxu0 0
    %4717 = vmatmul.mubr.bf16.gmra.mxu0 %v4423
    %v4718 = vpop.f32.mrf.mxu0
    %v4719 = vadd.f32 %v4618, %v4718
    %v4720 = vpop.f32.mrf.mxu0
    %v4721 = vpop.f32.mrf.mxu0
    %v4722 = vadd.f32 %v4618, %v4721
    %v4723 = vpop.f32.mrf.mxu0
    %4724 = vmatprep.mubr.bf16.mxu0 0
    %4725 = vmatmul.mubr.bf16.gmra.mxu0 %v4426
    %v4726 = vpop.f32.mrf.mxu0
    %v4727 = vadd.f32 %v4618, %v4726
    %v4728 = vpop.f32.mrf.mxu0
    %v4729 = vpop.f32.mrf.mxu0
    %v4730 = vadd.f32 %v4618, %v4729
    %v4731 = vpop.f32.mrf.mxu0
    %4732 = vmatprep.mubr.bf16.mxu0 0
    %4733 = vmatmul.mubr.bf16.gmra.mxu0 %v4429
    %v4734 = vpop.f32.mrf.mxu0
    %v4735 = vadd.f32 %v4618, %v4734
    %v4736 = vpop.f32.mrf.mxu0
    %v4737 = vpop.f32.mrf.mxu0
    %v4738 = vadd.f32 %v4618, %v4737
    %v4739 = vpop.f32.mrf.mxu0
    %4740 = vmatprep.mubr.bf16.mxu0 0
    %4741 = vmatmul.mubr.bf16.gmra.mxu0 %v4432
    %v4742 = vpop.f32.mrf.mxu0
    %v4743 = vadd.f32 %v4618, %v4742
    %v4744 = vpop.f32.mrf.mxu0
    %v4745 = vpop.f32.mrf.mxu0
    %v4746 = vadd.f32 %v4618, %v4745
    %v4747 = vpop.f32.mrf.mxu0
    %4748 = vmatprep.mubr.bf16.mxu0 0
    %4749 = vmatmul.mubr.bf16.gmra.mxu0 %v4435
    %v4750 = vpop.f32.mrf.mxu0
    %v4751 = vadd.f32 %v4618, %v4750
    %v4752 = vpop.f32.mrf.mxu0
    %v4753 = vpop.f32.mrf.mxu0
    %v4754 = vadd.f32 %v4618, %v4753
    %v4755 = vpop.f32.mrf.mxu0
    %4756 = vmatprep.mubr.bf16.mxu0 0
    %4757 = vmatmul.mubr.bf16.gmra.mxu0 %v4438
    %v4758 = vpop.f32.mrf.mxu0
    %v4759 = vadd.f32 %v4618, %v4758
    %v4760 = vpop.f32.mrf.mxu0
    %v4761 = vpop.f32.mrf.mxu0
    %v4762 = vadd.f32 %v4618, %v4761
    %v4763 = vpop.f32.mrf.mxu0
    %4764 = vmatprep.mubr.bf16.mxu0 0
    %4765 = vmatmul.mubr.bf16.gmra.mxu0 %v4441
    %v4766 = vpop.f32.mrf.mxu0
    %v4767 = vadd.f32 %v4618, %v4766
    %v4768 = vpop.f32.mrf.mxu0
    %v4769 = vpop.f32.mrf.mxu0
    %v4770 = vadd.f32 %v4618, %v4769
    %v4771 = vpop.f32.mrf.mxu0
    %4772 = vmatprep.mubr.bf16.mxu0 0
    %4773 = vmatmul.mubr.bf16.gmra.mxu0 %v4444
    %v4774 = vpop.f32.mrf.mxu0
    %v4775 = vadd.f32 %v4618, %v4774
    %v4776 = vpop.f32.mrf.mxu0
    %v4777 = vpop.f32.mrf.mxu0
    %v4778 = vadd.f32 %v4618, %v4777
    %v4779 = vpop.f32.mrf.mxu0
    %4780 = vdwg.mxu0
    %v4781 = vxor.u32 %v4655, 2147483648
    %v4782 = vxor.u32 %v4658, 2147483648
    %v4783 = vxor.u32 %v4663, 2147483648
    %v4784 = vxor.u32 %v4666, 2147483648
    %v4785 = vxor.u32 %v4671, 2147483648
    %v4786 = vxor.u32 %v4674, 2147483648
    %v4787 = vxor.u32 %v4679, 2147483648
    %v4788 = vxor.u32 %v4682, 2147483648
    %v4789 = vxor.u32 %v4687, 2147483648
    %v4790 = vxor.u32 %v4690, 2147483648
    %v4791 = vxor.u32 %v4695, 2147483648
    %v4792 = vxor.u32 %v4698, 2147483648
    %v4793 = vxor.u32 %v4703, 2147483648
    %v4794 = vxor.u32 %v4706, 2147483648
    %v4795 = vxor.u32 %v4711, 2147483648
    %v4796 = vxor.u32 %v4714, 2147483648
    %v4797 = vxor.u32 %v4719, 2147483648
    %v4798 = vxor.u32 %v4722, 2147483648
    %v4799 = vxor.u32 %v4727, 2147483648
    %v4800 = vxor.u32 %v4730, 2147483648
    %v4801 = vxor.u32 %v4735, 2147483648
    %v4802 = vxor.u32 %v4738, 2147483648
    %v4803 = vxor.u32 %v4743, 2147483648
    %v4804 = vxor.u32 %v4746, 2147483648
    %v4805 = vxor.u32 %v4751, 2147483648
    %v4806 = vxor.u32 %v4754, 2147483648
    %v4807 = vxor.u32 %v4759, 2147483648
    %v4808 = vxor.u32 %v4762, 2147483648
    %v4809 = vxor.u32 %v4767, 2147483648
    %v4810 = vxor.u32 %v4770, 2147483648
    %v4811 = vxor.u32 %v4775, 2147483648
    %v4812 = vxor.u32 %v4778, 2147483648
    %v4813 = vmul.f32 %v4781, 1.442695
    %v4814 = vpow.pop %v4813
    %v4815 = vmul.f32 %v4782, 1.442695
    %v4816 = vpow.pop %v4815
    %v4817 = vmul.f32 %v4783, 1.442695
    %v4818 = vpow.pop %v4817
    %v4819 = vmul.f32 %v4784, 1.442695
    %v4820 = vpow.pop %v4819
    %v4821 = vmul.f32 %v4785, 1.442695
    %v4822 = vpow.pop %v4821
    %v4823 = vmul.f32 %v4786, 1.442695
    %v4824 = vpow.pop %v4823
    %v4825 = vmul.f32 %v4787, 1.442695
    %v4826 = vpow.pop %v4825
    %v4827 = vmul.f32 %v4788, 1.442695
    %v4828 = vpow.pop %v4827
    %v4829 = vmul.f32 %v4789, 1.442695
    %v4830 = vpow.pop %v4829
    %v4831 = vmul.f32 %v4790, 1.442695
    %v4832 = vpow.pop %v4831
    %v4833 = vmul.f32 %v4791, 1.442695
    %v4834 = vpow.pop %v4833
    %v4835 = vmul.f32 %v4792, 1.442695
    %v4836 = vpow.pop %v4835
    %v4837 = vmul.f32 %v4793, 1.442695
    %v4838 = vpow.pop %v4837
    %v4839 = vmul.f32 %v4794, 1.442695
    %v4840 = vpow.pop %v4839
    %v4841 = vmul.f32 %v4795, 1.442695
    %v4842 = vpow.pop %v4841
    %v4843 = vmul.f32 %v4796, 1.442695
    %v4844 = vpow.pop %v4843
    %v4845 = vmul.f32 %v4797, 1.442695
    %v4846 = vpow.pop %v4845
    %v4847 = vmul.f32 %v4798, 1.442695
    %v4848 = vpow.pop %v4847
    %v4849 = vmul.f32 %v4799, 1.442695
    %v4850 = vpow.pop %v4849
    %v4851 = vmul.f32 %v4800, 1.442695
    %v4852 = vpow.pop %v4851
    %v4853 = vmul.f32 %v4801, 1.442695
    %v4854 = vpow.pop %v4853
    %v4855 = vmul.f32 %v4802, 1.442695
    %v4856 = vpow.pop %v4855
    %v4857 = vmul.f32 %v4803, 1.442695
    %v4858 = vpow.pop %v4857
    %v4859 = vmul.f32 %v4804, 1.442695
    %v4860 = vpow.pop %v4859
    %v4861 = vmul.f32 %v4805, 1.442695
    %v4862 = vpow.pop %v4861
    %v4863 = vmul.f32 %v4806, 1.442695
    %v4864 = vpow.pop %v4863
    %v4865 = vmul.f32 %v4807, 1.442695
    %v4866 = vpow.pop %v4865
    %v4867 = vmul.f32 %v4808, 1.442695
    %v4868 = vpow.pop %v4867
    %v4869 = vmul.f32 %v4809, 1.442695
    %v4870 = vpow.pop %v4869
    %v4871 = vmul.f32 %v4810, 1.442695
    %v4872 = vpow.pop %v4871
    %v4873 = vmul.f32 %v4811, 1.442695
    %v4874 = vpow.pop %v4873
    %v4875 = vmul.f32 %v4812, 1.442695
    %v4876 = vpow.pop %v4875
    %v4877 = vadd.f32 %v4814, 1.0
    %v4878 = vadd.f32 %v4816, 1.0
    %v4879 = vadd.f32 %v4818, 1.0
    %v4880 = vadd.f32 %v4820, 1.0
    %v4881 = vadd.f32 %v4822, 1.0
    %v4882 = vadd.f32 %v4824, 1.0
    %v4883 = vadd.f32 %v4826, 1.0
    %v4884 = vadd.f32 %v4828, 1.0
    %v4885 = vadd.f32 %v4830, 1.0
    %v4886 = vadd.f32 %v4832, 1.0
    %v4887 = vadd.f32 %v4834, 1.0
    %v4888 = vadd.f32 %v4836, 1.0
    %v4889 = vadd.f32 %v4838, 1.0
    %v4890 = vadd.f32 %v4840, 1.0
    %v4891 = vadd.f32 %v4842, 1.0
    %v4892 = vadd.f32 %v4844, 1.0
    %v4893 = vadd.f32 %v4846, 1.0
    %v4894 = vadd.f32 %v4848, 1.0
    %v4895 = vadd.f32 %v4850, 1.0
    %v4896 = vadd.f32 %v4852, 1.0
    %v4897 = vadd.f32 %v4854, 1.0
    %v4898 = vadd.f32 %v4856, 1.0
    %v4899 = vadd.f32 %v4858, 1.0
    %v4900 = vadd.f32 %v4860, 1.0
    %v4901 = vadd.f32 %v4862, 1.0
    %v4902 = vadd.f32 %v4864, 1.0
    %v4903 = vadd.f32 %v4866, 1.0
    %v4904 = vadd.f32 %v4868, 1.0
    %v4905 = vadd.f32 %v4870, 1.0
    %v4906 = vadd.f32 %v4872, 1.0
    %v4907 = vadd.f32 %v4874, 1.0
    %v4908 = vadd.f32 %v4876, 1.0
    %v4909 = vrcp.pop %v4877
    %v4910 = vmul.f32 1.0, %v4909
    %v4911 = vrcp.pop %v4878
    %v4912 = vmul.f32 1.0, %v4911
    %v4913 = vrcp.pop %v4879
    %v4914 = vmul.f32 1.0, %v4913
    %v4915 = vrcp.pop %v4880
    %v4916 = vmul.f32 1.0, %v4915
    %v4917 = vrcp.pop %v4881
    %v4918 = vmul.f32 1.0, %v4917
    %v4919 = vrcp.pop %v4882
    %v4920 = vmul.f32 1.0, %v4919
    %v4921 = vrcp.pop %v4883
    %v4922 = vmul.f32 1.0, %v4921
    %v4923 = vrcp.pop %v4884
    %v4924 = vmul.f32 1.0, %v4923
    %v4925 = vrcp.pop %v4885
    %v4926 = vmul.f32 1.0, %v4925
    %v4927 = vrcp.pop %v4886
    %v4928 = vmul.f32 1.0, %v4927
    %v4929 = vrcp.pop %v4887
    %v4930 = vmul.f32 1.0, %v4929
    %v4931 = vrcp.pop %v4888
    %v4932 = vmul.f32 1.0, %v4931
    %v4933 = vrcp.pop %v4889
    %v4934 = vmul.f32 1.0, %v4933
    %v4935 = vrcp.pop %v4890
    %v4936 = vmul.f32 1.0, %v4935
    %v4937 = vrcp.pop %v4891
    %v4938 = vmul.f32 1.0, %v4937
    %v4939 = vrcp.pop %v4892
    %v4940 = vmul.f32 1.0, %v4939
    %v4941 = vrcp.pop %v4893
    %v4942 = vmul.f32 1.0, %v4941
    %v4943 = vrcp.pop %v4894
    %v4944 = vmul.f32 1.0, %v4943
    %v4945 = vrcp.pop %v4895
    %v4946 = vmul.f32 1.0, %v4945
    %v4947 = vrcp.pop %v4896
    %v4948 = vmul.f32 1.0, %v4947
    %v4949 = vrcp.pop %v4897
    %v4950 = vmul.f32 1.0, %v4949
    %v4951 = vrcp.pop %v4898
    %v4952 = vmul.f32 1.0, %v4951
    %v4953 = vrcp.pop %v4899
    %v4954 = vmul.f32 1.0, %v4953
    %v4955 = vrcp.pop %v4900
    %v4956 = vmul.f32 1.0, %v4955
    %v4957 = vrcp.pop %v4901
    %v4958 = vmul.f32 1.0, %v4957
    %v4959 = vrcp.pop %v4902
    %v4960 = vmul.f32 1.0, %v4959
    %v4961 = vrcp.pop %v4903
    %v4962 = vmul.f32 1.0, %v4961
    %v4963 = vrcp.pop %v4904
    %v4964 = vmul.f32 1.0, %v4963
    %v4965 = vrcp.pop %v4905
    %v4966 = vmul.f32 1.0, %v4965
    %v4967 = vrcp.pop %v4906
    %v4968 = vmul.f32 1.0, %v4967
    %v4969 = vrcp.pop %v4907
    %v4970 = vmul.f32 1.0, %v4969
    %v4971 = vrcp.pop %v4908
    %v4972 = vmul.f32 1.0, %v4971
    %v4973 = vmul.f32 %v4481, %v4910
    %v4974 = vmul.f32 %v4484, %v4912
    %v4975 = vmul.f32 %v4489, %v4914
    %v4976 = vmul.f32 %v4492, %v4916
    %v4977 = vmul.f32 %v4497, %v4918
    %v4978 = vmul.f32 %v4500, %v4920
    %v4979 = vmul.f32 %v4505, %v4922
    %v4980 = vmul.f32 %v4508, %v4924
    %v4981 = vmul.f32 %v4513, %v4926
    %v4982 = vmul.f32 %v4516, %v4928
    %v4983 = vmul.f32 %v4521, %v4930
    %v4984 = vmul.f32 %v4524, %v4932
    %v4985 = vmul.f32 %v4529, %v4934
    %v4986 = vmul.f32 %v4532, %v4936
    %v4987 = vmul.f32 %v4537, %v4938
    %v4988 = vmul.f32 %v4540, %v4940
    %v4989 = vmul.f32 %v4545, %v4942
    %v4990 = vmul.f32 %v4548, %v4944
    %v4991 = vmul.f32 %v4553, %v4946
    %v4992 = vmul.f32 %v4556, %v4948
    %v4993 = vmul.f32 %v4561, %v4950
    %v4994 = vmul.f32 %v4564, %v4952
    %v4995 = vmul.f32 %v4569, %v4954
    %v4996 = vmul.f32 %v4572, %v4956
    %v4997 = vmul.f32 %v4577, %v4958
    %v4998 = vmul.f32 %v4580, %v4960
    %v4999 = vmul.f32 %v4585, %v4962
    %v5000 = vmul.f32 %v4588, %v4964
    %v5001 = vmul.f32 %v4593, %v4966
    %v5002 = vmul.f32 %v4596, %v4968
    %v5003 = vmul.f32 %v4601, %v4970
    %v5004 = vmul.f32 %v4604, %v4972
    %5005 = vst.msk [vmem:[#allocation2] sm:$0xff] %vm526, %v4973
    %5006 = vst.msk [vmem:[#allocation2 + $0x8] sm:$0xff] %vm526, %v4974
    %5007 = vst.msk [vmem:[#allocation2 + $0x10] sm:$0xff] %vm526, %v4975
    %5008 = vst.msk [vmem:[#allocation2 + $0x18] sm:$0xff] %vm526, %v4976
    %5009 = vst.msk [vmem:[#allocation2 + $0x20] sm:$0xff] %vm526, %v4977
    %5010 = vst.msk [vmem:[#allocation2 + $0x28] sm:$0xff] %vm526, %v4978
    %5011 = vst.msk [vmem:[#allocation2 + $0x30] sm:$0xff] %vm526, %v4979
    %5012 = vst.msk [vmem:[#allocation2 + $0x38] sm:$0xff] %vm526, %v4980
    %5013 = vst.msk [vmem:[#allocation2 + $0x40] sm:$0xff] %vm526, %v4981
    %5014 = vst.msk [vmem:[#allocation2 + $0x48] sm:$0xff] %vm526, %v4982
    %5015 = vst.msk [vmem:[#allocation2 + $0x50] sm:$0xff] %vm526, %v4983
    %5016 = vst.msk [vmem:[#allocation2 + $0x58] sm:$0xff] %vm526, %v4984
    %5017 = vst.msk [vmem:[#allocation2 + $0x60] sm:$0xff] %vm526, %v4985
    %5018 = vst.msk [vmem:[#allocation2 + $0x68] sm:$0xff] %vm526, %v4986
    %5019 = vst.msk [vmem:[#allocation2 + $0x70] sm:$0xff] %vm526, %v4987
    %5020 = vst.msk [vmem:[#allocation2 + $0x78] sm:$0xff] %vm526, %v4988
    %5021 = vst.msk [vmem:[#allocation2 + $0x80] sm:$0xff] %vm526, %v4989
    %5022 = vst.msk [vmem:[#allocation2 + $0x88] sm:$0xff] %vm526, %v4990
    %5023 = vst.msk [vmem:[#allocation2 + $0x90] sm:$0xff] %vm526, %v4991
    %5024 = vst.msk [vmem:[#allocation2 + $0x98] sm:$0xff] %vm526, %v4992
    %5025 = vst.msk [vmem:[#allocation2 + $0xa0] sm:$0xff] %vm526, %v4993
    %5026 = vst.msk [vmem:[#allocation2 + $0xa8] sm:$0xff] %vm526, %v4994
    %5027 = vst.msk [vmem:[#allocation2 + $0xb0] sm:$0xff] %vm526, %v4995
    %5028 = vst.msk [vmem:[#allocation2 + $0xb8] sm:$0xff] %vm526, %v4996
    %5029 = vst.msk [vmem:[#allocation2 + $0xc0] sm:$0xff] %vm526, %v4997
    %5030 = vst.msk [vmem:[#allocation2 + $0xc8] sm:$0xff] %vm526, %v4998
    %5031 = vst.msk [vmem:[#allocation2 + $0xd0] sm:$0xff] %vm526, %v4999
    %5032 = vst.msk [vmem:[#allocation2 + $0xd8] sm:$0xff] %vm526, %v5000
    %5033 = vst.msk [vmem:[#allocation2 + $0xe0] sm:$0xff] %vm526, %v5001
    %5034 = vst.msk [vmem:[#allocation2 + $0xe8] sm:$0xff] %vm526, %v5002
    %5035 = vst.msk [vmem:[#allocation2 + $0xf0] sm:$0xff] %vm526, %v5003
    %5036 = vst.msk [vmem:[#allocation2 + $0xf8] sm:$0xff] %vm526, %v5004
    // Predicated region
    $region46: #{st_module_forward.1} parent=1 // pred_check
      _
    $region47: #{st_module_forward.1} parent=1 // pred_check_branch
      %5038 = sbr.rel (0) target = $region49
    $region48: #{st_module_forward.1} parent=1 // pred_region
      %s5040 = ssub.s32 4096, 4096
      %5041 = vsyncadd [#allocation3], %s5040
      %s5042 = sshll.u32 [#allocation2], 4
      %s5043 = int_to_ptr.vmem [resolvable:$true] %s5042
      %5048 = dma.vmem_to_hbm [thread:$0]  %s5043, 4096, %s11, [#allocation3], 128, 128, 8
    $region49: #{st_module_forward.1} parent=1 // pred_fallthru
      _
    // Predicated region
    $region50: #{st_module_forward.1} parent=1 // pred_check
      _
    $region51: #{st_module_forward.1} parent=1 // pred_check_branch
      %5050 = sbr.rel (0) target = $region53
    $region52: #{st_module_forward.1} parent=1 // pred_region
      %5051 = dma.done [#allocation3], 4096
    $region53: #{st_module_forward.1} parent=1 // pred_fallthru
      _
    %5052 = vsyncpa [#allocation3], 1

</llo_original>
